<compile_context>
chip_gen: v7x
topology: tpu7x:2x2x1
jax: 0.10.0
libtpu: 0.0.40
codegen_flags: <defaults>
</compile_context>

<pallas_src>
import jax
import jax.numpy as jnp
from jax.experimental import pallas as pl
from jax.experimental.pallas import tpu as pltpu

_TAPS = tuple((kh, kw) for kh in range(3) for kw in range(3))


def _zero_border(pad_ref, H, W, C):
    """Zero only the 1-pixel border of a (H+2, W+2, C) scratch."""
    dt = pad_ref.dtype
    pad_ref[0:1, :, :] = jnp.zeros((1, W + 2, C), dt)            # top row
    pad_ref[H + 1:H + 2, :, :] = jnp.zeros((1, W + 2, C), dt)    # bottom row
    pad_ref[1:H + 1, 0:1, :] = jnp.zeros((H, 1, C), dt)          # left col
    pad_ref[1:H + 1, W + 1:W + 2, :] = jnp.zeros((H, 1, C), dt)  # right col


def _conv3x3_mxu(pad_ref, cols_ref, w_ref, H, W, C):
    """3x3 stride-1 conv of a zero-padded f32 scratch as ONE MXU matmul.

    Scatters the 9 shifted taps into the bf16 im2col scratch (contraction
    K = 9*C), then issues a single bf16 x bf16 -> f32 dot.
    Returns the (H*W, Cout) f32 accumulator.
    """
    for t, (kh, kw) in enumerate(_TAPS):
        cols_ref[:, :, t * C:(t + 1) * C] = (
            pad_ref[kh:kh + H, kw:kw + W, :].astype(cols_ref.dtype))
    lhs = cols_ref[...].reshape(H * W, 9 * C)                    # bf16 operand
    return jnp.dot(lhs, w_ref[...], preferred_element_type=jnp.float32)


def _basic_block_kernel(x_ref, w1_ref, b1_ref, w2_ref, b2_ref, out_ref,
                        pad, cols):
    """One batch element per grid step.

    x_ref  : (1, H, W, C) f32    unpadded input tile (also the residual)
    w*_ref : (9*C, C)     bf16   BN-scale-folded conv weights, im2col layout
    b*_ref : (1, C)       f32    folded BN bias
    out_ref: (1, H, W, C) f32
    pad    : (H+2, W+2, C) f32 VMEM scratch (zero border), shared by both convs
    cols   : (H, W, 9*C)  bf16 VMEM im2col scratch (reused by both convs)
    """
    H, W, C = out_ref.shape[1], out_ref.shape[2], out_ref.shape[3]

    # Interior is fully overwritten each use; only the border needs zeros.
    # Done every step (not under pl.when(pid==0)) so it stays correct when the
    # "parallel" batch axis is sharded across TensorCores.
    _zero_border(pad, H, W, C)

    x = x_ref[0]                                    # (H, W, C) f32 residual
    pad[1:1 + H, 1:1 + W, :] = x

    # conv1 + bn1 (bias only; scale folded into w1) + relu
    acc1 = _conv3x3_mxu(pad, cols, w1_ref, H, W, C)          # (H*W, C) f32
    out1 = jnp.maximum(acc1 + b1_ref[...], 0.0)

    # conv1 input in `pad` is dead now -> reuse the same scratch for conv2.
    pad[1:1 + H, 1:1 + W, :] = out1.reshape(H, W, C)

    # conv2 + bn2 (bias only) + residual add (exact f32 identity) + relu
    acc2 = _conv3x3_mxu(pad, cols, w2_ref, H, W, C)          # (H*W, C) f32
    out2 = acc2.reshape(H, W, C) + b2_ref[...] + x
    out_ref[0] = jnp.maximum(out2, 0.0)


def basic_block(x_nhwc, w1, s1, b1, w2, s2, b2, *, compute_dtype=jnp.bfloat16):
    """x_nhwc: (N, H, W, C) float32.  w*: (3,3,C,C) HWIO.  s*/b*: (C,) folded BN."""
    N, H, W, C = x_nhwc.shape
    # stride=1, downsample=None  =>  residual requires Cin == Cout.
    assert w1.shape == (3, 3, C, C) and w2.shape == (3, 3, C, C), (
        "BasicBlock kernel requires Cin == Cout (stride=1, downsample=None)")

    # Fold BN scale into conv weights (exact for inference BN), reshape to the
    # im2col (9*Cin, Cout) layout, cast to bf16 for the MXU.
    w1f = (w1 * s1[None, None, None, :]).reshape(9 * C, C).astype(compute_dtype)
    w2f = (w2 * s2[None, None, None, :]).reshape(9 * C, C).astype(compute_dtype)
    b1_2d = b1.reshape(1, C).astype(jnp.float32)
    b2_2d = b2.reshape(1, C).astype(jnp.float32)

    return pl.pallas_call(
        _basic_block_kernel,
        out_shape=jax.ShapeDtypeStruct((N, H, W, C), jnp.float32),
        grid_spec=pltpu.PrefetchScalarGridSpec(
            num_scalar_prefetch=0,
            grid=(N,),
            in_specs=[
                pl.BlockSpec((1, H, W, C), lambda n: (n, 0, 0, 0)),
                pl.BlockSpec((9 * C, C), lambda n: (0, 0)),
                pl.BlockSpec((1, C), lambda n: (0, 0)),
                pl.BlockSpec((9 * C, C), lambda n: (0, 0)),
                pl.BlockSpec((1, C), lambda n: (0, 0)),
            ],
            out_specs=pl.BlockSpec((1, H, W, C), lambda n: (n, 0, 0, 0)),
            scratch_shapes=[
                pltpu.VMEM((H + 2, W + 2, C), jnp.float32),   # shared padded scratch
                pltpu.VMEM((H, W, 9 * C), compute_dtype),     # bf16 im2col scratch
            ],
        ),
        compiler_params=pltpu.CompilerParams(
            dimension_semantics=("parallel",),
            vmem_limit_bytes=32 * 1024 * 1024,
        ),
    )(x_nhwc.astype(jnp.float32), w1f, b1_2d, w2f, b2_2d)


# ---------------------- pure-JAX reference for validation ----------------------
def _conv3x3_ref(x, w):
    return jax.lax.conv_general_dilated(
        x, w, window_strides=(1, 1), padding=((1, 1), (1, 1)),
        dimension_numbers=("NHWC", "HWIO", "NHWC"))


def _basic_block_ref(x, w1, s1, b1, w2, s2, b2):
    out = _conv3x3_ref(x, w1) * s1 + b1
    out = jnp.maximum(out, 0.0)
    out = _conv3x3_ref(out, w2) * s2 + b2
    return jnp.maximum(out + x, 0.0)


if __name__ == "__main__":
    # Small shapes consistent with BasicBlock(inplanes=4, planes=4, stride=1)
    N, C, H, W = 2, 4, 16, 16

    key = jax.random.PRNGKey(0)
    kx, kw1, kw2, kg1, kb1, km1, kv1, kg2, kb2, km2, kv2 = jax.random.split(key, 11)

    # Input is conceptually NCHW (PyTorch); transpose to NHWC for the kernel.
    x_nchw = jax.random.normal(kx, (N, C, H, W), jnp.float32)
    x = jnp.transpose(x_nchw, (0, 2, 3, 1))  # NHWC

    # Conv weights (HWIO) and BN parameters (per channel).
    w1 = jax.random.normal(kw1, (3, 3, C, C), jnp.float32) * 0.1
    w2 = jax.random.normal(kw2, (3, 3, C, C), jnp.float32) * 0.1

    eps = 1e-5
    gamma1 = 1.0 + 0.1 * jax.random.normal(kg1, (C,), jnp.float32)
    beta1 = 0.1 * jax.random.normal(kb1, (C,), jnp.float32)
    mean1 = 0.1 * jax.random.normal(km1, (C,), jnp.float32)
    var1 = jnp.abs(jax.random.normal(kv1, (C,), jnp.float32)) + 0.5
    gamma2 = 1.0 + 0.1 * jax.random.normal(kg2, (C,), jnp.float32)
    beta2 = 0.1 * jax.random.normal(kb2, (C,), jnp.float32)
    mean2 = 0.1 * jax.random.normal(km2, (C,), jnp.float32)
    var2 = jnp.abs(jax.random.normal(kv2, (C,), jnp.float32)) + 0.5

    # Fold BN (inference form) into per-channel scale / bias.
    s1 = gamma1 / jnp.sqrt(var1 + eps)
    b1 = beta1 - mean1 * s1
    s2 = gamma2 / jnp.sqrt(var2 + eps)
    b2 = beta2 - mean2 * s2

    out = basic_block(x, w1, s1, b1, w2, s2, b2)
    out = jax.block_until_ready(out)

    ref = _basic_block_ref(x, w1, s1, b1, w2, s2, b2)
    assert out.shape == (N, H, W, C)
    err = float(jnp.max(jnp.abs(out - ref)))
    # bf16 matmul operands with f32 accumulation -> loosened tolerance.
    assert jnp.allclose(out, ref, atol=5e-2, rtol=5e-2), f"max abs err {err}"

    print("KERNEL_OK")
</pallas_src>

<mosaic_0001>
module attributes {stable_mosaic.version = 11 : i64} {
  func.func @_basic_block_kernel(%arg0: i32, %arg1: memref<1x16x16x4xf32, #tpu.memory_space<vmem>>, %arg2: memref<36x4xbf16, #tpu.memory_space<vmem>>, %arg3: memref<1x4xf32, #tpu.memory_space<vmem>>, %arg4: memref<36x4xbf16, #tpu.memory_space<vmem>>, %arg5: memref<1x4xf32, #tpu.memory_space<vmem>>, %arg6: memref<1x16x16x4xf32, #tpu.memory_space<vmem>>, %arg7: memref<18x18x4xf32, #tpu.memory_space<vmem>>, %arg8: memref<16x16x36xbf16, #tpu.memory_space<vmem>>) attributes {dimension_semantics = [#tpu.dimension_semantics<parallel>], iteration_bounds = array<i64: 2>, scalar_prefetch = 0 : i64, scratch_operands = 2 : i64, tpu.core_type = #tpu.core_type<tc>, window_params = [{transform_indices = @transform_0, window_bounds = array<i64: 1, 16, 16, 4>}, {pipeline_mode = #tpu.pipeline_mode<synchronous>, transform_indices = @transform_1, window_bounds = array<i64: 36, 4>}, {pipeline_mode = #tpu.pipeline_mode<synchronous>, transform_indices = @transform_2, window_bounds = array<i64: 1, 4>}, {pipeline_mode = #tpu.pipeline_mode<synchronous>, transform_indices = @transform_3, window_bounds = array<i64: 36, 4>}, {pipeline_mode = #tpu.pipeline_mode<synchronous>, transform_indices = @transform_4, window_bounds = array<i64: 1, 4>}, {transform_indices = @transform_5, window_bounds = array<i64: 1, 16, 16, 4>}]} {
    %cst = arith.constant 0.000000e+00 : f32
    %0 = vector.broadcast %cst : f32 to vector<1x18x4xf32>
    %c0 = arith.constant 0 : index
    %c0_0 = arith.constant 0 : index
    %c0_1 = arith.constant 0 : index
    %1 = vector.load %arg7[%c0, %c0_0, %c0_1] : memref<18x18x4xf32, #tpu.memory_space<vmem>>, vector<1x18x4xf32>
    tpu.vector_store %arg7[%c0, %c0_0, %c0_1], %0 {strides = array<i32>} : memref<18x18x4xf32, #tpu.memory_space<vmem>>, vector<1x18x4xf32>,
    %cst_2 = arith.constant 0.000000e+00 : f32
    %2 = vector.broadcast %cst_2 : f32 to vector<1x18x4xf32>
    %c17 = arith.constant 17 : index
    %c0_3 = arith.constant 0 : index
    %c0_4 = arith.constant 0 : index
    %3 = vector.load %arg7[%c17, %c0_3, %c0_4] : memref<18x18x4xf32, #tpu.memory_space<vmem>>, vector<1x18x4xf32>
    tpu.vector_store %arg7[%c17, %c0_3, %c0_4], %2 {strides = array<i32>} : memref<18x18x4xf32, #tpu.memory_space<vmem>>, vector<1x18x4xf32>,
    %cst_5 = arith.constant 0.000000e+00 : f32
    %4 = vector.broadcast %cst_5 : f32 to vector<16x1x4xf32>
    %c1 = arith.constant 1 : index
    %c0_6 = arith.constant 0 : index
    %c0_7 = arith.constant 0 : index
    %5 = vector.load %arg7[%c1, %c0_6, %c0_7] : memref<18x18x4xf32, #tpu.memory_space<vmem>>, vector<16x1x4xf32>
    tpu.vector_store %arg7[%c1, %c0_6, %c0_7], %4 {strides = array<i32>} : memref<18x18x4xf32, #tpu.memory_space<vmem>>, vector<16x1x4xf32>,
    %cst_8 = arith.constant 0.000000e+00 : f32
    %6 = vector.broadcast %cst_8 : f32 to vector<16x1x4xf32>
    %c1_9 = arith.constant 1 : index
    %c17_10 = arith.constant 17 : index
    %c0_11 = arith.constant 0 : index
    %7 = vector.load %arg7[%c1_9, %c17_10, %c0_11] : memref<18x18x4xf32, #tpu.memory_space<vmem>>, vector<16x1x4xf32>
    tpu.vector_store %arg7[%c1_9, %c17_10, %c0_11], %6 {strides = array<i32>} : memref<18x18x4xf32, #tpu.memory_space<vmem>>, vector<16x1x4xf32>,
    %c0_12 = arith.constant 0 : index
    %c0_13 = arith.constant 0 : index
    %c0_14 = arith.constant 0 : index
    %c0_15 = arith.constant 0 : index
    %8 = vector.load %arg1[%c0_12, %c0_13, %c0_14, %c0_15] : memref<1x16x16x4xf32, #tpu.memory_space<vmem>>, vector<1x16x16x4xf32>
    %9 = vector.shape_cast %8 : vector<1x16x16x4xf32> to vector<16x16x4xf32>
    %c1_16 = arith.constant 1 : index
    %c1_17 = arith.constant 1 : index
    %c0_18 = arith.constant 0 : index
    %10 = vector.load %arg7[%c1_16, %c1_17, %c0_18] : memref<18x18x4xf32, #tpu.memory_space<vmem>>, vector<16x16x4xf32>
    tpu.vector_store %arg7[%c1_16, %c1_17, %c0_18], %9 {strides = array<i32>} : memref<18x18x4xf32, #tpu.memory_space<vmem>>, vector<16x16x4xf32>,
    %c0_19 = arith.constant 0 : index
    %c0_20 = arith.constant 0 : index
    %c0_21 = arith.constant 0 : index
    %11 = vector.load %arg7[%c0_19, %c0_20, %c0_21] : memref<18x18x4xf32, #tpu.memory_space<vmem>>, vector<16x16x4xf32>
    %12 = arith.truncf %11 : vector<16x16x4xf32> to vector<16x16x4xbf16>
    %c0_22 = arith.constant 0 : index
    %c0_23 = arith.constant 0 : index
    %c0_24 = arith.constant 0 : index
    %13 = vector.load %arg8[%c0_22, %c0_23, %c0_24] : memref<16x16x36xbf16, #tpu.memory_space<vmem>>, vector<16x16x4xbf16>
    tpu.vector_store %arg8[%c0_22, %c0_23, %c0_24], %12 {strides = array<i32>} : memref<16x16x36xbf16, #tpu.memory_space<vmem>>, vector<16x16x4xbf16>,
    %c0_25 = arith.constant 0 : index
    %c1_26 = arith.constant 1 : index
    %c0_27 = arith.constant 0 : index
    %14 = vector.load %arg7[%c0_25, %c1_26, %c0_27] : memref<18x18x4xf32, #tpu.memory_space<vmem>>, vector<16x16x4xf32>
    %15 = arith.truncf %14 : vector<16x16x4xf32> to vector<16x16x4xbf16>
    %c0_28 = arith.constant 0 : index
    %c0_29 = arith.constant 0 : index
    %c4 = arith.constant 4 : index
    %16 = vector.load %arg8[%c0_28, %c0_29, %c4] : memref<16x16x36xbf16, #tpu.memory_space<vmem>>, vector<16x16x4xbf16>
    tpu.vector_store %arg8[%c0_28, %c0_29, %c4], %15 {strides = array<i32>} : memref<16x16x36xbf16, #tpu.memory_space<vmem>>, vector<16x16x4xbf16>,
    %c0_30 = arith.constant 0 : index
    %c2 = arith.constant 2 : index
    %c0_31 = arith.constant 0 : index
    %17 = vector.load %arg7[%c0_30, %c2, %c0_31] : memref<18x18x4xf32, #tpu.memory_space<vmem>>, vector<16x16x4xf32>
    %18 = arith.truncf %17 : vector<16x16x4xf32> to vector<16x16x4xbf16>
    %c0_32 = arith.constant 0 : index
    %c0_33 = arith.constant 0 : index
    %c8 = arith.constant 8 : index
    %19 = vector.load %arg8[%c0_32, %c0_33, %c8] : memref<16x16x36xbf16, #tpu.memory_space<vmem>>, vector<16x16x4xbf16>
    tpu.vector_store %arg8[%c0_32, %c0_33, %c8], %18 {strides = array<i32>} : memref<16x16x36xbf16, #tpu.memory_space<vmem>>, vector<16x16x4xbf16>,
    %c1_34 = arith.constant 1 : index
    %c0_35 = arith.constant 0 : index
    %c0_36 = arith.constant 0 : index
    %20 = vector.load %arg7[%c1_34, %c0_35, %c0_36] : memref<18x18x4xf32, #tpu.memory_space<vmem>>, vector<16x16x4xf32>
    %21 = arith.truncf %20 : vector<16x16x4xf32> to vector<16x16x4xbf16>
    %c0_37 = arith.constant 0 : index
    %c0_38 = arith.constant 0 : index
    %c12 = arith.constant 12 : index
    %22 = vector.load %arg8[%c0_37, %c0_38, %c12] : memref<16x16x36xbf16, #tpu.memory_space<vmem>>, vector<16x16x4xbf16>
    tpu.vector_store %arg8[%c0_37, %c0_38, %c12], %21 {strides = array<i32>} : memref<16x16x36xbf16, #tpu.memory_space<vmem>>, vector<16x16x4xbf16>,
    %c1_39 = arith.constant 1 : index
    %c1_40 = arith.constant 1 : index
    %c0_41 = arith.constant 0 : index
    %23 = vector.load %arg7[%c1_39, %c1_40, %c0_41] : memref<18x18x4xf32, #tpu.memory_space<vmem>>, vector<16x16x4xf32>
    %24 = arith.truncf %23 : vector<16x16x4xf32> to vector<16x16x4xbf16>
    %c0_42 = arith.constant 0 : index
    %c0_43 = arith.constant 0 : index
    %c16 = arith.constant 16 : index
    %25 = vector.load %arg8[%c0_42, %c0_43, %c16] : memref<16x16x36xbf16, #tpu.memory_space<vmem>>, vector<16x16x4xbf16>
    tpu.vector_store %arg8[%c0_42, %c0_43, %c16], %24 {strides = array<i32>} : memref<16x16x36xbf16, #tpu.memory_space<vmem>>, vector<16x16x4xbf16>,
    %c1_44 = arith.constant 1 : index
    %c2_45 = arith.constant 2 : index
    %c0_46 = arith.constant 0 : index
    %26 = vector.load %arg7[%c1_44, %c2_45, %c0_46] : memref<18x18x4xf32, #tpu.memory_space<vmem>>, vector<16x16x4xf32>
    %27 = arith.truncf %26 : vector<16x16x4xf32> to vector<16x16x4xbf16>
    %c0_47 = arith.constant 0 : index
    %c0_48 = arith.constant 0 : index
    %c20 = arith.constant 20 : index
    %28 = vector.load %arg8[%c0_47, %c0_48, %c20] : memref<16x16x36xbf16, #tpu.memory_space<vmem>>, vector<16x16x4xbf16>
    tpu.vector_store %arg8[%c0_47, %c0_48, %c20], %27 {strides = array<i32>} : memref<16x16x36xbf16, #tpu.memory_space<vmem>>, vector<16x16x4xbf16>,
    %c2_49 = arith.constant 2 : index
    %c0_50 = arith.constant 0 : index
    %c0_51 = arith.constant 0 : index
    %29 = vector.load %arg7[%c2_49, %c0_50, %c0_51] : memref<18x18x4xf32, #tpu.memory_space<vmem>>, vector<16x16x4xf32>
    %30 = arith.truncf %29 : vector<16x16x4xf32> to vector<16x16x4xbf16>
    %c0_52 = arith.constant 0 : index
    %c0_53 = arith.constant 0 : index
    %c24 = arith.constant 24 : index
    %31 = vector.load %arg8[%c0_52, %c0_53, %c24] : memref<16x16x36xbf16, #tpu.memory_space<vmem>>, vector<16x16x4xbf16>
    tpu.vector_store %arg8[%c0_52, %c0_53, %c24], %30 {strides = array<i32>} : memref<16x16x36xbf16, #tpu.memory_space<vmem>>, vector<16x16x4xbf16>,
    %c2_54 = arith.constant 2 : index
    %c1_55 = arith.constant 1 : index
    %c0_56 = arith.constant 0 : index
    %32 = vector.load %arg7[%c2_54, %c1_55, %c0_56] : memref<18x18x4xf32, #tpu.memory_space<vmem>>, vector<16x16x4xf32>
    %33 = arith.truncf %32 : vector<16x16x4xf32> to vector<16x16x4xbf16>
    %c0_57 = arith.constant 0 : index
    %c0_58 = arith.constant 0 : index
    %c28 = arith.constant 28 : index
    %34 = vector.load %arg8[%c0_57, %c0_58, %c28] : memref<16x16x36xbf16, #tpu.memory_space<vmem>>, vector<16x16x4xbf16>
    tpu.vector_store %arg8[%c0_57, %c0_58, %c28], %33 {strides = array<i32>} : memref<16x16x36xbf16, #tpu.memory_space<vmem>>, vector<16x16x4xbf16>,
    %c2_59 = arith.constant 2 : index
    %c2_60 = arith.constant 2 : index
    %c0_61 = arith.constant 0 : index
    %35 = vector.load %arg7[%c2_59, %c2_60, %c0_61] : memref<18x18x4xf32, #tpu.memory_space<vmem>>, vector<16x16x4xf32>
    %36 = arith.truncf %35 : vector<16x16x4xf32> to vector<16x16x4xbf16>
    %c0_62 = arith.constant 0 : index
    %c0_63 = arith.constant 0 : index
    %c32 = arith.constant 32 : index
    %37 = vector.load %arg8[%c0_62, %c0_63, %c32] : memref<16x16x36xbf16, #tpu.memory_space<vmem>>, vector<16x16x4xbf16>
    tpu.vector_store %arg8[%c0_62, %c0_63, %c32], %36 {strides = array<i32>} : memref<16x16x36xbf16, #tpu.memory_space<vmem>>, vector<16x16x4xbf16>,
    %c0_64 = arith.constant 0 : index
    %c0_65 = arith.constant 0 : index
    %c0_66 = arith.constant 0 : index
    %38 = vector.load %arg8[%c0_64, %c0_65, %c0_66] : memref<16x16x36xbf16, #tpu.memory_space<vmem>>, vector<16x16x36xbf16>
    %39 = vector.shape_cast %38 : vector<16x16x36xbf16> to vector<256x36xbf16>
    %c0_67 = arith.constant 0 : index
    %c0_68 = arith.constant 0 : index
    %40 = vector.load %arg2[%c0_67, %c0_68] : memref<36x4xbf16, #tpu.memory_space<vmem>>, vector<36x4xbf16>
    %cst_69 = arith.constant dense<0.000000e+00> : vector<256x4xf32>
    %41 = tpu.matmul %39, %40, %cst_69 {dimension_numbers = #tpu.dot_dimension_numbers<[1], [0], [0], [1], [0, 0, 1, 1], [], []>} : vector<256x36xbf16>, vector<36x4xbf16>, vector<256x4xf32> -> vector<256x4xf32>
    %c0_70 = arith.constant 0 : index
    %c0_71 = arith.constant 0 : index
    %42 = vector.load %arg3[%c0_70, %c0_71] : memref<1x4xf32, #tpu.memory_space<vmem>>, vector<1x4xf32>
    %43 = vector.broadcast %42 : vector<1x4xf32> to vector<256x4xf32>
    %44 = arith.addf %41, %43 : vector<256x4xf32>
    %cst_72 = arith.constant 0.000000e+00 : f32
    %45 = vector.broadcast %cst_72 : f32 to vector<256x4xf32>
    %46 = arith.maximumf %44, %45 : vector<256x4xf32>
    %47 = vector.shape_cast %46 : vector<256x4xf32> to vector<16x16x4xf32>
    %c1_73 = arith.constant 1 : index
    %c1_74 = arith.constant 1 : index
    %c0_75 = arith.constant 0 : index
    %48 = vector.load %arg7[%c1_73, %c1_74, %c0_75] : memref<18x18x4xf32, #tpu.memory_space<vmem>>, vector<16x16x4xf32>
    tpu.vector_store %arg7[%c1_73, %c1_74, %c0_75], %47 {strides = array<i32>} : memref<18x18x4xf32, #tpu.memory_space<vmem>>, vector<16x16x4xf32>,
    %c0_76 = arith.constant 0 : index
    %c0_77 = arith.constant 0 : index
    %c0_78 = arith.constant 0 : index
    %49 = vector.load %arg7[%c0_76, %c0_77, %c0_78] : memref<18x18x4xf32, #tpu.memory_space<vmem>>, vector<16x16x4xf32>
    %50 = arith.truncf %49 : vector<16x16x4xf32> to vector<16x16x4xbf16>
    %c0_79 = arith.constant 0 : index
    %c0_80 = arith.constant 0 : index
    %c0_81 = arith.constant 0 : index
    %51 = vector.load %arg8[%c0_79, %c0_80, %c0_81] : memref<16x16x36xbf16, #tpu.memory_space<vmem>>, vector<16x16x4xbf16>
    tpu.vector_store %arg8[%c0_79, %c0_80, %c0_81], %50 {strides = array<i32>} : memref<16x16x36xbf16, #tpu.memory_space<vmem>>, vector<16x16x4xbf16>,
    %c0_82 = arith.constant 0 : index
    %c1_83 = arith.constant 1 : index
    %c0_84 = arith.constant 0 : index
    %52 = vector.load %arg7[%c0_82, %c1_83, %c0_84] : memref<18x18x4xf32, #tpu.memory_space<vmem>>, vector<16x16x4xf32>
    %53 = arith.truncf %52 : vector<16x16x4xf32> to vector<16x16x4xbf16>
    %c0_85 = arith.constant 0 : index
    %c0_86 = arith.constant 0 : index
    %c4_87 = arith.constant 4 : index
    %54 = vector.load %arg8[%c0_85, %c0_86, %c4_87] : memref<16x16x36xbf16, #tpu.memory_space<vmem>>, vector<16x16x4xbf16>
    tpu.vector_store %arg8[%c0_85, %c0_86, %c4_87], %53 {strides = array<i32>} : memref<16x16x36xbf16, #tpu.memory_space<vmem>>, vector<16x16x4xbf16>,
    %c0_88 = arith.constant 0 : index
    %c2_89 = arith.constant 2 : index
    %c0_90 = arith.constant 0 : index
    %55 = vector.load %arg7[%c0_88, %c2_89, %c0_90] : memref<18x18x4xf32, #tpu.memory_space<vmem>>, vector<16x16x4xf32>
    %56 = arith.truncf %55 : vector<16x16x4xf32> to vector<16x16x4xbf16>
    %c0_91 = arith.constant 0 : index
    %c0_92 = arith.constant 0 : index
    %c8_93 = arith.constant 8 : index
    %57 = vector.load %arg8[%c0_91, %c0_92, %c8_93] : memref<16x16x36xbf16, #tpu.memory_space<vmem>>, vector<16x16x4xbf16>
    tpu.vector_store %arg8[%c0_91, %c0_92, %c8_93], %56 {strides = array<i32>} : memref<16x16x36xbf16, #tpu.memory_space<vmem>>, vector<16x16x4xbf16>,
    %c1_94 = arith.constant 1 : index
    %c0_95 = arith.constant 0 : index
    %c0_96 = arith.constant 0 : index
    %58 = vector.load %arg7[%c1_94, %c0_95, %c0_96] : memref<18x18x4xf32, #tpu.memory_space<vmem>>, vector<16x16x4xf32>
    %59 = arith.truncf %58 : vector<16x16x4xf32> to vector<16x16x4xbf16>
    %c0_97 = arith.constant 0 : index
    %c0_98 = arith.constant 0 : index
    %c12_99 = arith.constant 12 : index
    %60 = vector.load %arg8[%c0_97, %c0_98, %c12_99] : memref<16x16x36xbf16, #tpu.memory_space<vmem>>, vector<16x16x4xbf16>
    tpu.vector_store %arg8[%c0_97, %c0_98, %c12_99], %59 {strides = array<i32>} : memref<16x16x36xbf16, #tpu.memory_space<vmem>>, vector<16x16x4xbf16>,
    %c1_100 = arith.constant 1 : index
    %c1_101 = arith.constant 1 : index
    %c0_102 = arith.constant 0 : index
    %61 = vector.load %arg7[%c1_100, %c1_101, %c0_102] : memref<18x18x4xf32, #tpu.memory_space<vmem>>, vector<16x16x4xf32>
    %62 = arith.truncf %61 : vector<16x16x4xf32> to vector<16x16x4xbf16>
    %c0_103 = arith.constant 0 : index
    %c0_104 = arith.constant 0 : index
    %c16_105 = arith.constant 16 : index
    %63 = vector.load %arg8[%c0_103, %c0_104, %c16_105] : memref<16x16x36xbf16, #tpu.memory_space<vmem>>, vector<16x16x4xbf16>
    tpu.vector_store %arg8[%c0_103, %c0_104, %c16_105], %62 {strides = array<i32>} : memref<16x16x36xbf16, #tpu.memory_space<vmem>>, vector<16x16x4xbf16>,
    %c1_106 = arith.constant 1 : index
    %c2_107 = arith.constant 2 : index
    %c0_108 = arith.constant 0 : index
    %64 = vector.load %arg7[%c1_106, %c2_107, %c0_108] : memref<18x18x4xf32, #tpu.memory_space<vmem>>, vector<16x16x4xf32>
    %65 = arith.truncf %64 : vector<16x16x4xf32> to vector<16x16x4xbf16>
    %c0_109 = arith.constant 0 : index
    %c0_110 = arith.constant 0 : index
    %c20_111 = arith.constant 20 : index
    %66 = vector.load %arg8[%c0_109, %c0_110, %c20_111] : memref<16x16x36xbf16, #tpu.memory_space<vmem>>, vector<16x16x4xbf16>
    tpu.vector_store %arg8[%c0_109, %c0_110, %c20_111], %65 {strides = array<i32>} : memref<16x16x36xbf16, #tpu.memory_space<vmem>>, vector<16x16x4xbf16>,
    %c2_112 = arith.constant 2 : index
    %c0_113 = arith.constant 0 : index
    %c0_114 = arith.constant 0 : index
    %67 = vector.load %arg7[%c2_112, %c0_113, %c0_114] : memref<18x18x4xf32, #tpu.memory_space<vmem>>, vector<16x16x4xf32>
    %68 = arith.truncf %67 : vector<16x16x4xf32> to vector<16x16x4xbf16>
    %c0_115 = arith.constant 0 : index
    %c0_116 = arith.constant 0 : index
    %c24_117 = arith.constant 24 : index
    %69 = vector.load %arg8[%c0_115, %c0_116, %c24_117] : memref<16x16x36xbf16, #tpu.memory_space<vmem>>, vector<16x16x4xbf16>
    tpu.vector_store %arg8[%c0_115, %c0_116, %c24_117], %68 {strides = array<i32>} : memref<16x16x36xbf16, #tpu.memory_space<vmem>>, vector<16x16x4xbf16>,
    %c2_118 = arith.constant 2 : index
    %c1_119 = arith.constant 1 : index
    %c0_120 = arith.constant 0 : index
    %70 = vector.load %arg7[%c2_118, %c1_119, %c0_120] : memref<18x18x4xf32, #tpu.memory_space<vmem>>, vector<16x16x4xf32>
    %71 = arith.truncf %70 : vector<16x16x4xf32> to vector<16x16x4xbf16>
    %c0_121 = arith.constant 0 : index
    %c0_122 = arith.constant 0 : index
    %c28_123 = arith.constant 28 : index
    %72 = vector.load %arg8[%c0_121, %c0_122, %c28_123] : memref<16x16x36xbf16, #tpu.memory_space<vmem>>, vector<16x16x4xbf16>
    tpu.vector_store %arg8[%c0_121, %c0_122, %c28_123], %71 {strides = array<i32>} : memref<16x16x36xbf16, #tpu.memory_space<vmem>>, vector<16x16x4xbf16>,
    %c2_124 = arith.constant 2 : index
    %c2_125 = arith.constant 2 : index
    %c0_126 = arith.constant 0 : index
    %73 = vector.load %arg7[%c2_124, %c2_125, %c0_126] : memref<18x18x4xf32, #tpu.memory_space<vmem>>, vector<16x16x4xf32>
    %74 = arith.truncf %73 : vector<16x16x4xf32> to vector<16x16x4xbf16>
    %c0_127 = arith.constant 0 : index
    %c0_128 = arith.constant 0 : index
    %c32_129 = arith.constant 32 : index
    %75 = vector.load %arg8[%c0_127, %c0_128, %c32_129] : memref<16x16x36xbf16, #tpu.memory_space<vmem>>, vector<16x16x4xbf16>
    tpu.vector_store %arg8[%c0_127, %c0_128, %c32_129], %74 {strides = array<i32>} : memref<16x16x36xbf16, #tpu.memory_space<vmem>>, vector<16x16x4xbf16>,
    %c0_130 = arith.constant 0 : index
    %c0_131 = arith.constant 0 : index
    %c0_132 = arith.constant 0 : index
    %76 = vector.load %arg8[%c0_130, %c0_131, %c0_132] : memref<16x16x36xbf16, #tpu.memory_space<vmem>>, vector<16x16x36xbf16>
    %77 = vector.shape_cast %76 : vector<16x16x36xbf16> to vector<256x36xbf16>
    %c0_133 = arith.constant 0 : index
    %c0_134 = arith.constant 0 : index
    %78 = vector.load %arg4[%c0_133, %c0_134] : memref<36x4xbf16, #tpu.memory_space<vmem>>, vector<36x4xbf16>
    %cst_135 = arith.constant dense<0.000000e+00> : vector<256x4xf32>
    %79 = tpu.matmul %77, %78, %cst_135 {dimension_numbers = #tpu.dot_dimension_numbers<[1], [0], [0], [1], [0, 0, 1, 1], [], []>} : vector<256x36xbf16>, vector<36x4xbf16>, vector<256x4xf32> -> vector<256x4xf32>
    %80 = vector.shape_cast %79 : vector<256x4xf32> to vector<16x16x4xf32>
    %c0_136 = arith.constant 0 : index
    %c0_137 = arith.constant 0 : index
    %81 = vector.load %arg5[%c0_136, %c0_137] : memref<1x4xf32, #tpu.memory_space<vmem>>, vector<1x4xf32>
    %82 = vector.shape_cast %81 : vector<1x4xf32> to vector<1x1x4xf32>
    %83 = vector.broadcast %82 : vector<1x1x4xf32> to vector<16x16x4xf32>
    %84 = arith.addf %80, %83 : vector<16x16x4xf32>
    %85 = arith.addf %84, %9 : vector<16x16x4xf32>
    %cst_138 = arith.constant 0.000000e+00 : f32
    %86 = vector.broadcast %cst_138 : f32 to vector<16x16x4xf32>
    %87 = arith.maximumf %85, %86 : vector<16x16x4xf32>
    %c0_139 = arith.constant 0 : index
    %c0_140 = arith.constant 0 : index
    %c0_141 = arith.constant 0 : index
    %c0_142 = arith.constant 0 : index
    %88 = vector.load %arg6[%c0_139, %c0_140, %c0_141, %c0_142] : memref<1x16x16x4xf32, #tpu.memory_space<vmem>>, vector<1x16x16x4xf32>
    %89 = vector.shape_cast %88 : vector<1x16x16x4xf32> to vector<16x16x4xf32>
    %90 = vector.shape_cast %87 : vector<16x16x4xf32> to vector<1x16x16x4xf32>
    tpu.vector_store %arg6[%c0_139, %c0_140, %c0_141, %c0_142], %90 {strides = array<i32>} : memref<1x16x16x4xf32, #tpu.memory_space<vmem>>, vector<1x16x16x4xf32>,
    return
  }
  func.func @transform_0(%arg0: i32) -> (i32, i32, i32, i32) {
    %c0_i32 = arith.constant 0 : i32
    %c0_i32_0 = arith.constant 0 : i32
    %c0_i32_1 = arith.constant 0 : i32
    %c0_i32_2 = arith.constant 0 : i32
    return %arg0, %c0_i32, %c0_i32_0, %c0_i32_1 : i32, i32, i32, i32
  }
  func.func @transform_1(%arg0: i32) -> (i32, i32) {
    %c0_i32 = arith.constant 0 : i32
    %c0_i32_0 = arith.constant 0 : i32
    %c0_i32_1 = arith.constant 0 : i32
    return %c0_i32, %c0_i32_0 : i32, i32
  }
  func.func @transform_2(%arg0: i32) -> (i32, i32) {
    %c0_i32 = arith.constant 0 : i32
    %c0_i32_0 = arith.constant 0 : i32
    %c0_i32_1 = arith.constant 0 : i32
    return %c0_i32, %c0_i32_0 : i32, i32
  }
  func.func @transform_3(%arg0: i32) -> (i32, i32) {
    %c0_i32 = arith.constant 0 : i32
    %c0_i32_0 = arith.constant 0 : i32
    %c0_i32_1 = arith.constant 0 : i32
    return %c0_i32, %c0_i32_0 : i32, i32
  }
  func.func @transform_4(%arg0: i32) -> (i32, i32) {
    %c0_i32 = arith.constant 0 : i32
    %c0_i32_0 = arith.constant 0 : i32
    %c0_i32_1 = arith.constant 0 : i32
    return %c0_i32, %c0_i32_0 : i32, i32
  }
  func.func @transform_5(%arg0: i32) -> (i32, i32, i32, i32) {
    %c0_i32 = arith.constant 0 : i32
    %c0_i32_0 = arith.constant 0 : i32
    %c0_i32_1 = arith.constant 0 : i32
    %c0_i32_2 = arith.constant 0 : i32
    return %arg0, %c0_i32, %c0_i32_0, %c0_i32_1 : i32, i32, i32, i32
  }
}

</mosaic_0001>

<llo_original>
// kernel: tpu_custom_call.1
$region0: #{tpu_custom_call.1}
  #allocation0 [shape = 'u32[]', space=smem, size = 0x4, offset = 0x4, fixed_abs, tag = 'smem constant byte address 0x4 - core index']
  #allocation1 [shape = 'u32[144,128]{1,0:T(1,128)}', space=vmem, size = 0x12000, scoped, tag = 'internal scratch']
  #allocation2 [shape = 'f32[18,18,4]{2,1,0:T(8,128)}', space=vmem, size = 0x36000, scoped, tag = 'scratch operand']
  #allocation3 [shape = 'bf16[16,16,36]{2,1,0:T(16,128)(2,1)}', space=vmem, size = 0x10000, scoped, tag = 'scratch operand']
  %s0 = inlined_call_operand.vmem [shape: f32[2,16,16,4], index: 0, kind: input, shape index: {}]
  %s1 = inlined_call_operand.vmem [shape: bf16[36,4], index: 1, kind: input, shape index: {}]
  %s2 = inlined_call_operand.vmem [shape: f32[1,4], index: 2, kind: input, shape index: {}]
  %s3 = inlined_call_operand.vmem [shape: bf16[36,4], index: 3, kind: input, shape index: {}]
  %s4 = inlined_call_operand.vmem [shape: f32[1,4], index: 4, kind: input, shape index: {}]
  %s5 = inlined_call_operand.vmem [shape: f32[2,16,16,4], index: 5, kind: output, shape index: {}]
  %s6 = sld [smem:[#allocation0]]
  $region53: #{tpu_custom_call.1} parent=0
    _
  %s8 = ssub.s32 1, %s6
  %s9 = scalar_select 0, %s8, %s6
  loop: start=0, step=1, limit=4
  $region2: #{tpu_custom_call.1} parent=0 // loop_pre_header
    _
  $region3: #{tpu_custom_call.1} parent=0 // loop_header
    %s11 = sphi 0, %s15
    %p12 = scmp.ge.s32.totalorder %s11, 4
    %s21 = sphi 0, %s23
    %s24 = sphi 0, %s21
    %s25 = sphi 0, %s24
    %s41 = sphi 0, %s25
    %s45 = sphi 0, %s45
    %s47 = sphi 0, %s45
    %s48 = sphi 0, %s47
    %s62 = sphi 0, %s48
    %s66 = sphi 0, %s66
    %s68 = sphi 0, %s66
    %s69 = sphi 0, %s68
    %s83 = sphi 0, %s69
    %s87 = sphi 0, %s87
    %s89 = sphi 0, %s87
    %s90 = sphi 0, %s89
    %s104 = sphi 0, %s90
    %s108 = sphi 0, %s108
    %s110 = sphi 0, %s108
    %s111 = sphi 0, %s110
    %s125 = sphi 0, %s111
    %s131 = sphi 0, %s133
    %s134 = sphi 0, %s131
    %s135 = sphi 0, %s134
    %s151 = sphi 0, %s135
  $region4: #{tpu_custom_call.1} parent=0 // loop_header_branch
    %14 = sbr.rel (%p12) target = $region8
  $region5: #{tpu_custom_call.1} parent=0 // loop_body
    %s16 = ssub.s32 %s11, 1
    %s17 = ssub.s32 %s11, 2
    %s18 = sadd.s32 %s11, 1
    %s19 = ssub.s32 %s11, %s18
    %p20 = scmp.eq.s32.totalorder %s19, 0
    %s22 = sadd.s32 %s21, 1
    %s23 = scalar_select %p20, %s21, %s22
    %p26 = pneg %p20
    %p27 = scmp.eq.s32.totalorder %s11, 1
    %p28 = por %p26, %p27
    %p29 = scmp.ne.s32.totalorder %s21, %s24
    %p30 = scmp.eq.s32.totalorder %s11, 0
    %p31 = por %p29, %p30
    %p32 = scmp.ne.s32.totalorder %s21, %s24
    %p33 = scmp.eq.s32.totalorder %s16, 1
    %p34 = por %p32, %p33
    %p35 = scmp.ne.s32.totalorder %s24, %s25
    %p36 = scmp.eq.s32.totalorder %s16, 0
    %p37 = por %p35, %p36
    %p38 = scmp.ne.s32.totalorder %s24, %s25
    %p39 = scmp.eq.s32.totalorder %s17, 1
    %p40 = por %p38, %p39
    %p42 = scmp.ne.s32.totalorder %s25, %s41
    %p43 = scmp.eq.s32.totalorder %s17, 0
    %p44 = por %p42, %p43
    %s46 = sadd.s32 %s45, 1
    %p49 = scmp.eq.s32.totalorder %s11, 1
    %p50 = scmp.ne.s32.totalorder %s45, %s47
    %p51 = scmp.eq.s32.totalorder %s11, 0
    %p52 = por %p50, %p51
    %p53 = scmp.ne.s32.totalorder %s45, %s47
    %p54 = scmp.eq.s32.totalorder %s16, 1
    %p55 = por %p53, %p54
    %p56 = scmp.ne.s32.totalorder %s47, %s48
    %p57 = scmp.eq.s32.totalorder %s16, 0
    %p58 = por %p56, %p57
    %p59 = scmp.ne.s32.totalorder %s47, %s48
    %p60 = scmp.eq.s32.totalorder %s17, 1
    %p61 = por %p59, %p60
    %p63 = scmp.ne.s32.totalorder %s48, %s62
    %p64 = scmp.eq.s32.totalorder %s17, 0
    %p65 = por %p63, %p64
    %s67 = sadd.s32 %s66, 1
    %p70 = scmp.eq.s32.totalorder %s11, 1
    %p71 = scmp.ne.s32.totalorder %s66, %s68
    %p72 = scmp.eq.s32.totalorder %s11, 0
    %p73 = por %p71, %p72
    %p74 = scmp.ne.s32.totalorder %s66, %s68
    %p75 = scmp.eq.s32.totalorder %s16, 1
    %p76 = por %p74, %p75
    %p77 = scmp.ne.s32.totalorder %s68, %s69
    %p78 = scmp.eq.s32.totalorder %s16, 0
    %p79 = por %p77, %p78
    %p80 = scmp.ne.s32.totalorder %s68, %s69
    %p81 = scmp.eq.s32.totalorder %s17, 1
    %p82 = por %p80, %p81
    %p84 = scmp.ne.s32.totalorder %s69, %s83
    %p85 = scmp.eq.s32.totalorder %s17, 0
    %p86 = por %p84, %p85
    %s88 = sadd.s32 %s87, 1
    %p91 = scmp.eq.s32.totalorder %s11, 1
    %p92 = scmp.ne.s32.totalorder %s87, %s89
    %p93 = scmp.eq.s32.totalorder %s11, 0
    %p94 = por %p92, %p93
    %p95 = scmp.ne.s32.totalorder %s87, %s89
    %p96 = scmp.eq.s32.totalorder %s16, 1
    %p97 = por %p95, %p96
    %p98 = scmp.ne.s32.totalorder %s89, %s90
    %p99 = scmp.eq.s32.totalorder %s16, 0
    %p100 = por %p98, %p99
    %p101 = scmp.ne.s32.totalorder %s89, %s90
    %p102 = scmp.eq.s32.totalorder %s17, 1
    %p103 = por %p101, %p102
    %p105 = scmp.ne.s32.totalorder %s90, %s104
    %p106 = scmp.eq.s32.totalorder %s17, 0
    %p107 = por %p105, %p106
    %s109 = sadd.s32 %s108, 1
    %p112 = scmp.eq.s32.totalorder %s11, 1
    %p113 = scmp.ne.s32.totalorder %s108, %s110
    %p114 = scmp.eq.s32.totalorder %s11, 0
    %p115 = por %p113, %p114
    %p116 = scmp.ne.s32.totalorder %s108, %s110
    %p117 = scmp.eq.s32.totalorder %s16, 1
    %p118 = por %p116, %p117
    %p119 = scmp.ne.s32.totalorder %s110, %s111
    %p120 = scmp.eq.s32.totalorder %s16, 0
    %p121 = por %p119, %p120
    %p122 = scmp.ne.s32.totalorder %s110, %s111
    %p123 = scmp.eq.s32.totalorder %s17, 1
    %p124 = por %p122, %p123
    %p126 = scmp.ne.s32.totalorder %s111, %s125
    %p127 = scmp.eq.s32.totalorder %s17, 0
    %p128 = por %p126, %p127
    %s129 = ssub.s32 %s11, %s18
    %p130 = scmp.eq.s32.totalorder %s129, 0
    %s132 = sadd.s32 %s131, 1
    %s133 = scalar_select %p130, %s131, %s132
    %p136 = pneg %p130
    %p137 = scmp.eq.s32.totalorder %s11, 1
    %p138 = por %p136, %p137
    %p139 = scmp.ne.s32.totalorder %s131, %s134
    %p140 = scmp.eq.s32.totalorder %s11, 0
    %p141 = por %p139, %p140
    %p142 = scmp.ne.s32.totalorder %s131, %s134
    %p143 = scmp.eq.s32.totalorder %s16, 1
    %p144 = por %p142, %p143
    %p145 = scmp.ne.s32.totalorder %s134, %s135
    %p146 = scmp.eq.s32.totalorder %s16, 0
    %p147 = por %p145, %p146
    %p148 = scmp.ne.s32.totalorder %s134, %s135
    %p149 = scmp.eq.s32.totalorder %s17, 1
    %p150 = por %p148, %p149
    %p152 = scmp.ne.s32.totalorder %s135, %s151
    %p153 = scmp.eq.s32.totalorder %s17, 0
    %p154 = por %p152, %p153
    %p155 = scmp.le.s32.totalorder 1, %s11
    %p156 = scmp.lt.s32.totalorder %s11, 3
    %p157 = pnand %p155, %p156
    %p158 = pneg %p157
    // Predicated region
    $region9: #{tpu_custom_call.1} parent=5 // pred_check
      _
    $region10: #{tpu_custom_call.1} parent=5 // pred_check_branch
      %160 = sbr.rel (%p157) target = $region12
    $region11: #{tpu_custom_call.1} parent=5 // pred_region
      %s161 = ssub.s32 %s11, 1
      // Predicated region
      $region13: #{tpu_custom_call.1} parent=11 // pred_check
        %p162 = pneg %p58
      $region14: #{tpu_custom_call.1} parent=11 // pred_check_branch
        %164 = sbr.rel (%p162) target = $region16
      $region15: #{tpu_custom_call.1} parent=11 // pred_region
        _
      $region16: #{tpu_custom_call.1} parent=11 // pred_fallthru
        _
      // Predicated region
      $region17: #{tpu_custom_call.1} parent=11 // pred_check
        %p165 = pneg %p79
      $region18: #{tpu_custom_call.1} parent=11 // pred_check_branch
        %167 = sbr.rel (%p165) target = $region20
      $region19: #{tpu_custom_call.1} parent=11 // pred_region
        _
      $region20: #{tpu_custom_call.1} parent=11 // pred_fallthru
        _
      // Predicated region
      $region21: #{tpu_custom_call.1} parent=11 // pred_check
        %p168 = pneg %p100
      $region22: #{tpu_custom_call.1} parent=11 // pred_check_branch
        %170 = sbr.rel (%p168) target = $region24
      $region23: #{tpu_custom_call.1} parent=11 // pred_region
        _
      $region24: #{tpu_custom_call.1} parent=11 // pred_fallthru
        _
      // Predicated region
      $region25: #{tpu_custom_call.1} parent=11 // pred_check
        %p171 = pneg %p121
      $region26: #{tpu_custom_call.1} parent=11 // pred_check_branch
        %173 = sbr.rel (%p171) target = $region28
      $region27: #{tpu_custom_call.1} parent=11 // pred_region
        _
      $region28: #{tpu_custom_call.1} parent=11 // pred_fallthru
        _
    $region12: #{tpu_custom_call.1} parent=5 // pred_fallthru
      _
    %p174 = scmp.lt.s32.totalorder %s11, 2
    // Predicated region
    $region29: #{tpu_custom_call.1} parent=5 // pred_check
      %p175 = pneg %p174
    $region30: #{tpu_custom_call.1} parent=5 // pred_check_branch
      %177 = sbr.rel (%p175) target = $region32
    $region31: #{tpu_custom_call.1} parent=5 // pred_region
      // Predicated region
      $region33: #{tpu_custom_call.1} parent=31 // pred_check
        %p178 = pneg %p31
      $region34: #{tpu_custom_call.1} parent=31 // pred_check_branch
        %180 = sbr.rel (%p178) target = $region36
      $region35: #{tpu_custom_call.1} parent=31 // pred_region
        %p181 = scmp.lt.s32.totalorder %s11, 1
        %s182 = scalar_select %p181, %s11, 1
        %s183 = smul.addr %s182, 32
        %s184 = smul.addr %s183, 8
        %s185 = scalar_lea.vmem %s0, %s184
      $region36: #{tpu_custom_call.1} parent=31 // pred_fallthru
        _
    $region32: #{tpu_custom_call.1} parent=5 // pred_fallthru
      _
    %p186 = scmp.le.s32.totalorder 1, %s11
    %p187 = scmp.lt.s32.totalorder %s11, 3
    %p188 = pnand %p186, %p187
    %p189 = pneg %p188
    // Predicated region
    $region37: #{tpu_custom_call.1} parent=5 // pred_check
      _
    $region38: #{tpu_custom_call.1} parent=5 // pred_check_branch
      %191 = sbr.rel (%p188) target = $region40
    $region39: #{tpu_custom_call.1} parent=5 // pred_region
      %s192 = ssub.s32 %s11, 1
      %p193 = scmp.lt.s32.totalorder %s16, 1
      %s194 = scalar_select %p193, %s16, 1
      %s195 = smul.addr %s194, 32
      %s196 = smul.addr %s195, 8
      %s197 = scalar_lea.vmem %s0, %s196
      %p198 = pneg %p37
      %p199 = pneg %p34
      %p200 = pneg %p58
      %p201 = pneg %p55
      %p202 = pneg %p79
      %p203 = pneg %p76
      %p204 = pneg %p100
      %p205 = pneg %p97
      %p206 = pneg %p121
      %p207 = pneg %p118
      %p208 = pneg %p147
      %p209 = pneg %p144
      %p210 = scmp.lt.s32.totalorder %s16, 1
      %s211 = scalar_select %p210, %s16, 1
      %s212 = smul.addr %s211, 32
      %s213 = smul.addr %s212, 8
      %s214 = scalar_lea.vmem %s5, %s213
      %p215 = scmp.lt.s32.totalorder %s16, 1
      %s216 = scalar_select %p215, %s16, 1
      %s217 = smul.addr %s216, 32
      %s218 = smul.addr %s217, 8
      %s219 = scalar_lea.vmem %s0, %s218
      %p220 = scmp.lt.s32.totalorder %s16, 1
      %s221 = scalar_select %p220, %s16, 1
      %s222 = smul.addr %s221, 32
      %s223 = smul.addr %s222, 8
      %s224 = scalar_lea.vmem %s5, %s223
      %vm226 = vcmask 31744
      %227 = vst.msk [vmem:[#allocation2] sm:$0xff] %vm226, 0.0
      %228 = vst.msk [vmem:[#allocation2 + $0x8] sm:$0xff] %vm226, 0.0
      %vm229 = vcmask 25600
      %230 = vst.msk [vmem:[#allocation2 + $0x10] sm:$0x3] %vm229, 0.0
      %s231 = scalar_lea.vmem [#allocation2], 408
      %232 = vst.msk [vmem:[%s231] sm:$0xff] %vm226, 0.0
      %233 = vst.msk [vmem:[%s231 + $0x8] sm:$0xff] %vm226, 0.0
      %234 = vst.msk [vmem:[%s231 + $0x10] sm:$0x3] %vm229, 0.0
      %s235 = scalar_lea.vmem [#allocation2], 24
      %vm236 = vcmask 24576
      %237 = vst.msk [vmem:[%s235] sm:$0x1] %vm236, 0.0
      %238 = vst.msk [vmem:[%s235 + $0x18] sm:$0x1] %vm236, 0.0
      %239 = vst.msk [vmem:[%s235 + $0x30] sm:$0x1] %vm236, 0.0
      %240 = vst.msk [vmem:[%s235 + $0x48] sm:$0x1] %vm236, 0.0
      %241 = vst.msk [vmem:[%s235 + $0x60] sm:$0x1] %vm236, 0.0
      %242 = vst.msk [vmem:[%s235 + $0x78] sm:$0x1] %vm236, 0.0
      %243 = vst.msk [vmem:[%s235 + $0x90] sm:$0x1] %vm236, 0.0
      %244 = vst.msk [vmem:[%s235 + $0xa8] sm:$0x1] %vm236, 0.0
      %245 = vst.msk [vmem:[%s235 + $0xc0] sm:$0x1] %vm236, 0.0
      %246 = vst.msk [vmem:[%s235 + $0xd8] sm:$0x1] %vm236, 0.0
      %247 = vst.msk [vmem:[%s235 + $0xf0] sm:$0x1] %vm236, 0.0
      %248 = vst.msk [vmem:[%s235 + $0x108] sm:$0x1] %vm236, 0.0
      %249 = vst.msk [vmem:[%s235 + $0x120] sm:$0x1] %vm236, 0.0
      %250 = vst.msk [vmem:[%s235 + $0x138] sm:$0x1] %vm236, 0.0
      %251 = vst.msk [vmem:[%s235 + $0x150] sm:$0x1] %vm236, 0.0
      %252 = vst.msk [vmem:[%s235 + $0x168] sm:$0x1] %vm236, 0.0
      %253 = vst.msk [vmem:[%s235 + $0x11] sm:$0x1] %vm236, 0.0
      %254 = vst.msk [vmem:[%s235 + $0x29] sm:$0x1] %vm236, 0.0
      %255 = vst.msk [vmem:[%s235 + $0x41] sm:$0x1] %vm236, 0.0
      %256 = vst.msk [vmem:[%s235 + $0x59] sm:$0x1] %vm236, 0.0
      %257 = vst.msk [vmem:[%s235 + $0x71] sm:$0x1] %vm236, 0.0
      %258 = vst.msk [vmem:[%s235 + $0x89] sm:$0x1] %vm236, 0.0
      %259 = vst.msk [vmem:[%s235 + $0xa1] sm:$0x1] %vm236, 0.0
      %260 = vst.msk [vmem:[%s235 + $0xb9] sm:$0x1] %vm236, 0.0
      %261 = vst.msk [vmem:[%s235 + $0xd1] sm:$0x1] %vm236, 0.0
      %262 = vst.msk [vmem:[%s235 + $0xe9] sm:$0x1] %vm236, 0.0
      %263 = vst.msk [vmem:[%s235 + $0x101] sm:$0x1] %vm236, 0.0
      %264 = vst.msk [vmem:[%s235 + $0x119] sm:$0x1] %vm236, 0.0
      %265 = vst.msk [vmem:[%s235 + $0x131] sm:$0x1] %vm236, 0.0
      %266 = vst.msk [vmem:[%s235 + $0x149] sm:$0x1] %vm236, 0.0
      %267 = vst.msk [vmem:[%s235 + $0x161] sm:$0x1] %vm236, 0.0
      %268 = vst.msk [vmem:[%s235 + $0x179] sm:$0x1] %vm236, 0.0
      %v269 = vld [vmem:[%s219] sm:$0xff]
      %v270 = vld [vmem:[%s219 + $0x8] sm:$0xff]
      %v271 = vld [vmem:[%s219 + $0x10] sm:$0xff]
      %v272 = vld [vmem:[%s219 + $0x18] sm:$0xff]
      %v273 = vld [vmem:[%s219 + $0x20] sm:$0xff]
      %v274 = vld [vmem:[%s219 + $0x28] sm:$0xff]
      %v275 = vld [vmem:[%s219 + $0x30] sm:$0xff]
      %v276 = vld [vmem:[%s219 + $0x38] sm:$0xff]
      %v277 = vld [vmem:[%s219 + $0x40] sm:$0xff]
      %v278 = vld [vmem:[%s219 + $0x48] sm:$0xff]
      %v279 = vld [vmem:[%s219 + $0x50] sm:$0xff]
      %v280 = vld [vmem:[%s219 + $0x58] sm:$0xff]
      %v281 = vld [vmem:[%s219 + $0x60] sm:$0xff]
      %v282 = vld [vmem:[%s219 + $0x68] sm:$0xff]
      %v283 = vld [vmem:[%s219 + $0x70] sm:$0xff]
      %v284 = vld [vmem:[%s219 + $0x78] sm:$0xff]
      %v285 = vld [vmem:[%s219 + $0x80] sm:$0xff]
      %v286 = vld [vmem:[%s219 + $0x88] sm:$0xff]
      %v287 = vld [vmem:[%s219 + $0x90] sm:$0xff]
      %v288 = vld [vmem:[%s219 + $0x98] sm:$0xff]
      %v289 = vld [vmem:[%s219 + $0xa0] sm:$0xff]
      %v290 = vld [vmem:[%s219 + $0xa8] sm:$0xff]
      %v291 = vld [vmem:[%s219 + $0xb0] sm:$0xff]
      %v292 = vld [vmem:[%s219 + $0xb8] sm:$0xff]
      %v293 = vld [vmem:[%s219 + $0xc0] sm:$0xff]
      %v294 = vld [vmem:[%s219 + $0xc8] sm:$0xff]
      %v295 = vld [vmem:[%s219 + $0xd0] sm:$0xff]
      %v296 = vld [vmem:[%s219 + $0xd8] sm:$0xff]
      %v297 = vld [vmem:[%s219 + $0xe0] sm:$0xff]
      %v298 = vld [vmem:[%s219 + $0xe8] sm:$0xff]
      %v299 = vld [vmem:[%s219 + $0xf0] sm:$0xff]
      %v300 = vld [vmem:[%s219 + $0xf8] sm:$0xff]
      %301 = vst.msk [vmem:[%s235 + $0x1] sm:$0xff] %vm226, %v269
      %302 = vst.msk [vmem:[%s235 + $0x9] sm:$0xff] %vm226, %v270
      %303 = vst.msk [vmem:[%s235 + $0x19] sm:$0xff] %vm226, %v271
      %304 = vst.msk [vmem:[%s235 + $0x21] sm:$0xff] %vm226, %v272
      %305 = vst.msk [vmem:[%s235 + $0x31] sm:$0xff] %vm226, %v273
      %306 = vst.msk [vmem:[%s235 + $0x39] sm:$0xff] %vm226, %v274
      %307 = vst.msk [vmem:[%s235 + $0x49] sm:$0xff] %vm226, %v275
      %308 = vst.msk [vmem:[%s235 + $0x51] sm:$0xff] %vm226, %v276
      %309 = vst.msk [vmem:[%s235 + $0x61] sm:$0xff] %vm226, %v277
      %310 = vst.msk [vmem:[%s235 + $0x69] sm:$0xff] %vm226, %v278
      %311 = vst.msk [vmem:[%s235 + $0x79] sm:$0xff] %vm226, %v279
      %312 = vst.msk [vmem:[%s235 + $0x81] sm:$0xff] %vm226, %v280
      %313 = vst.msk [vmem:[%s235 + $0x91] sm:$0xff] %vm226, %v281
      %314 = vst.msk [vmem:[%s235 + $0x99] sm:$0xff] %vm226, %v282
      %315 = vst.msk [vmem:[%s235 + $0xa9] sm:$0xff] %vm226, %v283
      %316 = vst.msk [vmem:[%s235 + $0xb1] sm:$0xff] %vm226, %v284
      %317 = vst.msk [vmem:[%s235 + $0xc1] sm:$0xff] %vm226, %v285
      %318 = vst.msk [vmem:[%s235 + $0xc9] sm:$0xff] %vm226, %v286
      %319 = vst.msk [vmem:[%s235 + $0xd9] sm:$0xff] %vm226, %v287
      %320 = vst.msk [vmem:[%s235 + $0xe1] sm:$0xff] %vm226, %v288
      %321 = vst.msk [vmem:[%s235 + $0xf1] sm:$0xff] %vm226, %v289
      %322 = vst.msk [vmem:[%s235 + $0xf9] sm:$0xff] %vm226, %v290
      %323 = vst.msk [vmem:[%s235 + $0x109] sm:$0xff] %vm226, %v291
      %324 = vst.msk [vmem:[%s235 + $0x111] sm:$0xff] %vm226, %v292
      %325 = vst.msk [vmem:[%s235 + $0x121] sm:$0xff] %vm226, %v293
      %326 = vst.msk [vmem:[%s235 + $0x129] sm:$0xff] %vm226, %v294
      %327 = vst.msk [vmem:[%s235 + $0x139] sm:$0xff] %vm226, %v295
      %328 = vst.msk [vmem:[%s235 + $0x141] sm:$0xff] %vm226, %v296
      %329 = vst.msk [vmem:[%s235 + $0x151] sm:$0xff] %vm226, %v297
      %330 = vst.msk [vmem:[%s235 + $0x159] sm:$0xff] %vm226, %v298
      %331 = vst.msk [vmem:[%s235 + $0x169] sm:$0xff] %vm226, %v299
      %332 = vst.msk [vmem:[%s235 + $0x171] sm:$0xff] %vm226, %v300
      %v333 = vld [vmem:[#allocation2] sm:$0xff]
      %v334 = vld [vmem:[#allocation2 + $0x8] sm:$0xff]
      %v335 = vld [vmem:[#allocation2 + $0x18] sm:$0xff]
      %v336 = vld [vmem:[#allocation2 + $0x20] sm:$0xff]
      %v337 = vld [vmem:[#allocation2 + $0x30] sm:$0xff]
      %v338 = vld [vmem:[#allocation2 + $0x38] sm:$0xff]
      %v339 = vld [vmem:[#allocation2 + $0x48] sm:$0xff]
      %v340 = vld [vmem:[#allocation2 + $0x50] sm:$0xff]
      %v341 = vld [vmem:[#allocation2 + $0x60] sm:$0xff]
      %v342 = vld [vmem:[#allocation2 + $0x68] sm:$0xff]
      %v343 = vld [vmem:[#allocation2 + $0x78] sm:$0xff]
      %v344 = vld [vmem:[#allocation2 + $0x80] sm:$0xff]
      %v345 = vld [vmem:[#allocation2 + $0x90] sm:$0xff]
      %v346 = vld [vmem:[#allocation2 + $0x98] sm:$0xff]
      %v347 = vld [vmem:[#allocation2 + $0xa8] sm:$0xff]
      %v348 = vld [vmem:[#allocation2 + $0xb0] sm:$0xff]
      %v349 = vld [vmem:[#allocation2 + $0xc0] sm:$0xff]
      %v350 = vld [vmem:[#allocation2 + $0xc8] sm:$0xff]
      %v351 = vld [vmem:[#allocation2 + $0xd8] sm:$0xff]
      %v352 = vld [vmem:[#allocation2 + $0xe0] sm:$0xff]
      %v353 = vld [vmem:[#allocation2 + $0xf0] sm:$0xff]
      %v354 = vld [vmem:[#allocation2 + $0xf8] sm:$0xff]
      %v355 = vld [vmem:[#allocation2 + $0x108] sm:$0xff]
      %v356 = vld [vmem:[#allocation2 + $0x110] sm:$0xff]
      %v357 = vld [vmem:[#allocation2 + $0x120] sm:$0xff]
      %v358 = vld [vmem:[#allocation2 + $0x128] sm:$0xff]
      %v359 = vld [vmem:[#allocation2 + $0x138] sm:$0xff]
      %v360 = vld [vmem:[#allocation2 + $0x140] sm:$0xff]
      %v361 = vld [vmem:[#allocation2 + $0x150] sm:$0xff]
      %v362 = vld [vmem:[#allocation2 + $0x158] sm:$0xff]
      %v363 = vld [vmem:[#allocation2 + $0x168] sm:$0xff]
      %v364 = vld [vmem:[#allocation2 + $0x170] sm:$0xff]
      %v365 = vpack.c.bf16 %v334, %v333
      %v366 = vpack.c.bf16 %v336, %v335
      %v367 = vpack.c.bf16 %v338, %v337
      %v368 = vpack.c.bf16 %v340, %v339
      %v369 = vpack.c.bf16 %v342, %v341
      %v370 = vpack.c.bf16 %v344, %v343
      %v371 = vpack.c.bf16 %v346, %v345
      %v372 = vpack.c.bf16 %v348, %v347
      %v373 = vpack.c.bf16 %v350, %v349
      %v374 = vpack.c.bf16 %v352, %v351
      %v375 = vpack.c.bf16 %v354, %v353
      %v376 = vpack.c.bf16 %v356, %v355
      %v377 = vpack.c.bf16 %v358, %v357
      %v378 = vpack.c.bf16 %v360, %v359
      %v379 = vpack.c.bf16 %v362, %v361
      %v380 = vpack.c.bf16 %v364, %v363
      %381 = vst.msk [vmem:[#allocation3] sm:$0xff] %vm226, %v365
      %382 = vst.msk [vmem:[#allocation3 + $0x8] sm:$0xff] %vm226, %v366
      %383 = vst.msk [vmem:[#allocation3 + $0x10] sm:$0xff] %vm226, %v367
      %384 = vst.msk [vmem:[#allocation3 + $0x18] sm:$0xff] %vm226, %v368
      %385 = vst.msk [vmem:[#allocation3 + $0x20] sm:$0xff] %vm226, %v369
      %386 = vst.msk [vmem:[#allocation3 + $0x28] sm:$0xff] %vm226, %v370
      %387 = vst.msk [vmem:[#allocation3 + $0x30] sm:$0xff] %vm226, %v371
      %388 = vst.msk [vmem:[#allocation3 + $0x38] sm:$0xff] %vm226, %v372
      %389 = vst.msk [vmem:[#allocation3 + $0x40] sm:$0xff] %vm226, %v373
      %390 = vst.msk [vmem:[#allocation3 + $0x48] sm:$0xff] %vm226, %v374
      %391 = vst.msk [vmem:[#allocation3 + $0x50] sm:$0xff] %vm226, %v375
      %392 = vst.msk [vmem:[#allocation3 + $0x58] sm:$0xff] %vm226, %v376
      %393 = vst.msk [vmem:[#allocation3 + $0x60] sm:$0xff] %vm226, %v377
      %394 = vst.msk [vmem:[#allocation3 + $0x68] sm:$0xff] %vm226, %v378
      %395 = vst.msk [vmem:[#allocation3 + $0x70] sm:$0xff] %vm226, %v379
      %396 = vst.msk [vmem:[#allocation3 + $0x78] sm:$0xff] %vm226, %v380
      %v397 = vld [vmem:[#allocation2 + $0x1] sm:$0xff]
      %v398 = vld [vmem:[#allocation2 + $0x9] sm:$0xff]
      %v399 = vld [vmem:[#allocation2 + $0x19] sm:$0xff]
      %v400 = vld [vmem:[#allocation2 + $0x21] sm:$0xff]
      %v401 = vld [vmem:[#allocation2 + $0x31] sm:$0xff]
      %v402 = vld [vmem:[#allocation2 + $0x39] sm:$0xff]
      %v403 = vld [vmem:[#allocation2 + $0x49] sm:$0xff]
      %v404 = vld [vmem:[#allocation2 + $0x51] sm:$0xff]
      %v405 = vld [vmem:[#allocation2 + $0x61] sm:$0xff]
      %v406 = vld [vmem:[#allocation2 + $0x69] sm:$0xff]
      %v407 = vld [vmem:[#allocation2 + $0x79] sm:$0xff]
      %v408 = vld [vmem:[#allocation2 + $0x81] sm:$0xff]
      %v409 = vld [vmem:[#allocation2 + $0x91] sm:$0xff]
      %v410 = vld [vmem:[#allocation2 + $0x99] sm:$0xff]
      %v411 = vld [vmem:[#allocation2 + $0xa9] sm:$0xff]
      %v412 = vld [vmem:[#allocation2 + $0xb1] sm:$0xff]
      %v413 = vld [vmem:[#allocation2 + $0xc1] sm:$0xff]
      %v414 = vld [vmem:[#allocation2 + $0xc9] sm:$0xff]
      %v415 = vld [vmem:[#allocation2 + $0xd9] sm:$0xff]
      %v416 = vld [vmem:[#allocation2 + $0xe1] sm:$0xff]
      %v417 = vld [vmem:[#allocation2 + $0xf1] sm:$0xff]
      %v418 = vld [vmem:[#allocation2 + $0xf9] sm:$0xff]
      %v419 = vld [vmem:[#allocation2 + $0x109] sm:$0xff]
      %v420 = vld [vmem:[#allocation2 + $0x111] sm:$0xff]
      %v421 = vld [vmem:[#allocation2 + $0x121] sm:$0xff]
      %v422 = vld [vmem:[#allocation2 + $0x129] sm:$0xff]
      %v423 = vld [vmem:[#allocation2 + $0x139] sm:$0xff]
      %v424 = vld [vmem:[#allocation2 + $0x141] sm:$0xff]
      %v425 = vld [vmem:[#allocation2 + $0x151] sm:$0xff]
      %v426 = vld [vmem:[#allocation2 + $0x159] sm:$0xff]
      %v427 = vld [vmem:[#allocation2 + $0x169] sm:$0xff]
      %v428 = vld [vmem:[#allocation2 + $0x171] sm:$0xff]
      %v429 = vpack.c.bf16 %v398, %v397
      %v430 = vpack.c.bf16 %v400, %v399
      %v431 = vpack.c.bf16 %v402, %v401
      %v432 = vpack.c.bf16 %v404, %v403
      %v433 = vpack.c.bf16 %v406, %v405
      %v434 = vpack.c.bf16 %v408, %v407
      %v435 = vpack.c.bf16 %v410, %v409
      %v436 = vpack.c.bf16 %v412, %v411
      %v437 = vpack.c.bf16 %v414, %v413
      %v438 = vpack.c.bf16 %v416, %v415
      %v439 = vpack.c.bf16 %v418, %v417
      %v440 = vpack.c.bf16 %v420, %v419
      %v441 = vpack.c.bf16 %v422, %v421
      %v442 = vpack.c.bf16 %v424, %v423
      %v443 = vpack.c.bf16 %v426, %v425
      %v444 = vpack.c.bf16 %v428, %v427
      %461 = vrot.lane.b32.xlu0 %v429, 4
      %v462 = vpop.permute.xlu0 %461
      %463 = vrot.lane.b32.xlu0 %v430, 4
      %v464 = vpop.permute.xlu0 %463
      %465 = vrot.lane.b32.xlu0 %v431, 4
      %v466 = vpop.permute.xlu0 %465
      %467 = vrot.lane.b32.xlu0 %v432, 4
      %v468 = vpop.permute.xlu0 %467
      %469 = vrot.lane.b32.xlu0 %v433, 4
      %v470 = vpop.permute.xlu0 %469
      %471 = vrot.lane.b32.xlu0 %v434, 4
      %v472 = vpop.permute.xlu0 %471
      %473 = vrot.lane.b32.xlu0 %v435, 4
      %v474 = vpop.permute.xlu0 %473
      %475 = vrot.lane.b32.xlu0 %v436, 4
      %v476 = vpop.permute.xlu0 %475
      %477 = vrot.lane.b32.xlu0 %v437, 4
      %v478 = vpop.permute.xlu0 %477
      %479 = vrot.lane.b32.xlu0 %v438, 4
      %v480 = vpop.permute.xlu0 %479
      %481 = vrot.lane.b32.xlu0 %v439, 4
      %v482 = vpop.permute.xlu0 %481
      %483 = vrot.lane.b32.xlu0 %v440, 4
      %v484 = vpop.permute.xlu0 %483
      %485 = vrot.lane.b32.xlu0 %v441, 4
      %v486 = vpop.permute.xlu0 %485
      %487 = vrot.lane.b32.xlu0 %v442, 4
      %v488 = vpop.permute.xlu0 %487
      %489 = vrot.lane.b32.xlu0 %v443, 4
      %v490 = vpop.permute.xlu0 %489
      %491 = vrot.lane.b32.xlu0 %v444, 4
      %v492 = vpop.permute.xlu0 %491
      %vm509 = vcmask 64544
      %510 = vst.msk [vmem:[#allocation3] sm:$0xff] %vm509, %v462
      %511 = vst.msk [vmem:[#allocation3 + $0x8] sm:$0xff] %vm509, %v464
      %512 = vst.msk [vmem:[#allocation3 + $0x10] sm:$0xff] %vm509, %v466
      %513 = vst.msk [vmem:[#allocation3 + $0x18] sm:$0xff] %vm509, %v468
      %514 = vst.msk [vmem:[#allocation3 + $0x20] sm:$0xff] %vm509, %v470
      %515 = vst.msk [vmem:[#allocation3 + $0x28] sm:$0xff] %vm509, %v472
      %516 = vst.msk [vmem:[#allocation3 + $0x30] sm:$0xff] %vm509, %v474
      %517 = vst.msk [vmem:[#allocation3 + $0x38] sm:$0xff] %vm509, %v476
      %518 = vst.msk [vmem:[#allocation3 + $0x40] sm:$0xff] %vm509, %v478
      %519 = vst.msk [vmem:[#allocation3 + $0x48] sm:$0xff] %vm509, %v480
      %520 = vst.msk [vmem:[#allocation3 + $0x50] sm:$0xff] %vm509, %v482
      %521 = vst.msk [vmem:[#allocation3 + $0x58] sm:$0xff] %vm509, %v484
      %522 = vst.msk [vmem:[#allocation3 + $0x60] sm:$0xff] %vm509, %v486
      %523 = vst.msk [vmem:[#allocation3 + $0x68] sm:$0xff] %vm509, %v488
      %524 = vst.msk [vmem:[#allocation3 + $0x70] sm:$0xff] %vm509, %v490
      %525 = vst.msk [vmem:[#allocation3 + $0x78] sm:$0xff] %vm509, %v492
      %v526 = vld [vmem:[#allocation2 + $0x2] sm:$0xff]
      %v527 = vld [vmem:[#allocation2 + $0xa] sm:$0xff]
      %v528 = vld [vmem:[#allocation2 + $0x1a] sm:$0xff]
      %v529 = vld [vmem:[#allocation2 + $0x22] sm:$0xff]
      %v530 = vld [vmem:[#allocation2 + $0x32] sm:$0xff]
      %v531 = vld [vmem:[#allocation2 + $0x3a] sm:$0xff]
      %v532 = vld [vmem:[#allocation2 + $0x4a] sm:$0xff]
      %v533 = vld [vmem:[#allocation2 + $0x52] sm:$0xff]
      %v534 = vld [vmem:[#allocation2 + $0x62] sm:$0xff]
      %v535 = vld [vmem:[#allocation2 + $0x6a] sm:$0xff]
      %v536 = vld [vmem:[#allocation2 + $0x7a] sm:$0xff]
      %v537 = vld [vmem:[#allocation2 + $0x82] sm:$0xff]
      %v538 = vld [vmem:[#allocation2 + $0x92] sm:$0xff]
      %v539 = vld [vmem:[#allocation2 + $0x9a] sm:$0xff]
      %v540 = vld [vmem:[#allocation2 + $0xaa] sm:$0xff]
      %v541 = vld [vmem:[#allocation2 + $0xb2] sm:$0xff]
      %v542 = vld [vmem:[#allocation2 + $0xc2] sm:$0xff]
      %v543 = vld [vmem:[#allocation2 + $0xca] sm:$0xff]
      %v544 = vld [vmem:[#allocation2 + $0xda] sm:$0xff]
      %v545 = vld [vmem:[#allocation2 + $0xe2] sm:$0xff]
      %v546 = vld [vmem:[#allocation2 + $0xf2] sm:$0xff]
      %v547 = vld [vmem:[#allocation2 + $0xfa] sm:$0xff]
      %v548 = vld [vmem:[#allocation2 + $0x10a] sm:$0xff]
      %v549 = vld [vmem:[#allocation2 + $0x112] sm:$0xff]
      %v550 = vld [vmem:[#allocation2 + $0x122] sm:$0xff]
      %v551 = vld [vmem:[#allocation2 + $0x12a] sm:$0xff]
      %v552 = vld [vmem:[#allocation2 + $0x13a] sm:$0xff]
      %v553 = vld [vmem:[#allocation2 + $0x142] sm:$0xff]
      %v554 = vld [vmem:[#allocation2 + $0x152] sm:$0xff]
      %v555 = vld [vmem:[#allocation2 + $0x15a] sm:$0xff]
      %v556 = vld [vmem:[#allocation2 + $0x16a] sm:$0xff]
      %v557 = vld [vmem:[#allocation2 + $0x172] sm:$0xff]
      %v558 = vpack.c.bf16 %v527, %v526
      %v559 = vpack.c.bf16 %v529, %v528
      %v560 = vpack.c.bf16 %v531, %v530
      %v561 = vpack.c.bf16 %v533, %v532
      %v562 = vpack.c.bf16 %v535, %v534
      %v563 = vpack.c.bf16 %v537, %v536
      %v564 = vpack.c.bf16 %v539, %v538
      %v565 = vpack.c.bf16 %v541, %v540
      %v566 = vpack.c.bf16 %v543, %v542
      %v567 = vpack.c.bf16 %v545, %v544
      %v568 = vpack.c.bf16 %v547, %v546
      %v569 = vpack.c.bf16 %v549, %v548
      %v570 = vpack.c.bf16 %v551, %v550
      %v571 = vpack.c.bf16 %v553, %v552
      %v572 = vpack.c.bf16 %v555, %v554
      %v573 = vpack.c.bf16 %v557, %v556
      %590 = vrot.lane.b32.xlu0 %v558, 8
      %v591 = vpop.permute.xlu0 %590
      %592 = vrot.lane.b32.xlu0 %v559, 8
      %v593 = vpop.permute.xlu0 %592
      %594 = vrot.lane.b32.xlu0 %v560, 8
      %v595 = vpop.permute.xlu0 %594
      %596 = vrot.lane.b32.xlu0 %v561, 8
      %v597 = vpop.permute.xlu0 %596
      %598 = vrot.lane.b32.xlu0 %v562, 8
      %v599 = vpop.permute.xlu0 %598
      %600 = vrot.lane.b32.xlu0 %v563, 8
      %v601 = vpop.permute.xlu0 %600
      %602 = vrot.lane.b32.xlu0 %v564, 8
      %v603 = vpop.permute.xlu0 %602
      %604 = vrot.lane.b32.xlu0 %v565, 8
      %v605 = vpop.permute.xlu0 %604
      %606 = vrot.lane.b32.xlu0 %v566, 8
      %v607 = vpop.permute.xlu0 %606
      %608 = vrot.lane.b32.xlu0 %v567, 8
      %v609 = vpop.permute.xlu0 %608
      %610 = vrot.lane.b32.xlu0 %v568, 8
      %v611 = vpop.permute.xlu0 %610
      %612 = vrot.lane.b32.xlu0 %v569, 8
      %v613 = vpop.permute.xlu0 %612
      %614 = vrot.lane.b32.xlu0 %v570, 8
      %v615 = vpop.permute.xlu0 %614
      %616 = vrot.lane.b32.xlu0 %v571, 8
      %v617 = vpop.permute.xlu0 %616
      %618 = vrot.lane.b32.xlu0 %v572, 8
      %v619 = vpop.permute.xlu0 %618
      %620 = vrot.lane.b32.xlu0 %v573, 8
      %v621 = vpop.permute.xlu0 %620
      %vm638 = vcmask 97344
      %639 = vst.msk [vmem:[#allocation3] sm:$0xff] %vm638, %v591
      %640 = vst.msk [vmem:[#allocation3 + $0x8] sm:$0xff] %vm638, %v593
      %641 = vst.msk [vmem:[#allocation3 + $0x10] sm:$0xff] %vm638, %v595
      %642 = vst.msk [vmem:[#allocation3 + $0x18] sm:$0xff] %vm638, %v597
      %643 = vst.msk [vmem:[#allocation3 + $0x20] sm:$0xff] %vm638, %v599
      %644 = vst.msk [vmem:[#allocation3 + $0x28] sm:$0xff] %vm638, %v601
      %645 = vst.msk [vmem:[#allocation3 + $0x30] sm:$0xff] %vm638, %v603
      %646 = vst.msk [vmem:[#allocation3 + $0x38] sm:$0xff] %vm638, %v605
      %647 = vst.msk [vmem:[#allocation3 + $0x40] sm:$0xff] %vm638, %v607
      %648 = vst.msk [vmem:[#allocation3 + $0x48] sm:$0xff] %vm638, %v609
      %649 = vst.msk [vmem:[#allocation3 + $0x50] sm:$0xff] %vm638, %v611
      %650 = vst.msk [vmem:[#allocation3 + $0x58] sm:$0xff] %vm638, %v613
      %651 = vst.msk [vmem:[#allocation3 + $0x60] sm:$0xff] %vm638, %v615
      %652 = vst.msk [vmem:[#allocation3 + $0x68] sm:$0xff] %vm638, %v617
      %653 = vst.msk [vmem:[#allocation3 + $0x70] sm:$0xff] %vm638, %v619
      %654 = vst.msk [vmem:[#allocation3 + $0x78] sm:$0xff] %vm638, %v621
      %v655 = vld [vmem:[%s235] sm:$0xff]
      %v656 = vld [vmem:[%s235 + $0x8] sm:$0xff]
      %v657 = vld [vmem:[%s235 + $0x18] sm:$0xff]
      %v658 = vld [vmem:[%s235 + $0x20] sm:$0xff]
      %v659 = vld [vmem:[%s235 + $0x30] sm:$0xff]
      %v660 = vld [vmem:[%s235 + $0x38] sm:$0xff]
      %v661 = vld [vmem:[%s235 + $0x48] sm:$0xff]
      %v662 = vld [vmem:[%s235 + $0x50] sm:$0xff]
      %v663 = vld [vmem:[%s235 + $0x60] sm:$0xff]
      %v664 = vld [vmem:[%s235 + $0x68] sm:$0xff]
      %v665 = vld [vmem:[%s235 + $0x78] sm:$0xff]
      %v666 = vld [vmem:[%s235 + $0x80] sm:$0xff]
      %v667 = vld [vmem:[%s235 + $0x90] sm:$0xff]
      %v668 = vld [vmem:[%s235 + $0x98] sm:$0xff]
      %v669 = vld [vmem:[%s235 + $0xa8] sm:$0xff]
      %v670 = vld [vmem:[%s235 + $0xb0] sm:$0xff]
      %v671 = vld [vmem:[%s235 + $0xc0] sm:$0xff]
      %v672 = vld [vmem:[%s235 + $0xc8] sm:$0xff]
      %v673 = vld [vmem:[%s235 + $0xd8] sm:$0xff]
      %v674 = vld [vmem:[%s235 + $0xe0] sm:$0xff]
      %v675 = vld [vmem:[%s235 + $0xf0] sm:$0xff]
      %v676 = vld [vmem:[%s235 + $0xf8] sm:$0xff]
      %v677 = vld [vmem:[%s235 + $0x108] sm:$0xff]
      %v678 = vld [vmem:[%s235 + $0x110] sm:$0xff]
      %v679 = vld [vmem:[%s235 + $0x120] sm:$0xff]
      %v680 = vld [vmem:[%s235 + $0x128] sm:$0xff]
      %v681 = vld [vmem:[%s235 + $0x138] sm:$0xff]
      %v682 = vld [vmem:[%s235 + $0x140] sm:$0xff]
      %v683 = vld [vmem:[%s235 + $0x150] sm:$0xff]
      %v684 = vld [vmem:[%s235 + $0x158] sm:$0xff]
      %v685 = vld [vmem:[%s235 + $0x168] sm:$0xff]
      %v686 = vld [vmem:[%s235 + $0x170] sm:$0xff]
      %v687 = vpack.c.bf16 %v656, %v655
      %v688 = vpack.c.bf16 %v658, %v657
      %v689 = vpack.c.bf16 %v660, %v659
      %v690 = vpack.c.bf16 %v662, %v661
      %v691 = vpack.c.bf16 %v664, %v663
      %v692 = vpack.c.bf16 %v666, %v665
      %v693 = vpack.c.bf16 %v668, %v667
      %v694 = vpack.c.bf16 %v670, %v669
      %v695 = vpack.c.bf16 %v672, %v671
      %v696 = vpack.c.bf16 %v674, %v673
      %v697 = vpack.c.bf16 %v676, %v675
      %v698 = vpack.c.bf16 %v678, %v677
      %v699 = vpack.c.bf16 %v680, %v679
      %v700 = vpack.c.bf16 %v682, %v681
      %v701 = vpack.c.bf16 %v684, %v683
      %v702 = vpack.c.bf16 %v686, %v685
      %719 = vrot.lane.b32.xlu0 %v687, 12
      %v720 = vpop.permute.xlu0 %719
      %721 = vrot.lane.b32.xlu0 %v688, 12
      %v722 = vpop.permute.xlu0 %721
      %723 = vrot.lane.b32.xlu0 %v689, 12
      %v724 = vpop.permute.xlu0 %723
      %725 = vrot.lane.b32.xlu0 %v690, 12
      %v726 = vpop.permute.xlu0 %725
      %727 = vrot.lane.b32.xlu0 %v691, 12
      %v728 = vpop.permute.xlu0 %727
      %729 = vrot.lane.b32.xlu0 %v692, 12
      %v730 = vpop.permute.xlu0 %729
      %731 = vrot.lane.b32.xlu0 %v693, 12
      %v732 = vpop.permute.xlu0 %731
      %733 = vrot.lane.b32.xlu0 %v694, 12
      %v734 = vpop.permute.xlu0 %733
      %735 = vrot.lane.b32.xlu0 %v695, 12
      %v736 = vpop.permute.xlu0 %735
      %737 = vrot.lane.b32.xlu0 %v696, 12
      %v738 = vpop.permute.xlu0 %737
      %739 = vrot.lane.b32.xlu0 %v697, 12
      %v740 = vpop.permute.xlu0 %739
      %741 = vrot.lane.b32.xlu0 %v698, 12
      %v742 = vpop.permute.xlu0 %741
      %743 = vrot.lane.b32.xlu0 %v699, 12
      %v744 = vpop.permute.xlu0 %743
      %745 = vrot.lane.b32.xlu0 %v700, 12
      %v746 = vpop.permute.xlu0 %745
      %747 = vrot.lane.b32.xlu0 %v701, 12
      %v748 = vpop.permute.xlu0 %747
      %749 = vrot.lane.b32.xlu0 %v702, 12
      %v750 = vpop.permute.xlu0 %749
      %vm767 = vcmask 130144
      %768 = vst.msk [vmem:[#allocation3] sm:$0xff] %vm767, %v720
      %769 = vst.msk [vmem:[#allocation3 + $0x8] sm:$0xff] %vm767, %v722
      %770 = vst.msk [vmem:[#allocation3 + $0x10] sm:$0xff] %vm767, %v724
      %771 = vst.msk [vmem:[#allocation3 + $0x18] sm:$0xff] %vm767, %v726
      %772 = vst.msk [vmem:[#allocation3 + $0x20] sm:$0xff] %vm767, %v728
      %773 = vst.msk [vmem:[#allocation3 + $0x28] sm:$0xff] %vm767, %v730
      %774 = vst.msk [vmem:[#allocation3 + $0x30] sm:$0xff] %vm767, %v732
      %775 = vst.msk [vmem:[#allocation3 + $0x38] sm:$0xff] %vm767, %v734
      %776 = vst.msk [vmem:[#allocation3 + $0x40] sm:$0xff] %vm767, %v736
      %777 = vst.msk [vmem:[#allocation3 + $0x48] sm:$0xff] %vm767, %v738
      %778 = vst.msk [vmem:[#allocation3 + $0x50] sm:$0xff] %vm767, %v740
      %779 = vst.msk [vmem:[#allocation3 + $0x58] sm:$0xff] %vm767, %v742
      %780 = vst.msk [vmem:[#allocation3 + $0x60] sm:$0xff] %vm767, %v744
      %781 = vst.msk [vmem:[#allocation3 + $0x68] sm:$0xff] %vm767, %v746
      %782 = vst.msk [vmem:[#allocation3 + $0x70] sm:$0xff] %vm767, %v748
      %783 = vst.msk [vmem:[#allocation3 + $0x78] sm:$0xff] %vm767, %v750
      %v784 = vld [vmem:[%s235 + $0x1] sm:$0xff]
      %v785 = vld [vmem:[%s235 + $0x9] sm:$0xff]
      %v786 = vld [vmem:[%s235 + $0x19] sm:$0xff]
      %v787 = vld [vmem:[%s235 + $0x21] sm:$0xff]
      %v788 = vld [vmem:[%s235 + $0x31] sm:$0xff]
      %v789 = vld [vmem:[%s235 + $0x39] sm:$0xff]
      %v790 = vld [vmem:[%s235 + $0x49] sm:$0xff]
      %v791 = vld [vmem:[%s235 + $0x51] sm:$0xff]
      %v792 = vld [vmem:[%s235 + $0x61] sm:$0xff]
      %v793 = vld [vmem:[%s235 + $0x69] sm:$0xff]
      %v794 = vld [vmem:[%s235 + $0x79] sm:$0xff]
      %v795 = vld [vmem:[%s235 + $0x81] sm:$0xff]
      %v796 = vld [vmem:[%s235 + $0x91] sm:$0xff]
      %v797 = vld [vmem:[%s235 + $0x99] sm:$0xff]
      %v798 = vld [vmem:[%s235 + $0xa9] sm:$0xff]
      %v799 = vld [vmem:[%s235 + $0xb1] sm:$0xff]
      %v800 = vld [vmem:[%s235 + $0xc1] sm:$0xff]
      %v801 = vld [vmem:[%s235 + $0xc9] sm:$0xff]
      %v802 = vld [vmem:[%s235 + $0xd9] sm:$0xff]
      %v803 = vld [vmem:[%s235 + $0xe1] sm:$0xff]
      %v804 = vld [vmem:[%s235 + $0xf1] sm:$0xff]
      %v805 = vld [vmem:[%s235 + $0xf9] sm:$0xff]
      %v806 = vld [vmem:[%s235 + $0x109] sm:$0xff]
      %v807 = vld [vmem:[%s235 + $0x111] sm:$0xff]
      %v808 = vld [vmem:[%s235 + $0x121] sm:$0xff]
      %v809 = vld [vmem:[%s235 + $0x129] sm:$0xff]
      %v810 = vld [vmem:[%s235 + $0x139] sm:$0xff]
      %v811 = vld [vmem:[%s235 + $0x141] sm:$0xff]
      %v812 = vld [vmem:[%s235 + $0x151] sm:$0xff]
      %v813 = vld [vmem:[%s235 + $0x159] sm:$0xff]
      %v814 = vld [vmem:[%s235 + $0x169] sm:$0xff]
      %v815 = vld [vmem:[%s235 + $0x171] sm:$0xff]
      %v816 = vpack.c.bf16 %v785, %v784
      %v817 = vpack.c.bf16 %v787, %v786
      %v818 = vpack.c.bf16 %v789, %v788
      %v819 = vpack.c.bf16 %v791, %v790
      %v820 = vpack.c.bf16 %v793, %v792
      %v821 = vpack.c.bf16 %v795, %v794
      %v822 = vpack.c.bf16 %v797, %v796
      %v823 = vpack.c.bf16 %v799, %v798
      %v824 = vpack.c.bf16 %v801, %v800
      %v825 = vpack.c.bf16 %v803, %v802
      %v826 = vpack.c.bf16 %v805, %v804
      %v827 = vpack.c.bf16 %v807, %v806
      %v828 = vpack.c.bf16 %v809, %v808
      %v829 = vpack.c.bf16 %v811, %v810
      %v830 = vpack.c.bf16 %v813, %v812
      %v831 = vpack.c.bf16 %v815, %v814
      %848 = vrot.lane.b32.xlu0 %v816, 16
      %v849 = vpop.permute.xlu0 %848
      %850 = vrot.lane.b32.xlu0 %v817, 16
      %v851 = vpop.permute.xlu0 %850
      %852 = vrot.lane.b32.xlu0 %v818, 16
      %v853 = vpop.permute.xlu0 %852
      %854 = vrot.lane.b32.xlu0 %v819, 16
      %v855 = vpop.permute.xlu0 %854
      %856 = vrot.lane.b32.xlu0 %v820, 16
      %v857 = vpop.permute.xlu0 %856
      %858 = vrot.lane.b32.xlu0 %v821, 16
      %v859 = vpop.permute.xlu0 %858
      %860 = vrot.lane.b32.xlu0 %v822, 16
      %v861 = vpop.permute.xlu0 %860
      %862 = vrot.lane.b32.xlu0 %v823, 16
      %v863 = vpop.permute.xlu0 %862
      %864 = vrot.lane.b32.xlu0 %v824, 16
      %v865 = vpop.permute.xlu0 %864
      %866 = vrot.lane.b32.xlu0 %v825, 16
      %v867 = vpop.permute.xlu0 %866
      %868 = vrot.lane.b32.xlu0 %v826, 16
      %v869 = vpop.permute.xlu0 %868
      %870 = vrot.lane.b32.xlu0 %v827, 16
      %v871 = vpop.permute.xlu0 %870
      %872 = vrot.lane.b32.xlu0 %v828, 16
      %v873 = vpop.permute.xlu0 %872
      %874 = vrot.lane.b32.xlu0 %v829, 16
      %v875 = vpop.permute.xlu0 %874
      %876 = vrot.lane.b32.xlu0 %v830, 16
      %v877 = vpop.permute.xlu0 %876
      %878 = vrot.lane.b32.xlu0 %v831, 16
      %v879 = vpop.permute.xlu0 %878
      %vm896 = vcmask 162944
      %897 = vst.msk [vmem:[#allocation3] sm:$0xff] %vm896, %v849
      %898 = vst.msk [vmem:[#allocation3 + $0x8] sm:$0xff] %vm896, %v851
      %899 = vst.msk [vmem:[#allocation3 + $0x10] sm:$0xff] %vm896, %v853
      %900 = vst.msk [vmem:[#allocation3 + $0x18] sm:$0xff] %vm896, %v855
      %901 = vst.msk [vmem:[#allocation3 + $0x20] sm:$0xff] %vm896, %v857
      %902 = vst.msk [vmem:[#allocation3 + $0x28] sm:$0xff] %vm896, %v859
      %903 = vst.msk [vmem:[#allocation3 + $0x30] sm:$0xff] %vm896, %v861
      %904 = vst.msk [vmem:[#allocation3 + $0x38] sm:$0xff] %vm896, %v863
      %905 = vst.msk [vmem:[#allocation3 + $0x40] sm:$0xff] %vm896, %v865
      %906 = vst.msk [vmem:[#allocation3 + $0x48] sm:$0xff] %vm896, %v867
      %907 = vst.msk [vmem:[#allocation3 + $0x50] sm:$0xff] %vm896, %v869
      %908 = vst.msk [vmem:[#allocation3 + $0x58] sm:$0xff] %vm896, %v871
      %909 = vst.msk [vmem:[#allocation3 + $0x60] sm:$0xff] %vm896, %v873
      %910 = vst.msk [vmem:[#allocation3 + $0x68] sm:$0xff] %vm896, %v875
      %911 = vst.msk [vmem:[#allocation3 + $0x70] sm:$0xff] %vm896, %v877
      %912 = vst.msk [vmem:[#allocation3 + $0x78] sm:$0xff] %vm896, %v879
      %v913 = vld [vmem:[%s235 + $0x2] sm:$0xff]
      %v914 = vld [vmem:[%s235 + $0xa] sm:$0xff]
      %v915 = vld [vmem:[%s235 + $0x1a] sm:$0xff]
      %v916 = vld [vmem:[%s235 + $0x22] sm:$0xff]
      %v917 = vld [vmem:[%s235 + $0x32] sm:$0xff]
      %v918 = vld [vmem:[%s235 + $0x3a] sm:$0xff]
      %v919 = vld [vmem:[%s235 + $0x4a] sm:$0xff]
      %v920 = vld [vmem:[%s235 + $0x52] sm:$0xff]
      %v921 = vld [vmem:[%s235 + $0x62] sm:$0xff]
      %v922 = vld [vmem:[%s235 + $0x6a] sm:$0xff]
      %v923 = vld [vmem:[%s235 + $0x7a] sm:$0xff]
      %v924 = vld [vmem:[%s235 + $0x82] sm:$0xff]
      %v925 = vld [vmem:[%s235 + $0x92] sm:$0xff]
      %v926 = vld [vmem:[%s235 + $0x9a] sm:$0xff]
      %v927 = vld [vmem:[%s235 + $0xaa] sm:$0xff]
      %v928 = vld [vmem:[%s235 + $0xb2] sm:$0xff]
      %v929 = vld [vmem:[%s235 + $0xc2] sm:$0xff]
      %v930 = vld [vmem:[%s235 + $0xca] sm:$0xff]
      %v931 = vld [vmem:[%s235 + $0xda] sm:$0xff]
      %v932 = vld [vmem:[%s235 + $0xe2] sm:$0xff]
      %v933 = vld [vmem:[%s235 + $0xf2] sm:$0xff]
      %v934 = vld [vmem:[%s235 + $0xfa] sm:$0xff]
      %v935 = vld [vmem:[%s235 + $0x10a] sm:$0xff]
      %v936 = vld [vmem:[%s235 + $0x112] sm:$0xff]
      %v937 = vld [vmem:[%s235 + $0x122] sm:$0xff]
      %v938 = vld [vmem:[%s235 + $0x12a] sm:$0xff]
      %v939 = vld [vmem:[%s235 + $0x13a] sm:$0xff]
      %v940 = vld [vmem:[%s235 + $0x142] sm:$0xff]
      %v941 = vld [vmem:[%s235 + $0x152] sm:$0xff]
      %v942 = vld [vmem:[%s235 + $0x15a] sm:$0xff]
      %v943 = vld [vmem:[%s235 + $0x16a] sm:$0xff]
      %v944 = vld [vmem:[%s235 + $0x172] sm:$0xff]
      %v945 = vpack.c.bf16 %v914, %v913
      %v946 = vpack.c.bf16 %v916, %v915
      %v947 = vpack.c.bf16 %v918, %v917
      %v948 = vpack.c.bf16 %v920, %v919
      %v949 = vpack.c.bf16 %v922, %v921
      %v950 = vpack.c.bf16 %v924, %v923
      %v951 = vpack.c.bf16 %v926, %v925
      %v952 = vpack.c.bf16 %v928, %v927
      %v953 = vpack.c.bf16 %v930, %v929
      %v954 = vpack.c.bf16 %v932, %v931
      %v955 = vpack.c.bf16 %v934, %v933
      %v956 = vpack.c.bf16 %v936, %v935
      %v957 = vpack.c.bf16 %v938, %v937
      %v958 = vpack.c.bf16 %v940, %v939
      %v959 = vpack.c.bf16 %v942, %v941
      %v960 = vpack.c.bf16 %v944, %v943
      %977 = vrot.lane.b32.xlu0 %v945, 20
      %v978 = vpop.permute.xlu0 %977
      %979 = vrot.lane.b32.xlu0 %v946, 20
      %v980 = vpop.permute.xlu0 %979
      %981 = vrot.lane.b32.xlu0 %v947, 20
      %v982 = vpop.permute.xlu0 %981
      %983 = vrot.lane.b32.xlu0 %v948, 20
      %v984 = vpop.permute.xlu0 %983
      %985 = vrot.lane.b32.xlu0 %v949, 20
      %v986 = vpop.permute.xlu0 %985
      %987 = vrot.lane.b32.xlu0 %v950, 20
      %v988 = vpop.permute.xlu0 %987
      %989 = vrot.lane.b32.xlu0 %v951, 20
      %v990 = vpop.permute.xlu0 %989
      %991 = vrot.lane.b32.xlu0 %v952, 20
      %v992 = vpop.permute.xlu0 %991
      %993 = vrot.lane.b32.xlu0 %v953, 20
      %v994 = vpop.permute.xlu0 %993
      %995 = vrot.lane.b32.xlu0 %v954, 20
      %v996 = vpop.permute.xlu0 %995
      %997 = vrot.lane.b32.xlu0 %v955, 20
      %v998 = vpop.permute.xlu0 %997
      %999 = vrot.lane.b32.xlu0 %v956, 20
      %v1000 = vpop.permute.xlu0 %999
      %1001 = vrot.lane.b32.xlu0 %v957, 20
      %v1002 = vpop.permute.xlu0 %1001
      %1003 = vrot.lane.b32.xlu0 %v958, 20
      %v1004 = vpop.permute.xlu0 %1003
      %1005 = vrot.lane.b32.xlu0 %v959, 20
      %v1006 = vpop.permute.xlu0 %1005
      %1007 = vrot.lane.b32.xlu0 %v960, 20
      %v1008 = vpop.permute.xlu0 %1007
      %vm1025 = vcmask 195744
      %1026 = vst.msk [vmem:[#allocation3] sm:$0xff] %vm1025, %v978
      %1027 = vst.msk [vmem:[#allocation3 + $0x8] sm:$0xff] %vm1025, %v980
      %1028 = vst.msk [vmem:[#allocation3 + $0x10] sm:$0xff] %vm1025, %v982
      %1029 = vst.msk [vmem:[#allocation3 + $0x18] sm:$0xff] %vm1025, %v984
      %1030 = vst.msk [vmem:[#allocation3 + $0x20] sm:$0xff] %vm1025, %v986
      %1031 = vst.msk [vmem:[#allocation3 + $0x28] sm:$0xff] %vm1025, %v988
      %1032 = vst.msk [vmem:[#allocation3 + $0x30] sm:$0xff] %vm1025, %v990
      %1033 = vst.msk [vmem:[#allocation3 + $0x38] sm:$0xff] %vm1025, %v992
      %1034 = vst.msk [vmem:[#allocation3 + $0x40] sm:$0xff] %vm1025, %v994
      %1035 = vst.msk [vmem:[#allocation3 + $0x48] sm:$0xff] %vm1025, %v996
      %1036 = vst.msk [vmem:[#allocation3 + $0x50] sm:$0xff] %vm1025, %v998
      %1037 = vst.msk [vmem:[#allocation3 + $0x58] sm:$0xff] %vm1025, %v1000
      %1038 = vst.msk [vmem:[#allocation3 + $0x60] sm:$0xff] %vm1025, %v1002
      %1039 = vst.msk [vmem:[#allocation3 + $0x68] sm:$0xff] %vm1025, %v1004
      %1040 = vst.msk [vmem:[#allocation3 + $0x70] sm:$0xff] %vm1025, %v1006
      %1041 = vst.msk [vmem:[#allocation3 + $0x78] sm:$0xff] %vm1025, %v1008
      %s1042 = scalar_lea.vmem [#allocation2], 48
      %v1043 = vld [vmem:[%s1042] sm:$0xff]
      %v1044 = vld [vmem:[%s1042 + $0x8] sm:$0xff]
      %v1045 = vld [vmem:[%s1042 + $0x18] sm:$0xff]
      %v1046 = vld [vmem:[%s1042 + $0x20] sm:$0xff]
      %v1047 = vld [vmem:[%s1042 + $0x30] sm:$0xff]
      %v1048 = vld [vmem:[%s1042 + $0x38] sm:$0xff]
      %v1049 = vld [vmem:[%s1042 + $0x48] sm:$0xff]
      %v1050 = vld [vmem:[%s1042 + $0x50] sm:$0xff]
      %v1051 = vld [vmem:[%s1042 + $0x60] sm:$0xff]
      %v1052 = vld [vmem:[%s1042 + $0x68] sm:$0xff]
      %v1053 = vld [vmem:[%s1042 + $0x78] sm:$0xff]
      %v1054 = vld [vmem:[%s1042 + $0x80] sm:$0xff]
      %v1055 = vld [vmem:[%s1042 + $0x90] sm:$0xff]
      %v1056 = vld [vmem:[%s1042 + $0x98] sm:$0xff]
      %v1057 = vld [vmem:[%s1042 + $0xa8] sm:$0xff]
      %v1058 = vld [vmem:[%s1042 + $0xb0] sm:$0xff]
      %v1059 = vld [vmem:[%s1042 + $0xc0] sm:$0xff]
      %v1060 = vld [vmem:[%s1042 + $0xc8] sm:$0xff]
      %v1061 = vld [vmem:[%s1042 + $0xd8] sm:$0xff]
      %v1062 = vld [vmem:[%s1042 + $0xe0] sm:$0xff]
      %v1063 = vld [vmem:[%s1042 + $0xf0] sm:$0xff]
      %v1064 = vld [vmem:[%s1042 + $0xf8] sm:$0xff]
      %v1065 = vld [vmem:[%s1042 + $0x108] sm:$0xff]
      %v1066 = vld [vmem:[%s1042 + $0x110] sm:$0xff]
      %v1067 = vld [vmem:[%s1042 + $0x120] sm:$0xff]
      %v1068 = vld [vmem:[%s1042 + $0x128] sm:$0xff]
      %v1069 = vld [vmem:[%s1042 + $0x138] sm:$0xff]
      %v1070 = vld [vmem:[%s1042 + $0x140] sm:$0xff]
      %v1071 = vld [vmem:[%s1042 + $0x150] sm:$0xff]
      %v1072 = vld [vmem:[%s1042 + $0x158] sm:$0xff]
      %v1073 = vld [vmem:[%s1042 + $0x168] sm:$0xff]
      %v1074 = vld [vmem:[%s1042 + $0x170] sm:$0xff]
      %v1075 = vpack.c.bf16 %v1044, %v1043
      %v1076 = vpack.c.bf16 %v1046, %v1045
      %v1077 = vpack.c.bf16 %v1048, %v1047
      %v1078 = vpack.c.bf16 %v1050, %v1049
      %v1079 = vpack.c.bf16 %v1052, %v1051
      %v1080 = vpack.c.bf16 %v1054, %v1053
      %v1081 = vpack.c.bf16 %v1056, %v1055
      %v1082 = vpack.c.bf16 %v1058, %v1057
      %v1083 = vpack.c.bf16 %v1060, %v1059
      %v1084 = vpack.c.bf16 %v1062, %v1061
      %v1085 = vpack.c.bf16 %v1064, %v1063
      %v1086 = vpack.c.bf16 %v1066, %v1065
      %v1087 = vpack.c.bf16 %v1068, %v1067
      %v1088 = vpack.c.bf16 %v1070, %v1069
      %v1089 = vpack.c.bf16 %v1072, %v1071
      %v1090 = vpack.c.bf16 %v1074, %v1073
      %1107 = vrot.lane.b32.xlu0 %v1075, 24
      %v1108 = vpop.permute.xlu0 %1107
      %1109 = vrot.lane.b32.xlu0 %v1076, 24
      %v1110 = vpop.permute.xlu0 %1109
      %1111 = vrot.lane.b32.xlu0 %v1077, 24
      %v1112 = vpop.permute.xlu0 %1111
      %1113 = vrot.lane.b32.xlu0 %v1078, 24
      %v1114 = vpop.permute.xlu0 %1113
      %1115 = vrot.lane.b32.xlu0 %v1079, 24
      %v1116 = vpop.permute.xlu0 %1115
      %1117 = vrot.lane.b32.xlu0 %v1080, 24
      %v1118 = vpop.permute.xlu0 %1117
      %1119 = vrot.lane.b32.xlu0 %v1081, 24
      %v1120 = vpop.permute.xlu0 %1119
      %1121 = vrot.lane.b32.xlu0 %v1082, 24
      %v1122 = vpop.permute.xlu0 %1121
      %1123 = vrot.lane.b32.xlu0 %v1083, 24
      %v1124 = vpop.permute.xlu0 %1123
      %1125 = vrot.lane.b32.xlu0 %v1084, 24
      %v1126 = vpop.permute.xlu0 %1125
      %1127 = vrot.lane.b32.xlu0 %v1085, 24
      %v1128 = vpop.permute.xlu0 %1127
      %1129 = vrot.lane.b32.xlu0 %v1086, 24
      %v1130 = vpop.permute.xlu0 %1129
      %1131 = vrot.lane.b32.xlu0 %v1087, 24
      %v1132 = vpop.permute.xlu0 %1131
      %1133 = vrot.lane.b32.xlu0 %v1088, 24
      %v1134 = vpop.permute.xlu0 %1133
      %1135 = vrot.lane.b32.xlu0 %v1089, 24
      %v1136 = vpop.permute.xlu0 %1135
      %1137 = vrot.lane.b32.xlu0 %v1090, 24
      %v1138 = vpop.permute.xlu0 %1137
      %vm1155 = vcmask 228544
      %1156 = vst.msk [vmem:[#allocation3] sm:$0xff] %vm1155, %v1108
      %1157 = vst.msk [vmem:[#allocation3 + $0x8] sm:$0xff] %vm1155, %v1110
      %1158 = vst.msk [vmem:[#allocation3 + $0x10] sm:$0xff] %vm1155, %v1112
      %1159 = vst.msk [vmem:[#allocation3 + $0x18] sm:$0xff] %vm1155, %v1114
      %1160 = vst.msk [vmem:[#allocation3 + $0x20] sm:$0xff] %vm1155, %v1116
      %1161 = vst.msk [vmem:[#allocation3 + $0x28] sm:$0xff] %vm1155, %v1118
      %1162 = vst.msk [vmem:[#allocation3 + $0x30] sm:$0xff] %vm1155, %v1120
      %1163 = vst.msk [vmem:[#allocation3 + $0x38] sm:$0xff] %vm1155, %v1122
      %1164 = vst.msk [vmem:[#allocation3 + $0x40] sm:$0xff] %vm1155, %v1124
      %1165 = vst.msk [vmem:[#allocation3 + $0x48] sm:$0xff] %vm1155, %v1126
      %1166 = vst.msk [vmem:[#allocation3 + $0x50] sm:$0xff] %vm1155, %v1128
      %1167 = vst.msk [vmem:[#allocation3 + $0x58] sm:$0xff] %vm1155, %v1130
      %1168 = vst.msk [vmem:[#allocation3 + $0x60] sm:$0xff] %vm1155, %v1132
      %1169 = vst.msk [vmem:[#allocation3 + $0x68] sm:$0xff] %vm1155, %v1134
      %1170 = vst.msk [vmem:[#allocation3 + $0x70] sm:$0xff] %vm1155, %v1136
      %1171 = vst.msk [vmem:[#allocation3 + $0x78] sm:$0xff] %vm1155, %v1138
      %v1172 = vld [vmem:[%s1042 + $0x1] sm:$0xff]
      %v1173 = vld [vmem:[%s1042 + $0x9] sm:$0xff]
      %v1174 = vld [vmem:[%s1042 + $0x19] sm:$0xff]
      %v1175 = vld [vmem:[%s1042 + $0x21] sm:$0xff]
      %v1176 = vld [vmem:[%s1042 + $0x31] sm:$0xff]
      %v1177 = vld [vmem:[%s1042 + $0x39] sm:$0xff]
      %v1178 = vld [vmem:[%s1042 + $0x49] sm:$0xff]
      %v1179 = vld [vmem:[%s1042 + $0x51] sm:$0xff]
      %v1180 = vld [vmem:[%s1042 + $0x61] sm:$0xff]
      %v1181 = vld [vmem:[%s1042 + $0x69] sm:$0xff]
      %v1182 = vld [vmem:[%s1042 + $0x79] sm:$0xff]
      %v1183 = vld [vmem:[%s1042 + $0x81] sm:$0xff]
      %v1184 = vld [vmem:[%s1042 + $0x91] sm:$0xff]
      %v1185 = vld [vmem:[%s1042 + $0x99] sm:$0xff]
      %v1186 = vld [vmem:[%s1042 + $0xa9] sm:$0xff]
      %v1187 = vld [vmem:[%s1042 + $0xb1] sm:$0xff]
      %v1188 = vld [vmem:[%s1042 + $0xc1] sm:$0xff]
      %v1189 = vld [vmem:[%s1042 + $0xc9] sm:$0xff]
      %v1190 = vld [vmem:[%s1042 + $0xd9] sm:$0xff]
      %v1191 = vld [vmem:[%s1042 + $0xe1] sm:$0xff]
      %v1192 = vld [vmem:[%s1042 + $0xf1] sm:$0xff]
      %v1193 = vld [vmem:[%s1042 + $0xf9] sm:$0xff]
      %v1194 = vld [vmem:[%s1042 + $0x109] sm:$0xff]
      %v1195 = vld [vmem:[%s1042 + $0x111] sm:$0xff]
      %v1196 = vld [vmem:[%s1042 + $0x121] sm:$0xff]
      %v1197 = vld [vmem:[%s1042 + $0x129] sm:$0xff]
      %v1198 = vld [vmem:[%s1042 + $0x139] sm:$0xff]
      %v1199 = vld [vmem:[%s1042 + $0x141] sm:$0xff]
      %v1200 = vld [vmem:[%s1042 + $0x151] sm:$0xff]
      %v1201 = vld [vmem:[%s1042 + $0x159] sm:$0xff]
      %v1202 = vld [vmem:[%s1042 + $0x169] sm:$0xff]
      %v1203 = vld [vmem:[%s1042 + $0x171] sm:$0xff]
      %v1204 = vpack.c.bf16 %v1173, %v1172
      %v1205 = vpack.c.bf16 %v1175, %v1174
      %v1206 = vpack.c.bf16 %v1177, %v1176
      %v1207 = vpack.c.bf16 %v1179, %v1178
      %v1208 = vpack.c.bf16 %v1181, %v1180
      %v1209 = vpack.c.bf16 %v1183, %v1182
      %v1210 = vpack.c.bf16 %v1185, %v1184
      %v1211 = vpack.c.bf16 %v1187, %v1186
      %v1212 = vpack.c.bf16 %v1189, %v1188
      %v1213 = vpack.c.bf16 %v1191, %v1190
      %v1214 = vpack.c.bf16 %v1193, %v1192
      %v1215 = vpack.c.bf16 %v1195, %v1194
      %v1216 = vpack.c.bf16 %v1197, %v1196
      %v1217 = vpack.c.bf16 %v1199, %v1198
      %v1218 = vpack.c.bf16 %v1201, %v1200
      %v1219 = vpack.c.bf16 %v1203, %v1202
      %1236 = vrot.lane.b32.xlu0 %v1204, 28
      %v1237 = vpop.permute.xlu0 %1236
      %1238 = vrot.lane.b32.xlu0 %v1205, 28
      %v1239 = vpop.permute.xlu0 %1238
      %1240 = vrot.lane.b32.xlu0 %v1206, 28
      %v1241 = vpop.permute.xlu0 %1240
      %1242 = vrot.lane.b32.xlu0 %v1207, 28
      %v1243 = vpop.permute.xlu0 %1242
      %1244 = vrot.lane.b32.xlu0 %v1208, 28
      %v1245 = vpop.permute.xlu0 %1244
      %1246 = vrot.lane.b32.xlu0 %v1209, 28
      %v1247 = vpop.permute.xlu0 %1246
      %1248 = vrot.lane.b32.xlu0 %v1210, 28
      %v1249 = vpop.permute.xlu0 %1248
      %1250 = vrot.lane.b32.xlu0 %v1211, 28
      %v1251 = vpop.permute.xlu0 %1250
      %1252 = vrot.lane.b32.xlu0 %v1212, 28
      %v1253 = vpop.permute.xlu0 %1252
      %1254 = vrot.lane.b32.xlu0 %v1213, 28
      %v1255 = vpop.permute.xlu0 %1254
      %1256 = vrot.lane.b32.xlu0 %v1214, 28
      %v1257 = vpop.permute.xlu0 %1256
      %1258 = vrot.lane.b32.xlu0 %v1215, 28
      %v1259 = vpop.permute.xlu0 %1258
      %1260 = vrot.lane.b32.xlu0 %v1216, 28
      %v1261 = vpop.permute.xlu0 %1260
      %1262 = vrot.lane.b32.xlu0 %v1217, 28
      %v1263 = vpop.permute.xlu0 %1262
      %1264 = vrot.lane.b32.xlu0 %v1218, 28
      %v1265 = vpop.permute.xlu0 %1264
      %1266 = vrot.lane.b32.xlu0 %v1219, 28
      %v1267 = vpop.permute.xlu0 %1266
      %vm1284 = vcmask 261344
      %1285 = vst.msk [vmem:[#allocation3] sm:$0xff] %vm1284, %v1237
      %1286 = vst.msk [vmem:[#allocation3 + $0x8] sm:$0xff] %vm1284, %v1239
      %1287 = vst.msk [vmem:[#allocation3 + $0x10] sm:$0xff] %vm1284, %v1241
      %1288 = vst.msk [vmem:[#allocation3 + $0x18] sm:$0xff] %vm1284, %v1243
      %1289 = vst.msk [vmem:[#allocation3 + $0x20] sm:$0xff] %vm1284, %v1245
      %1290 = vst.msk [vmem:[#allocation3 + $0x28] sm:$0xff] %vm1284, %v1247
      %1291 = vst.msk [vmem:[#allocation3 + $0x30] sm:$0xff] %vm1284, %v1249
      %1292 = vst.msk [vmem:[#allocation3 + $0x38] sm:$0xff] %vm1284, %v1251
      %1293 = vst.msk [vmem:[#allocation3 + $0x40] sm:$0xff] %vm1284, %v1253
      %1294 = vst.msk [vmem:[#allocation3 + $0x48] sm:$0xff] %vm1284, %v1255
      %1295 = vst.msk [vmem:[#allocation3 + $0x50] sm:$0xff] %vm1284, %v1257
      %1296 = vst.msk [vmem:[#allocation3 + $0x58] sm:$0xff] %vm1284, %v1259
      %1297 = vst.msk [vmem:[#allocation3 + $0x60] sm:$0xff] %vm1284, %v1261
      %1298 = vst.msk [vmem:[#allocation3 + $0x68] sm:$0xff] %vm1284, %v1263
      %1299 = vst.msk [vmem:[#allocation3 + $0x70] sm:$0xff] %vm1284, %v1265
      %1300 = vst.msk [vmem:[#allocation3 + $0x78] sm:$0xff] %vm1284, %v1267
      %v1301 = vld [vmem:[%s1042 + $0x2] sm:$0xff]
      %v1302 = vld [vmem:[%s1042 + $0xa] sm:$0xff]
      %v1303 = vld [vmem:[%s1042 + $0x1a] sm:$0xff]
      %v1304 = vld [vmem:[%s1042 + $0x22] sm:$0xff]
      %v1305 = vld [vmem:[%s1042 + $0x32] sm:$0xff]
      %v1306 = vld [vmem:[%s1042 + $0x3a] sm:$0xff]
      %v1307 = vld [vmem:[%s1042 + $0x4a] sm:$0xff]
      %v1308 = vld [vmem:[%s1042 + $0x52] sm:$0xff]
      %v1309 = vld [vmem:[%s1042 + $0x62] sm:$0xff]
      %v1310 = vld [vmem:[%s1042 + $0x6a] sm:$0xff]
      %v1311 = vld [vmem:[%s1042 + $0x7a] sm:$0xff]
      %v1312 = vld [vmem:[%s1042 + $0x82] sm:$0xff]
      %v1313 = vld [vmem:[%s1042 + $0x92] sm:$0xff]
      %v1314 = vld [vmem:[%s1042 + $0x9a] sm:$0xff]
      %v1315 = vld [vmem:[%s1042 + $0xaa] sm:$0xff]
      %v1316 = vld [vmem:[%s1042 + $0xb2] sm:$0xff]
      %v1317 = vld [vmem:[%s1042 + $0xc2] sm:$0xff]
      %v1318 = vld [vmem:[%s1042 + $0xca] sm:$0xff]
      %v1319 = vld [vmem:[%s1042 + $0xda] sm:$0xff]
      %v1320 = vld [vmem:[%s1042 + $0xe2] sm:$0xff]
      %v1321 = vld [vmem:[%s1042 + $0xf2] sm:$0xff]
      %v1322 = vld [vmem:[%s1042 + $0xfa] sm:$0xff]
      %v1323 = vld [vmem:[%s1042 + $0x10a] sm:$0xff]
      %v1324 = vld [vmem:[%s1042 + $0x112] sm:$0xff]
      %v1325 = vld [vmem:[%s1042 + $0x122] sm:$0xff]
      %v1326 = vld [vmem:[%s1042 + $0x12a] sm:$0xff]
      %v1327 = vld [vmem:[%s1042 + $0x13a] sm:$0xff]
      %v1328 = vld [vmem:[%s1042 + $0x142] sm:$0xff]
      %v1329 = vld [vmem:[%s1042 + $0x152] sm:$0xff]
      %v1330 = vld [vmem:[%s1042 + $0x15a] sm:$0xff]
      %v1331 = vld [vmem:[%s1042 + $0x16a] sm:$0xff]
      %v1332 = vld [vmem:[%s1042 + $0x172] sm:$0xff]
      %v1333 = vpack.c.bf16 %v1302, %v1301
      %v1334 = vpack.c.bf16 %v1304, %v1303
      %v1335 = vpack.c.bf16 %v1306, %v1305
      %v1336 = vpack.c.bf16 %v1308, %v1307
      %v1337 = vpack.c.bf16 %v1310, %v1309
      %v1338 = vpack.c.bf16 %v1312, %v1311
      %v1339 = vpack.c.bf16 %v1314, %v1313
      %v1340 = vpack.c.bf16 %v1316, %v1315
      %v1341 = vpack.c.bf16 %v1318, %v1317
      %v1342 = vpack.c.bf16 %v1320, %v1319
      %v1343 = vpack.c.bf16 %v1322, %v1321
      %v1344 = vpack.c.bf16 %v1324, %v1323
      %v1345 = vpack.c.bf16 %v1326, %v1325
      %v1346 = vpack.c.bf16 %v1328, %v1327
      %v1347 = vpack.c.bf16 %v1330, %v1329
      %v1348 = vpack.c.bf16 %v1332, %v1331
      %1365 = vrot.lane.b32.xlu0 %v1333, 32
      %v1366 = vpop.permute.xlu0 %1365
      %1367 = vrot.lane.b32.xlu0 %v1334, 32
      %v1368 = vpop.permute.xlu0 %1367
      %1369 = vrot.lane.b32.xlu0 %v1335, 32
      %v1370 = vpop.permute.xlu0 %1369
      %1371 = vrot.lane.b32.xlu0 %v1336, 32
      %v1372 = vpop.permute.xlu0 %1371
      %1373 = vrot.lane.b32.xlu0 %v1337, 32
      %v1374 = vpop.permute.xlu0 %1373
      %1375 = vrot.lane.b32.xlu0 %v1338, 32
      %v1376 = vpop.permute.xlu0 %1375
      %1377 = vrot.lane.b32.xlu0 %v1339, 32
      %v1378 = vpop.permute.xlu0 %1377
      %1379 = vrot.lane.b32.xlu0 %v1340, 32
      %v1380 = vpop.permute.xlu0 %1379
      %1381 = vrot.lane.b32.xlu0 %v1341, 32
      %v1382 = vpop.permute.xlu0 %1381
      %1383 = vrot.lane.b32.xlu0 %v1342, 32
      %v1384 = vpop.permute.xlu0 %1383
      %1385 = vrot.lane.b32.xlu0 %v1343, 32
      %v1386 = vpop.permute.xlu0 %1385
      %1387 = vrot.lane.b32.xlu0 %v1344, 32
      %v1388 = vpop.permute.xlu0 %1387
      %1389 = vrot.lane.b32.xlu0 %v1345, 32
      %v1390 = vpop.permute.xlu0 %1389
      %1391 = vrot.lane.b32.xlu0 %v1346, 32
      %v1392 = vpop.permute.xlu0 %1391
      %1393 = vrot.lane.b32.xlu0 %v1347, 32
      %v1394 = vpop.permute.xlu0 %1393
      %1395 = vrot.lane.b32.xlu0 %v1348, 32
      %v1396 = vpop.permute.xlu0 %1395
      %vm1413 = vcmask 294144
      %1414 = vst.msk [vmem:[#allocation3] sm:$0xff] %vm1413, %v1366
      %1415 = vst.msk [vmem:[#allocation3 + $0x8] sm:$0xff] %vm1413, %v1368
      %1416 = vst.msk [vmem:[#allocation3 + $0x10] sm:$0xff] %vm1413, %v1370
      %1417 = vst.msk [vmem:[#allocation3 + $0x18] sm:$0xff] %vm1413, %v1372
      %1418 = vst.msk [vmem:[#allocation3 + $0x20] sm:$0xff] %vm1413, %v1374
      %1419 = vst.msk [vmem:[#allocation3 + $0x28] sm:$0xff] %vm1413, %v1376
      %1420 = vst.msk [vmem:[#allocation3 + $0x30] sm:$0xff] %vm1413, %v1378
      %1421 = vst.msk [vmem:[#allocation3 + $0x38] sm:$0xff] %vm1413, %v1380
      %1422 = vst.msk [vmem:[#allocation3 + $0x40] sm:$0xff] %vm1413, %v1382
      %1423 = vst.msk [vmem:[#allocation3 + $0x48] sm:$0xff] %vm1413, %v1384
      %1424 = vst.msk [vmem:[#allocation3 + $0x50] sm:$0xff] %vm1413, %v1386
      %1425 = vst.msk [vmem:[#allocation3 + $0x58] sm:$0xff] %vm1413, %v1388
      %1426 = vst.msk [vmem:[#allocation3 + $0x60] sm:$0xff] %vm1413, %v1390
      %1427 = vst.msk [vmem:[#allocation3 + $0x68] sm:$0xff] %vm1413, %v1392
      %1428 = vst.msk [vmem:[#allocation3 + $0x70] sm:$0xff] %vm1413, %v1394
      %1429 = vst.msk [vmem:[#allocation3 + $0x78] sm:$0xff] %vm1413, %v1396
      %v1430 = vld [vmem:[#allocation3] sm:$0xff]
      %v1431 = vld [vmem:[#allocation3 + $0x8] sm:$0xff]
      %v1432 = vld [vmem:[#allocation3 + $0x10] sm:$0xff]
      %v1433 = vld [vmem:[#allocation3 + $0x18] sm:$0xff]
      %v1434 = vld [vmem:[#allocation3 + $0x20] sm:$0xff]
      %v1435 = vld [vmem:[#allocation3 + $0x28] sm:$0xff]
      %v1436 = vld [vmem:[#allocation3 + $0x30] sm:$0xff]
      %v1437 = vld [vmem:[#allocation3 + $0x38] sm:$0xff]
      %v1438 = vld [vmem:[#allocation3 + $0x40] sm:$0xff]
      %v1439 = vld [vmem:[#allocation3 + $0x48] sm:$0xff]
      %v1440 = vld [vmem:[#allocation3 + $0x50] sm:$0xff]
      %v1441 = vld [vmem:[#allocation3 + $0x58] sm:$0xff]
      %v1442 = vld [vmem:[#allocation3 + $0x60] sm:$0xff]
      %v1443 = vld [vmem:[#allocation3 + $0x68] sm:$0xff]
      %v1444 = vld [vmem:[#allocation3 + $0x70] sm:$0xff]
      %v1445 = vld [vmem:[#allocation3 + $0x78] sm:$0xff]
      %v1446 = vld [vmem:[%s1] sm:$0xf]
      %v1447 = vld [vmem:[%s1 + $0x4] sm:$0xf]
      %v1448 = vld [vmem:[%s1 + $0x8] sm:$0xf]
      %v1449 = vld [vmem:[%s1 + $0xc] sm:$0xf]
      %v1450 = vld [vmem:[%s1 + $0x10] sm:$0x3]
      %v1451 = vld [vmem:[%s2] sm:$0x1]
      %v1453 = vlaneseq
      %v1454 = vshrl.u32 %v1453, 7
      %v1455 = vsub.s32 0, %v1454
      %v1456 = vrot.slane %v1451, %v1455
      %v1463 = vunpack.c.l.b16 %v1446
      %v1464 = vunpack.c.l.b16 %v1447
      %v1465 = vunpack.c.l.b16 %v1448
      %v1466 = vunpack.c.l.b16 %v1449
      %v1467 = vunpack.c.l.b16 %v1450
      %v1468 = vpack.c.b16 %v1464, %v1463
      %v1469 = vpack.c.b16 %v1466, %v1465
      %v1470 = vpack.c.b16 %v1467, %v1467
      %vm1473 = vcmask 293888
      %v1475 = vsel %vm1473, %v1430, 0
      %v1478 = vsel %vm1473, %v1431, 0
      %v1481 = vsel %vm1473, %v1432, 0
      %v1484 = vsel %vm1473, %v1433, 0
      %v1487 = vsel %vm1473, %v1434, 0
      %v1490 = vsel %vm1473, %v1435, 0
      %v1493 = vsel %vm1473, %v1436, 0
      %v1496 = vsel %vm1473, %v1437, 0
      %v1499 = vsel %vm1473, %v1438, 0
      %v1502 = vsel %vm1473, %v1439, 0
      %v1505 = vsel %vm1473, %v1440, 0
      %v1508 = vsel %vm1473, %v1441, 0
      %v1511 = vsel %vm1473, %v1442, 0
      %v1514 = vsel %vm1473, %v1443, 0
      %v1517 = vsel %vm1473, %v1444, 0
      %v1520 = vsel %vm1473, %v1445, 0
      %vm1522 = vcmask 1041408
      %v1524 = vsel %vm1522, %v1470, 0
      %1526 = vmatprep.subr.bf16.mxu0 0
      %1527 = vmatpush1.bf16.msra.mxu0 %v1468
      %1528 = vmatprep.subr.bf16.mxu0 0
      %1529 = vmatpush1.bf16.msra.mxu0 %v1469
      %1530 = vmatprep.subr.bf16.mxu0 0
      %1531 = vmatpush1.bf16.msra.mxu0 %v1524
      %1532 = vmatprep.subr.bf16.mxu0 0
      %1533 = vmatpush1.bf16.msra.mxu0 0
      %1534 = vmatprep.subr.bf16.mxu0 0
      %1535 = vmatpush1.bf16.msra.mxu0 0
      %1536 = vmatprep.subr.bf16.mxu0 0
      %1537 = vmatpush1.bf16.msra.mxu0 0
      %1538 = vmatprep.subr.bf16.mxu0 0
      %1539 = vmatpush1.bf16.msra.mxu0 0
      %1540 = vmatprep.subr.bf16.mxu0 0
      %1541 = vmatpush1.bf16.msra.mxu0 0
      %1542 = vmatprep.subr.bf16.mxu0 0
      %1543 = vmatpush1.bf16.msra.mxu0 0
      %1544 = vmatprep.subr.bf16.mxu0 0
      %1545 = vmatpush1.bf16.msra.mxu0 0
      %1546 = vmatprep.subr.bf16.mxu0 0
      %1547 = vmatpush1.bf16.msra.mxu0 0
      %1548 = vmatprep.subr.bf16.mxu0 0
      %1549 = vmatpush1.bf16.msra.mxu0 0
      %1550 = vmatprep.subr.bf16.mxu0 0
      %1551 = vmatpush1.bf16.msra.mxu0 0
      %1552 = vmatprep.subr.bf16.mxu0 0
      %1553 = vmatpush1.bf16.msra.mxu0 0
      %1554 = vmatprep.subr.bf16.mxu0 0
      %1555 = vmatpush1.bf16.msra.mxu0 0
      %1556 = vmatprep.subr.bf16.mxu0 0
      %1557 = vmatpush1.bf16.msra.mxu0 0
      %1558 = vmatprep.mubr.bf16.mxu0 0
      %1559 = vmatmul.mubr.bf16.gmra.mrb[0].mxu0 %v1475
      %v1560 = vpop.f32.mrb[0].mxu0
      %v1561 = vadd.f32 %v1456, %v1560
      %v1562 = vpop.f32.mrb[0].mxu0
      %v1563 = vpop.f32.mrb[0].mxu0
      %v1564 = vadd.f32 %v1456, %v1563
      %v1565 = vpop.f32.mrb[0].mxu0
      %1566 = vmatprep.mubr.bf16.mxu0 0
      %1567 = vmatmul.mubr.bf16.gmra.mrb[0].mxu0 %v1478
      %v1568 = vpop.f32.mrb[0].mxu0
      %v1569 = vadd.f32 %v1456, %v1568
      %v1570 = vpop.f32.mrb[0].mxu0
      %v1571 = vpop.f32.mrb[0].mxu0
      %v1572 = vadd.f32 %v1456, %v1571
      %v1573 = vpop.f32.mrb[0].mxu0
      %1574 = vmatprep.mubr.bf16.mxu0 0
      %1575 = vmatmul.mubr.bf16.gmra.mrb[0].mxu0 %v1481
      %v1576 = vpop.f32.mrb[0].mxu0
      %v1577 = vadd.f32 %v1456, %v1576
      %v1578 = vpop.f32.mrb[0].mxu0
      %v1579 = vpop.f32.mrb[0].mxu0
      %v1580 = vadd.f32 %v1456, %v1579
      %v1581 = vpop.f32.mrb[0].mxu0
      %1582 = vmatprep.mubr.bf16.mxu0 0
      %1583 = vmatmul.mubr.bf16.gmra.mrb[0].mxu0 %v1484
      %v1584 = vpop.f32.mrb[0].mxu0
      %v1585 = vadd.f32 %v1456, %v1584
      %v1586 = vpop.f32.mrb[0].mxu0
      %v1587 = vpop.f32.mrb[0].mxu0
      %v1588 = vadd.f32 %v1456, %v1587
      %v1589 = vpop.f32.mrb[0].mxu0
      %1590 = vmatprep.mubr.bf16.mxu0 0
      %1591 = vmatmul.mubr.bf16.gmra.mrb[0].mxu0 %v1487
      %v1592 = vpop.f32.mrb[0].mxu0
      %v1593 = vadd.f32 %v1456, %v1592
      %v1594 = vpop.f32.mrb[0].mxu0
      %v1595 = vpop.f32.mrb[0].mxu0
      %v1596 = vadd.f32 %v1456, %v1595
      %v1597 = vpop.f32.mrb[0].mxu0
      %1598 = vmatprep.mubr.bf16.mxu0 0
      %1599 = vmatmul.mubr.bf16.gmra.mrb[0].mxu0 %v1490
      %v1600 = vpop.f32.mrb[0].mxu0
      %v1601 = vadd.f32 %v1456, %v1600
      %v1602 = vpop.f32.mrb[0].mxu0
      %v1603 = vpop.f32.mrb[0].mxu0
      %v1604 = vadd.f32 %v1456, %v1603
      %v1605 = vpop.f32.mrb[0].mxu0
      %1606 = vmatprep.mubr.bf16.mxu0 0
      %1607 = vmatmul.mubr.bf16.gmra.mrb[0].mxu0 %v1493
      %v1608 = vpop.f32.mrb[0].mxu0
      %v1609 = vadd.f32 %v1456, %v1608
      %v1610 = vpop.f32.mrb[0].mxu0
      %v1611 = vpop.f32.mrb[0].mxu0
      %v1612 = vadd.f32 %v1456, %v1611
      %v1613 = vpop.f32.mrb[0].mxu0
      %1614 = vmatprep.mubr.bf16.mxu0 0
      %1615 = vmatmul.mubr.bf16.gmra.mrb[0].mxu0 %v1496
      %v1616 = vpop.f32.mrb[0].mxu0
      %v1617 = vadd.f32 %v1456, %v1616
      %v1618 = vpop.f32.mrb[0].mxu0
      %v1619 = vpop.f32.mrb[0].mxu0
      %v1620 = vadd.f32 %v1456, %v1619
      %v1621 = vpop.f32.mrb[0].mxu0
      %1622 = vmatprep.mubr.bf16.mxu0 0
      %1623 = vmatmul.mubr.bf16.gmra.mrb[0].mxu0 %v1499
      %v1624 = vpop.f32.mrb[0].mxu0
      %v1625 = vadd.f32 %v1456, %v1624
      %v1626 = vpop.f32.mrb[0].mxu0
      %v1627 = vpop.f32.mrb[0].mxu0
      %v1628 = vadd.f32 %v1456, %v1627
      %v1629 = vpop.f32.mrb[0].mxu0
      %1630 = vmatprep.mubr.bf16.mxu0 0
      %1631 = vmatmul.mubr.bf16.gmra.mrb[0].mxu0 %v1502
      %v1632 = vpop.f32.mrb[0].mxu0
      %v1633 = vadd.f32 %v1456, %v1632
      %v1634 = vpop.f32.mrb[0].mxu0
      %v1635 = vpop.f32.mrb[0].mxu0
      %v1636 = vadd.f32 %v1456, %v1635
      %v1637 = vpop.f32.mrb[0].mxu0
      %1638 = vmatprep.mubr.bf16.mxu0 0
      %1639 = vmatmul.mubr.bf16.gmra.mrb[0].mxu0 %v1505
      %v1640 = vpop.f32.mrb[0].mxu0
      %v1641 = vadd.f32 %v1456, %v1640
      %v1642 = vpop.f32.mrb[0].mxu0
      %v1643 = vpop.f32.mrb[0].mxu0
      %v1644 = vadd.f32 %v1456, %v1643
      %v1645 = vpop.f32.mrb[0].mxu0
      %1646 = vmatprep.mubr.bf16.mxu0 0
      %1647 = vmatmul.mubr.bf16.gmra.mrb[0].mxu0 %v1508
      %v1648 = vpop.f32.mrb[0].mxu0
      %v1649 = vadd.f32 %v1456, %v1648
      %v1650 = vpop.f32.mrb[0].mxu0
      %v1651 = vpop.f32.mrb[0].mxu0
      %v1652 = vadd.f32 %v1456, %v1651
      %v1653 = vpop.f32.mrb[0].mxu0
      %1654 = vmatprep.mubr.bf16.mxu0 0
      %1655 = vmatmul.mubr.bf16.gmra.mrb[0].mxu0 %v1511
      %v1656 = vpop.f32.mrb[0].mxu0
      %v1657 = vadd.f32 %v1456, %v1656
      %v1658 = vpop.f32.mrb[0].mxu0
      %v1659 = vpop.f32.mrb[0].mxu0
      %v1660 = vadd.f32 %v1456, %v1659
      %v1661 = vpop.f32.mrb[0].mxu0
      %1662 = vmatprep.mubr.bf16.mxu0 0
      %1663 = vmatmul.mubr.bf16.gmra.mrb[0].mxu0 %v1514
      %v1664 = vpop.f32.mrb[0].mxu0
      %v1665 = vadd.f32 %v1456, %v1664
      %v1666 = vpop.f32.mrb[0].mxu0
      %v1667 = vpop.f32.mrb[0].mxu0
      %v1668 = vadd.f32 %v1456, %v1667
      %v1669 = vpop.f32.mrb[0].mxu0
      %1670 = vmatprep.mubr.bf16.mxu0 0
      %1671 = vmatmul.mubr.bf16.gmra.mrb[0].mxu0 %v1517
      %v1672 = vpop.f32.mrb[0].mxu0
      %v1673 = vadd.f32 %v1456, %v1672
      %v1674 = vpop.f32.mrb[0].mxu0
      %v1675 = vpop.f32.mrb[0].mxu0
      %v1676 = vadd.f32 %v1456, %v1675
      %v1677 = vpop.f32.mrb[0].mxu0
      %1678 = vmatprep.mubr.bf16.mxu0 0
      %1679 = vmatmul.mubr.bf16.gmra.mrb[0].mxu0 %v1520
      %v1680 = vpop.f32.mrb[0].mxu0
      %v1681 = vadd.f32 %v1456, %v1680
      %v1682 = vpop.f32.mrb[0].mxu0
      %v1683 = vpop.f32.mrb[0].mxu0
      %v1684 = vadd.f32 %v1456, %v1683
      %v1685 = vpop.f32.mrb[0].mxu0
      %1686 = vdwg.mxu0
      %v1687 = vmax.f32 %v1561, 0.0
      %v1688 = vmax.f32 %v1564, 0.0
      %v1689 = vmax.f32 %v1569, 0.0
      %v1690 = vmax.f32 %v1572, 0.0
      %v1691 = vmax.f32 %v1577, 0.0
      %v1692 = vmax.f32 %v1580, 0.0
      %v1693 = vmax.f32 %v1585, 0.0
      %v1694 = vmax.f32 %v1588, 0.0
      %v1695 = vmax.f32 %v1593, 0.0
      %v1696 = vmax.f32 %v1596, 0.0
      %v1697 = vmax.f32 %v1601, 0.0
      %v1698 = vmax.f32 %v1604, 0.0
      %v1699 = vmax.f32 %v1609, 0.0
      %v1700 = vmax.f32 %v1612, 0.0
      %v1701 = vmax.f32 %v1617, 0.0
      %v1702 = vmax.f32 %v1620, 0.0
      %v1703 = vmax.f32 %v1625, 0.0
      %v1704 = vmax.f32 %v1628, 0.0
      %v1705 = vmax.f32 %v1633, 0.0
      %v1706 = vmax.f32 %v1636, 0.0
      %v1707 = vmax.f32 %v1641, 0.0
      %v1708 = vmax.f32 %v1644, 0.0
      %v1709 = vmax.f32 %v1649, 0.0
      %v1710 = vmax.f32 %v1652, 0.0
      %v1711 = vmax.f32 %v1657, 0.0
      %v1712 = vmax.f32 %v1660, 0.0
      %v1713 = vmax.f32 %v1665, 0.0
      %v1714 = vmax.f32 %v1668, 0.0
      %v1715 = vmax.f32 %v1673, 0.0
      %v1716 = vmax.f32 %v1676, 0.0
      %v1717 = vmax.f32 %v1681, 0.0
      %v1718 = vmax.f32 %v1684, 0.0
      %1719 = vst.msk [vmem:[%s235 + $0x1] sm:$0xff] %vm226, %v1687
      %1720 = vst.msk [vmem:[%s235 + $0x9] sm:$0xff] %vm226, %v1688
      %1721 = vst.msk [vmem:[%s235 + $0x19] sm:$0xff] %vm226, %v1689
      %1722 = vst.msk [vmem:[%s235 + $0x21] sm:$0xff] %vm226, %v1690
      %1723 = vst.msk [vmem:[%s235 + $0x31] sm:$0xff] %vm226, %v1691
      %1724 = vst.msk [vmem:[%s235 + $0x39] sm:$0xff] %vm226, %v1692
      %1725 = vst.msk [vmem:[%s235 + $0x49] sm:$0xff] %vm226, %v1693
      %1726 = vst.msk [vmem:[%s235 + $0x51] sm:$0xff] %vm226, %v1694
      %1727 = vst.msk [vmem:[%s235 + $0x61] sm:$0xff] %vm226, %v1695
      %1728 = vst.msk [vmem:[%s235 + $0x69] sm:$0xff] %vm226, %v1696
      %1729 = vst.msk [vmem:[%s235 + $0x79] sm:$0xff] %vm226, %v1697
      %1730 = vst.msk [vmem:[%s235 + $0x81] sm:$0xff] %vm226, %v1698
      %1731 = vst.msk [vmem:[%s235 + $0x91] sm:$0xff] %vm226, %v1699
      %1732 = vst.msk [vmem:[%s235 + $0x99] sm:$0xff] %vm226, %v1700
      %1733 = vst.msk [vmem:[%s235 + $0xa9] sm:$0xff] %vm226, %v1701
      %1734 = vst.msk [vmem:[%s235 + $0xb1] sm:$0xff] %vm226, %v1702
      %1735 = vst.msk [vmem:[%s235 + $0xc1] sm:$0xff] %vm226, %v1703
      %1736 = vst.msk [vmem:[%s235 + $0xc9] sm:$0xff] %vm226, %v1704
      %1737 = vst.msk [vmem:[%s235 + $0xd9] sm:$0xff] %vm226, %v1705
      %1738 = vst.msk [vmem:[%s235 + $0xe1] sm:$0xff] %vm226, %v1706
      %1739 = vst.msk [vmem:[%s235 + $0xf1] sm:$0xff] %vm226, %v1707
      %1740 = vst.msk [vmem:[%s235 + $0xf9] sm:$0xff] %vm226, %v1708
      %1741 = vst.msk [vmem:[%s235 + $0x109] sm:$0xff] %vm226, %v1709
      %1742 = vst.msk [vmem:[%s235 + $0x111] sm:$0xff] %vm226, %v1710
      %1743 = vst.msk [vmem:[%s235 + $0x121] sm:$0xff] %vm226, %v1711
      %1744 = vst.msk [vmem:[%s235 + $0x129] sm:$0xff] %vm226, %v1712
      %1745 = vst.msk [vmem:[%s235 + $0x139] sm:$0xff] %vm226, %v1713
      %1746 = vst.msk [vmem:[%s235 + $0x141] sm:$0xff] %vm226, %v1714
      %1747 = vst.msk [vmem:[%s235 + $0x151] sm:$0xff] %vm226, %v1715
      %1748 = vst.msk [vmem:[%s235 + $0x159] sm:$0xff] %vm226, %v1716
      %1749 = vst.msk [vmem:[%s235 + $0x169] sm:$0xff] %vm226, %v1717
      %1750 = vst.msk [vmem:[%s235 + $0x171] sm:$0xff] %vm226, %v1718
      %v1751 = vld [vmem:[#allocation2] sm:$0xff]
      %v1752 = vld [vmem:[#allocation2 + $0x8] sm:$0xff]
      %v1753 = vld [vmem:[#allocation2 + $0x18] sm:$0xff]
      %v1754 = vld [vmem:[#allocation2 + $0x20] sm:$0xff]
      %v1755 = vld [vmem:[#allocation2 + $0x30] sm:$0xff]
      %v1756 = vld [vmem:[#allocation2 + $0x38] sm:$0xff]
      %v1757 = vld [vmem:[#allocation2 + $0x48] sm:$0xff]
      %v1758 = vld [vmem:[#allocation2 + $0x50] sm:$0xff]
      %v1759 = vld [vmem:[#allocation2 + $0x60] sm:$0xff]
      %v1760 = vld [vmem:[#allocation2 + $0x68] sm:$0xff]
      %v1761 = vld [vmem:[#allocation2 + $0x78] sm:$0xff]
      %v1762 = vld [vmem:[#allocation2 + $0x80] sm:$0xff]
      %v1763 = vld [vmem:[#allocation2 + $0x90] sm:$0xff]
      %v1764 = vld [vmem:[#allocation2 + $0x98] sm:$0xff]
      %v1765 = vld [vmem:[#allocation2 + $0xa8] sm:$0xff]
      %v1766 = vld [vmem:[#allocation2 + $0xb0] sm:$0xff]
      %v1767 = vld [vmem:[#allocation2 + $0xc0] sm:$0xff]
      %v1768 = vld [vmem:[#allocation2 + $0xc8] sm:$0xff]
      %v1769 = vld [vmem:[#allocation2 + $0xd8] sm:$0xff]
      %v1770 = vld [vmem:[#allocation2 + $0xe0] sm:$0xff]
      %v1771 = vld [vmem:[#allocation2 + $0xf0] sm:$0xff]
      %v1772 = vld [vmem:[#allocation2 + $0xf8] sm:$0xff]
      %v1773 = vld [vmem:[#allocation2 + $0x108] sm:$0xff]
      %v1774 = vld [vmem:[#allocation2 + $0x110] sm:$0xff]
      %v1775 = vld [vmem:[#allocation2 + $0x120] sm:$0xff]
      %v1776 = vld [vmem:[#allocation2 + $0x128] sm:$0xff]
      %v1777 = vld [vmem:[#allocation2 + $0x138] sm:$0xff]
      %v1778 = vld [vmem:[#allocation2 + $0x140] sm:$0xff]
      %v1779 = vld [vmem:[#allocation2 + $0x150] sm:$0xff]
      %v1780 = vld [vmem:[#allocation2 + $0x158] sm:$0xff]
      %v1781 = vld [vmem:[#allocation2 + $0x168] sm:$0xff]
      %v1782 = vld [vmem:[#allocation2 + $0x170] sm:$0xff]
      %v1783 = vpack.c.bf16 %v1752, %v1751
      %v1784 = vpack.c.bf16 %v1754, %v1753
      %v1785 = vpack.c.bf16 %v1756, %v1755
      %v1786 = vpack.c.bf16 %v1758, %v1757
      %v1787 = vpack.c.bf16 %v1760, %v1759
      %v1788 = vpack.c.bf16 %v1762, %v1761
      %v1789 = vpack.c.bf16 %v1764, %v1763
      %v1790 = vpack.c.bf16 %v1766, %v1765
      %v1791 = vpack.c.bf16 %v1768, %v1767
      %v1792 = vpack.c.bf16 %v1770, %v1769
      %v1793 = vpack.c.bf16 %v1772, %v1771
      %v1794 = vpack.c.bf16 %v1774, %v1773
      %v1795 = vpack.c.bf16 %v1776, %v1775
      %v1796 = vpack.c.bf16 %v1778, %v1777
      %v1797 = vpack.c.bf16 %v1780, %v1779
      %v1798 = vpack.c.bf16 %v1782, %v1781
      %1799 = vst.msk [vmem:[#allocation3] sm:$0xff] %vm226, %v1783
      %1800 = vst.msk [vmem:[#allocation3 + $0x8] sm:$0xff] %vm226, %v1784
      %1801 = vst.msk [vmem:[#allocation3 + $0x10] sm:$0xff] %vm226, %v1785
      %1802 = vst.msk [vmem:[#allocation3 + $0x18] sm:$0xff] %vm226, %v1786
      %1803 = vst.msk [vmem:[#allocation3 + $0x20] sm:$0xff] %vm226, %v1787
      %1804 = vst.msk [vmem:[#allocation3 + $0x28] sm:$0xff] %vm226, %v1788
      %1805 = vst.msk [vmem:[#allocation3 + $0x30] sm:$0xff] %vm226, %v1789
      %1806 = vst.msk [vmem:[#allocation3 + $0x38] sm:$0xff] %vm226, %v1790
      %1807 = vst.msk [vmem:[#allocation3 + $0x40] sm:$0xff] %vm226, %v1791
      %1808 = vst.msk [vmem:[#allocation3 + $0x48] sm:$0xff] %vm226, %v1792
      %1809 = vst.msk [vmem:[#allocation3 + $0x50] sm:$0xff] %vm226, %v1793
      %1810 = vst.msk [vmem:[#allocation3 + $0x58] sm:$0xff] %vm226, %v1794
      %1811 = vst.msk [vmem:[#allocation3 + $0x60] sm:$0xff] %vm226, %v1795
      %1812 = vst.msk [vmem:[#allocation3 + $0x68] sm:$0xff] %vm226, %v1796
      %1813 = vst.msk [vmem:[#allocation3 + $0x70] sm:$0xff] %vm226, %v1797
      %1814 = vst.msk [vmem:[#allocation3 + $0x78] sm:$0xff] %vm226, %v1798
      %v1815 = vld [vmem:[#allocation2 + $0x1] sm:$0xff]
      %v1816 = vld [vmem:[#allocation2 + $0x9] sm:$0xff]
      %v1817 = vld [vmem:[#allocation2 + $0x19] sm:$0xff]
      %v1818 = vld [vmem:[#allocation2 + $0x21] sm:$0xff]
      %v1819 = vld [vmem:[#allocation2 + $0x31] sm:$0xff]
      %v1820 = vld [vmem:[#allocation2 + $0x39] sm:$0xff]
      %v1821 = vld [vmem:[#allocation2 + $0x49] sm:$0xff]
      %v1822 = vld [vmem:[#allocation2 + $0x51] sm:$0xff]
      %v1823 = vld [vmem:[#allocation2 + $0x61] sm:$0xff]
      %v1824 = vld [vmem:[#allocation2 + $0x69] sm:$0xff]
      %v1825 = vld [vmem:[#allocation2 + $0x79] sm:$0xff]
      %v1826 = vld [vmem:[#allocation2 + $0x81] sm:$0xff]
      %v1827 = vld [vmem:[#allocation2 + $0x91] sm:$0xff]
      %v1828 = vld [vmem:[#allocation2 + $0x99] sm:$0xff]
      %v1829 = vld [vmem:[#allocation2 + $0xa9] sm:$0xff]
      %v1830 = vld [vmem:[#allocation2 + $0xb1] sm:$0xff]
      %v1831 = vld [vmem:[#allocation2 + $0xc1] sm:$0xff]
      %v1832 = vld [vmem:[#allocation2 + $0xc9] sm:$0xff]
      %v1833 = vld [vmem:[#allocation2 + $0xd9] sm:$0xff]
      %v1834 = vld [vmem:[#allocation2 + $0xe1] sm:$0xff]
      %v1835 = vld [vmem:[#allocation2 + $0xf1] sm:$0xff]
      %v1836 = vld [vmem:[#allocation2 + $0xf9] sm:$0xff]
      %v1837 = vld [vmem:[#allocation2 + $0x109] sm:$0xff]
      %v1838 = vld [vmem:[#allocation2 + $0x111] sm:$0xff]
      %v1839 = vld [vmem:[#allocation2 + $0x121] sm:$0xff]
      %v1840 = vld [vmem:[#allocation2 + $0x129] sm:$0xff]
      %v1841 = vld [vmem:[#allocation2 + $0x139] sm:$0xff]
      %v1842 = vld [vmem:[#allocation2 + $0x141] sm:$0xff]
      %v1843 = vld [vmem:[#allocation2 + $0x151] sm:$0xff]
      %v1844 = vld [vmem:[#allocation2 + $0x159] sm:$0xff]
      %v1845 = vld [vmem:[#allocation2 + $0x169] sm:$0xff]
      %v1846 = vld [vmem:[#allocation2 + $0x171] sm:$0xff]
      %v1847 = vpack.c.bf16 %v1816, %v1815
      %v1848 = vpack.c.bf16 %v1818, %v1817
      %v1849 = vpack.c.bf16 %v1820, %v1819
      %v1850 = vpack.c.bf16 %v1822, %v1821
      %v1851 = vpack.c.bf16 %v1824, %v1823
      %v1852 = vpack.c.bf16 %v1826, %v1825
      %v1853 = vpack.c.bf16 %v1828, %v1827
      %v1854 = vpack.c.bf16 %v1830, %v1829
      %v1855 = vpack.c.bf16 %v1832, %v1831
      %v1856 = vpack.c.bf16 %v1834, %v1833
      %v1857 = vpack.c.bf16 %v1836, %v1835
      %v1858 = vpack.c.bf16 %v1838, %v1837
      %v1859 = vpack.c.bf16 %v1840, %v1839
      %v1860 = vpack.c.bf16 %v1842, %v1841
      %v1861 = vpack.c.bf16 %v1844, %v1843
      %v1862 = vpack.c.bf16 %v1846, %v1845
      %1879 = vrot.lane.b32.xlu0 %v1847, 4
      %v1880 = vpop.permute.xlu0 %1879
      %1881 = vrot.lane.b32.xlu0 %v1848, 4
      %v1882 = vpop.permute.xlu0 %1881
      %1883 = vrot.lane.b32.xlu0 %v1849, 4
      %v1884 = vpop.permute.xlu0 %1883
      %1885 = vrot.lane.b32.xlu0 %v1850, 4
      %v1886 = vpop.permute.xlu0 %1885
      %1887 = vrot.lane.b32.xlu0 %v1851, 4
      %v1888 = vpop.permute.xlu0 %1887
      %1889 = vrot.lane.b32.xlu0 %v1852, 4
      %v1890 = vpop.permute.xlu0 %1889
      %1891 = vrot.lane.b32.xlu0 %v1853, 4
      %v1892 = vpop.permute.xlu0 %1891
      %1893 = vrot.lane.b32.xlu0 %v1854, 4
      %v1894 = vpop.permute.xlu0 %1893
      %1895 = vrot.lane.b32.xlu0 %v1855, 4
      %v1896 = vpop.permute.xlu0 %1895
      %1897 = vrot.lane.b32.xlu0 %v1856, 4
      %v1898 = vpop.permute.xlu0 %1897
      %1899 = vrot.lane.b32.xlu0 %v1857, 4
      %v1900 = vpop.permute.xlu0 %1899
      %1901 = vrot.lane.b32.xlu0 %v1858, 4
      %v1902 = vpop.permute.xlu0 %1901
      %1903 = vrot.lane.b32.xlu0 %v1859, 4
      %v1904 = vpop.permute.xlu0 %1903
      %1905 = vrot.lane.b32.xlu0 %v1860, 4
      %v1906 = vpop.permute.xlu0 %1905
      %1907 = vrot.lane.b32.xlu0 %v1861, 4
      %v1908 = vpop.permute.xlu0 %1907
      %1909 = vrot.lane.b32.xlu0 %v1862, 4
      %v1910 = vpop.permute.xlu0 %1909
      %1927 = vst.msk [vmem:[#allocation3] sm:$0xff] %vm509, %v1880
      %1928 = vst.msk [vmem:[#allocation3 + $0x8] sm:$0xff] %vm509, %v1882
      %1929 = vst.msk [vmem:[#allocation3 + $0x10] sm:$0xff] %vm509, %v1884
      %1930 = vst.msk [vmem:[#allocation3 + $0x18] sm:$0xff] %vm509, %v1886
      %1931 = vst.msk [vmem:[#allocation3 + $0x20] sm:$0xff] %vm509, %v1888
      %1932 = vst.msk [vmem:[#allocation3 + $0x28] sm:$0xff] %vm509, %v1890
      %1933 = vst.msk [vmem:[#allocation3 + $0x30] sm:$0xff] %vm509, %v1892
      %1934 = vst.msk [vmem:[#allocation3 + $0x38] sm:$0xff] %vm509, %v1894
      %1935 = vst.msk [vmem:[#allocation3 + $0x40] sm:$0xff] %vm509, %v1896
      %1936 = vst.msk [vmem:[#allocation3 + $0x48] sm:$0xff] %vm509, %v1898
      %1937 = vst.msk [vmem:[#allocation3 + $0x50] sm:$0xff] %vm509, %v1900
      %1938 = vst.msk [vmem:[#allocation3 + $0x58] sm:$0xff] %vm509, %v1902
      %1939 = vst.msk [vmem:[#allocation3 + $0x60] sm:$0xff] %vm509, %v1904
      %1940 = vst.msk [vmem:[#allocation3 + $0x68] sm:$0xff] %vm509, %v1906
      %1941 = vst.msk [vmem:[#allocation3 + $0x70] sm:$0xff] %vm509, %v1908
      %1942 = vst.msk [vmem:[#allocation3 + $0x78] sm:$0xff] %vm509, %v1910
      %v1943 = vld [vmem:[#allocation2 + $0x2] sm:$0xff]
      %v1944 = vld [vmem:[#allocation2 + $0xa] sm:$0xff]
      %v1945 = vld [vmem:[#allocation2 + $0x1a] sm:$0xff]
      %v1946 = vld [vmem:[#allocation2 + $0x22] sm:$0xff]
      %v1947 = vld [vmem:[#allocation2 + $0x32] sm:$0xff]
      %v1948 = vld [vmem:[#allocation2 + $0x3a] sm:$0xff]
      %v1949 = vld [vmem:[#allocation2 + $0x4a] sm:$0xff]
      %v1950 = vld [vmem:[#allocation2 + $0x52] sm:$0xff]
      %v1951 = vld [vmem:[#allocation2 + $0x62] sm:$0xff]
      %v1952 = vld [vmem:[#allocation2 + $0x6a] sm:$0xff]
      %v1953 = vld [vmem:[#allocation2 + $0x7a] sm:$0xff]
      %v1954 = vld [vmem:[#allocation2 + $0x82] sm:$0xff]
      %v1955 = vld [vmem:[#allocation2 + $0x92] sm:$0xff]
      %v1956 = vld [vmem:[#allocation2 + $0x9a] sm:$0xff]
      %v1957 = vld [vmem:[#allocation2 + $0xaa] sm:$0xff]
      %v1958 = vld [vmem:[#allocation2 + $0xb2] sm:$0xff]
      %v1959 = vld [vmem:[#allocation2 + $0xc2] sm:$0xff]
      %v1960 = vld [vmem:[#allocation2 + $0xca] sm:$0xff]
      %v1961 = vld [vmem:[#allocation2 + $0xda] sm:$0xff]
      %v1962 = vld [vmem:[#allocation2 + $0xe2] sm:$0xff]
      %v1963 = vld [vmem:[#allocation2 + $0xf2] sm:$0xff]
      %v1964 = vld [vmem:[#allocation2 + $0xfa] sm:$0xff]
      %v1965 = vld [vmem:[#allocation2 + $0x10a] sm:$0xff]
      %v1966 = vld [vmem:[#allocation2 + $0x112] sm:$0xff]
      %v1967 = vld [vmem:[#allocation2 + $0x122] sm:$0xff]
      %v1968 = vld [vmem:[#allocation2 + $0x12a] sm:$0xff]
      %v1969 = vld [vmem:[#allocation2 + $0x13a] sm:$0xff]
      %v1970 = vld [vmem:[#allocation2 + $0x142] sm:$0xff]
      %v1971 = vld [vmem:[#allocation2 + $0x152] sm:$0xff]
      %v1972 = vld [vmem:[#allocation2 + $0x15a] sm:$0xff]
      %v1973 = vld [vmem:[#allocation2 + $0x16a] sm:$0xff]
      %v1974 = vld [vmem:[#allocation2 + $0x172] sm:$0xff]
      %v1975 = vpack.c.bf16 %v1944, %v1943
      %v1976 = vpack.c.bf16 %v1946, %v1945
      %v1977 = vpack.c.bf16 %v1948, %v1947
      %v1978 = vpack.c.bf16 %v1950, %v1949
      %v1979 = vpack.c.bf16 %v1952, %v1951
      %v1980 = vpack.c.bf16 %v1954, %v1953
      %v1981 = vpack.c.bf16 %v1956, %v1955
      %v1982 = vpack.c.bf16 %v1958, %v1957
      %v1983 = vpack.c.bf16 %v1960, %v1959
      %v1984 = vpack.c.bf16 %v1962, %v1961
      %v1985 = vpack.c.bf16 %v1964, %v1963
      %v1986 = vpack.c.bf16 %v1966, %v1965
      %v1987 = vpack.c.bf16 %v1968, %v1967
      %v1988 = vpack.c.bf16 %v1970, %v1969
      %v1989 = vpack.c.bf16 %v1972, %v1971
      %v1990 = vpack.c.bf16 %v1974, %v1973
      %2007 = vrot.lane.b32.xlu0 %v1975, 8
      %v2008 = vpop.permute.xlu0 %2007
      %2009 = vrot.lane.b32.xlu0 %v1976, 8
      %v2010 = vpop.permute.xlu0 %2009
      %2011 = vrot.lane.b32.xlu0 %v1977, 8
      %v2012 = vpop.permute.xlu0 %2011
      %2013 = vrot.lane.b32.xlu0 %v1978, 8
      %v2014 = vpop.permute.xlu0 %2013
      %2015 = vrot.lane.b32.xlu0 %v1979, 8
      %v2016 = vpop.permute.xlu0 %2015
      %2017 = vrot.lane.b32.xlu0 %v1980, 8
      %v2018 = vpop.permute.xlu0 %2017
      %2019 = vrot.lane.b32.xlu0 %v1981, 8
      %v2020 = vpop.permute.xlu0 %2019
      %2021 = vrot.lane.b32.xlu0 %v1982, 8
      %v2022 = vpop.permute.xlu0 %2021
      %2023 = vrot.lane.b32.xlu0 %v1983, 8
      %v2024 = vpop.permute.xlu0 %2023
      %2025 = vrot.lane.b32.xlu0 %v1984, 8
      %v2026 = vpop.permute.xlu0 %2025
      %2027 = vrot.lane.b32.xlu0 %v1985, 8
      %v2028 = vpop.permute.xlu0 %2027
      %2029 = vrot.lane.b32.xlu0 %v1986, 8
      %v2030 = vpop.permute.xlu0 %2029
      %2031 = vrot.lane.b32.xlu0 %v1987, 8
      %v2032 = vpop.permute.xlu0 %2031
      %2033 = vrot.lane.b32.xlu0 %v1988, 8
      %v2034 = vpop.permute.xlu0 %2033
      %2035 = vrot.lane.b32.xlu0 %v1989, 8
      %v2036 = vpop.permute.xlu0 %2035
      %2037 = vrot.lane.b32.xlu0 %v1990, 8
      %v2038 = vpop.permute.xlu0 %2037
      %2055 = vst.msk [vmem:[#allocation3] sm:$0xff] %vm638, %v2008
      %2056 = vst.msk [vmem:[#allocation3 + $0x8] sm:$0xff] %vm638, %v2010
      %2057 = vst.msk [vmem:[#allocation3 + $0x10] sm:$0xff] %vm638, %v2012
      %2058 = vst.msk [vmem:[#allocation3 + $0x18] sm:$0xff] %vm638, %v2014
      %2059 = vst.msk [vmem:[#allocation3 + $0x20] sm:$0xff] %vm638, %v2016
      %2060 = vst.msk [vmem:[#allocation3 + $0x28] sm:$0xff] %vm638, %v2018
      %2061 = vst.msk [vmem:[#allocation3 + $0x30] sm:$0xff] %vm638, %v2020
      %2062 = vst.msk [vmem:[#allocation3 + $0x38] sm:$0xff] %vm638, %v2022
      %2063 = vst.msk [vmem:[#allocation3 + $0x40] sm:$0xff] %vm638, %v2024
      %2064 = vst.msk [vmem:[#allocation3 + $0x48] sm:$0xff] %vm638, %v2026
      %2065 = vst.msk [vmem:[#allocation3 + $0x50] sm:$0xff] %vm638, %v2028
      %2066 = vst.msk [vmem:[#allocation3 + $0x58] sm:$0xff] %vm638, %v2030
      %2067 = vst.msk [vmem:[#allocation3 + $0x60] sm:$0xff] %vm638, %v2032
      %2068 = vst.msk [vmem:[#allocation3 + $0x68] sm:$0xff] %vm638, %v2034
      %2069 = vst.msk [vmem:[#allocation3 + $0x70] sm:$0xff] %vm638, %v2036
      %2070 = vst.msk [vmem:[#allocation3 + $0x78] sm:$0xff] %vm638, %v2038
      %v2071 = vld [vmem:[%s235] sm:$0xff]
      %v2072 = vld [vmem:[%s235 + $0x8] sm:$0xff]
      %v2073 = vld [vmem:[%s235 + $0x18] sm:$0xff]
      %v2074 = vld [vmem:[%s235 + $0x20] sm:$0xff]
      %v2075 = vld [vmem:[%s235 + $0x30] sm:$0xff]
      %v2076 = vld [vmem:[%s235 + $0x38] sm:$0xff]
      %v2077 = vld [vmem:[%s235 + $0x48] sm:$0xff]
      %v2078 = vld [vmem:[%s235 + $0x50] sm:$0xff]
      %v2079 = vld [vmem:[%s235 + $0x60] sm:$0xff]
      %v2080 = vld [vmem:[%s235 + $0x68] sm:$0xff]
      %v2081 = vld [vmem:[%s235 + $0x78] sm:$0xff]
      %v2082 = vld [vmem:[%s235 + $0x80] sm:$0xff]
      %v2083 = vld [vmem:[%s235 + $0x90] sm:$0xff]
      %v2084 = vld [vmem:[%s235 + $0x98] sm:$0xff]
      %v2085 = vld [vmem:[%s235 + $0xa8] sm:$0xff]
      %v2086 = vld [vmem:[%s235 + $0xb0] sm:$0xff]
      %v2087 = vld [vmem:[%s235 + $0xc0] sm:$0xff]
      %v2088 = vld [vmem:[%s235 + $0xc8] sm:$0xff]
      %v2089 = vld [vmem:[%s235 + $0xd8] sm:$0xff]
      %v2090 = vld [vmem:[%s235 + $0xe0] sm:$0xff]
      %v2091 = vld [vmem:[%s235 + $0xf0] sm:$0xff]
      %v2092 = vld [vmem:[%s235 + $0xf8] sm:$0xff]
      %v2093 = vld [vmem:[%s235 + $0x108] sm:$0xff]
      %v2094 = vld [vmem:[%s235 + $0x110] sm:$0xff]
      %v2095 = vld [vmem:[%s235 + $0x120] sm:$0xff]
      %v2096 = vld [vmem:[%s235 + $0x128] sm:$0xff]
      %v2097 = vld [vmem:[%s235 + $0x138] sm:$0xff]
      %v2098 = vld [vmem:[%s235 + $0x140] sm:$0xff]
      %v2099 = vld [vmem:[%s235 + $0x150] sm:$0xff]
      %v2100 = vld [vmem:[%s235 + $0x158] sm:$0xff]
      %v2101 = vld [vmem:[%s235 + $0x168] sm:$0xff]
      %v2102 = vld [vmem:[%s235 + $0x170] sm:$0xff]
      %v2103 = vpack.c.bf16 %v2072, %v2071
      %v2104 = vpack.c.bf16 %v2074, %v2073
      %v2105 = vpack.c.bf16 %v2076, %v2075
      %v2106 = vpack.c.bf16 %v2078, %v2077
      %v2107 = vpack.c.bf16 %v2080, %v2079
      %v2108 = vpack.c.bf16 %v2082, %v2081
      %v2109 = vpack.c.bf16 %v2084, %v2083
      %v2110 = vpack.c.bf16 %v2086, %v2085
      %v2111 = vpack.c.bf16 %v2088, %v2087
      %v2112 = vpack.c.bf16 %v2090, %v2089
      %v2113 = vpack.c.bf16 %v2092, %v2091
      %v2114 = vpack.c.bf16 %v2094, %v2093
      %v2115 = vpack.c.bf16 %v2096, %v2095
      %v2116 = vpack.c.bf16 %v2098, %v2097
      %v2117 = vpack.c.bf16 %v2100, %v2099
      %v2118 = vpack.c.bf16 %v2102, %v2101
      %2135 = vrot.lane.b32.xlu0 %v2103, 12
      %v2136 = vpop.permute.xlu0 %2135
      %2137 = vrot.lane.b32.xlu0 %v2104, 12
      %v2138 = vpop.permute.xlu0 %2137
      %2139 = vrot.lane.b32.xlu0 %v2105, 12
      %v2140 = vpop.permute.xlu0 %2139
      %2141 = vrot.lane.b32.xlu0 %v2106, 12
      %v2142 = vpop.permute.xlu0 %2141
      %2143 = vrot.lane.b32.xlu0 %v2107, 12
      %v2144 = vpop.permute.xlu0 %2143
      %2145 = vrot.lane.b32.xlu0 %v2108, 12
      %v2146 = vpop.permute.xlu0 %2145
      %2147 = vrot.lane.b32.xlu0 %v2109, 12
      %v2148 = vpop.permute.xlu0 %2147
      %2149 = vrot.lane.b32.xlu0 %v2110, 12
      %v2150 = vpop.permute.xlu0 %2149
      %2151 = vrot.lane.b32.xlu0 %v2111, 12
      %v2152 = vpop.permute.xlu0 %2151
      %2153 = vrot.lane.b32.xlu0 %v2112, 12
      %v2154 = vpop.permute.xlu0 %2153
      %2155 = vrot.lane.b32.xlu0 %v2113, 12
      %v2156 = vpop.permute.xlu0 %2155
      %2157 = vrot.lane.b32.xlu0 %v2114, 12
      %v2158 = vpop.permute.xlu0 %2157
      %2159 = vrot.lane.b32.xlu0 %v2115, 12
      %v2160 = vpop.permute.xlu0 %2159
      %2161 = vrot.lane.b32.xlu0 %v2116, 12
      %v2162 = vpop.permute.xlu0 %2161
      %2163 = vrot.lane.b32.xlu0 %v2117, 12
      %v2164 = vpop.permute.xlu0 %2163
      %2165 = vrot.lane.b32.xlu0 %v2118, 12
      %v2166 = vpop.permute.xlu0 %2165
      %2183 = vst.msk [vmem:[#allocation3] sm:$0xff] %vm767, %v2136
      %2184 = vst.msk [vmem:[#allocation3 + $0x8] sm:$0xff] %vm767, %v2138
      %2185 = vst.msk [vmem:[#allocation3 + $0x10] sm:$0xff] %vm767, %v2140
      %2186 = vst.msk [vmem:[#allocation3 + $0x18] sm:$0xff] %vm767, %v2142
      %2187 = vst.msk [vmem:[#allocation3 + $0x20] sm:$0xff] %vm767, %v2144
      %2188 = vst.msk [vmem:[#allocation3 + $0x28] sm:$0xff] %vm767, %v2146
      %2189 = vst.msk [vmem:[#allocation3 + $0x30] sm:$0xff] %vm767, %v2148
      %2190 = vst.msk [vmem:[#allocation3 + $0x38] sm:$0xff] %vm767, %v2150
      %2191 = vst.msk [vmem:[#allocation3 + $0x40] sm:$0xff] %vm767, %v2152
      %2192 = vst.msk [vmem:[#allocation3 + $0x48] sm:$0xff] %vm767, %v2154
      %2193 = vst.msk [vmem:[#allocation3 + $0x50] sm:$0xff] %vm767, %v2156
      %2194 = vst.msk [vmem:[#allocation3 + $0x58] sm:$0xff] %vm767, %v2158
      %2195 = vst.msk [vmem:[#allocation3 + $0x60] sm:$0xff] %vm767, %v2160
      %2196 = vst.msk [vmem:[#allocation3 + $0x68] sm:$0xff] %vm767, %v2162
      %2197 = vst.msk [vmem:[#allocation3 + $0x70] sm:$0xff] %vm767, %v2164
      %2198 = vst.msk [vmem:[#allocation3 + $0x78] sm:$0xff] %vm767, %v2166
      %v2199 = vld [vmem:[%s235 + $0x1] sm:$0xff]
      %v2200 = vld [vmem:[%s235 + $0x9] sm:$0xff]
      %v2201 = vld [vmem:[%s235 + $0x19] sm:$0xff]
      %v2202 = vld [vmem:[%s235 + $0x21] sm:$0xff]
      %v2203 = vld [vmem:[%s235 + $0x31] sm:$0xff]
      %v2204 = vld [vmem:[%s235 + $0x39] sm:$0xff]
      %v2205 = vld [vmem:[%s235 + $0x49] sm:$0xff]
      %v2206 = vld [vmem:[%s235 + $0x51] sm:$0xff]
      %v2207 = vld [vmem:[%s235 + $0x61] sm:$0xff]
      %v2208 = vld [vmem:[%s235 + $0x69] sm:$0xff]
      %v2209 = vld [vmem:[%s235 + $0x79] sm:$0xff]
      %v2210 = vld [vmem:[%s235 + $0x81] sm:$0xff]
      %v2211 = vld [vmem:[%s235 + $0x91] sm:$0xff]
      %v2212 = vld [vmem:[%s235 + $0x99] sm:$0xff]
      %v2213 = vld [vmem:[%s235 + $0xa9] sm:$0xff]
      %v2214 = vld [vmem:[%s235 + $0xb1] sm:$0xff]
      %v2215 = vld [vmem:[%s235 + $0xc1] sm:$0xff]
      %v2216 = vld [vmem:[%s235 + $0xc9] sm:$0xff]
      %v2217 = vld [vmem:[%s235 + $0xd9] sm:$0xff]
      %v2218 = vld [vmem:[%s235 + $0xe1] sm:$0xff]
      %v2219 = vld [vmem:[%s235 + $0xf1] sm:$0xff]
      %v2220 = vld [vmem:[%s235 + $0xf9] sm:$0xff]
      %v2221 = vld [vmem:[%s235 + $0x109] sm:$0xff]
      %v2222 = vld [vmem:[%s235 + $0x111] sm:$0xff]
      %v2223 = vld [vmem:[%s235 + $0x121] sm:$0xff]
      %v2224 = vld [vmem:[%s235 + $0x129] sm:$0xff]
      %v2225 = vld [vmem:[%s235 + $0x139] sm:$0xff]
      %v2226 = vld [vmem:[%s235 + $0x141] sm:$0xff]
      %v2227 = vld [vmem:[%s235 + $0x151] sm:$0xff]
      %v2228 = vld [vmem:[%s235 + $0x159] sm:$0xff]
      %v2229 = vld [vmem:[%s235 + $0x169] sm:$0xff]
      %v2230 = vld [vmem:[%s235 + $0x171] sm:$0xff]
      %v2231 = vpack.c.bf16 %v2200, %v2199
      %v2232 = vpack.c.bf16 %v2202, %v2201
      %v2233 = vpack.c.bf16 %v2204, %v2203
      %v2234 = vpack.c.bf16 %v2206, %v2205
      %v2235 = vpack.c.bf16 %v2208, %v2207
      %v2236 = vpack.c.bf16 %v2210, %v2209
      %v2237 = vpack.c.bf16 %v2212, %v2211
      %v2238 = vpack.c.bf16 %v2214, %v2213
      %v2239 = vpack.c.bf16 %v2216, %v2215
      %v2240 = vpack.c.bf16 %v2218, %v2217
      %v2241 = vpack.c.bf16 %v2220, %v2219
      %v2242 = vpack.c.bf16 %v2222, %v2221
      %v2243 = vpack.c.bf16 %v2224, %v2223
      %v2244 = vpack.c.bf16 %v2226, %v2225
      %v2245 = vpack.c.bf16 %v2228, %v2227
      %v2246 = vpack.c.bf16 %v2230, %v2229
      %2263 = vrot.lane.b32.xlu0 %v2231, 16
      %v2264 = vpop.permute.xlu0 %2263
      %2265 = vrot.lane.b32.xlu0 %v2232, 16
      %v2266 = vpop.permute.xlu0 %2265
      %2267 = vrot.lane.b32.xlu0 %v2233, 16
      %v2268 = vpop.permute.xlu0 %2267
      %2269 = vrot.lane.b32.xlu0 %v2234, 16
      %v2270 = vpop.permute.xlu0 %2269
      %2271 = vrot.lane.b32.xlu0 %v2235, 16
      %v2272 = vpop.permute.xlu0 %2271
      %2273 = vrot.lane.b32.xlu0 %v2236, 16
      %v2274 = vpop.permute.xlu0 %2273
      %2275 = vrot.lane.b32.xlu0 %v2237, 16
      %v2276 = vpop.permute.xlu0 %2275
      %2277 = vrot.lane.b32.xlu0 %v2238, 16
      %v2278 = vpop.permute.xlu0 %2277
      %2279 = vrot.lane.b32.xlu0 %v2239, 16
      %v2280 = vpop.permute.xlu0 %2279
      %2281 = vrot.lane.b32.xlu0 %v2240, 16
      %v2282 = vpop.permute.xlu0 %2281
      %2283 = vrot.lane.b32.xlu0 %v2241, 16
      %v2284 = vpop.permute.xlu0 %2283
      %2285 = vrot.lane.b32.xlu0 %v2242, 16
      %v2286 = vpop.permute.xlu0 %2285
      %2287 = vrot.lane.b32.xlu0 %v2243, 16
      %v2288 = vpop.permute.xlu0 %2287
      %2289 = vrot.lane.b32.xlu0 %v2244, 16
      %v2290 = vpop.permute.xlu0 %2289
      %2291 = vrot.lane.b32.xlu0 %v2245, 16
      %v2292 = vpop.permute.xlu0 %2291
      %2293 = vrot.lane.b32.xlu0 %v2246, 16
      %v2294 = vpop.permute.xlu0 %2293
      %2311 = vst.msk [vmem:[#allocation3] sm:$0xff] %vm896, %v2264
      %2312 = vst.msk [vmem:[#allocation3 + $0x8] sm:$0xff] %vm896, %v2266
      %2313 = vst.msk [vmem:[#allocation3 + $0x10] sm:$0xff] %vm896, %v2268
      %2314 = vst.msk [vmem:[#allocation3 + $0x18] sm:$0xff] %vm896, %v2270
      %2315 = vst.msk [vmem:[#allocation3 + $0x20] sm:$0xff] %vm896, %v2272
      %2316 = vst.msk [vmem:[#allocation3 + $0x28] sm:$0xff] %vm896, %v2274
      %2317 = vst.msk [vmem:[#allocation3 + $0x30] sm:$0xff] %vm896, %v2276
      %2318 = vst.msk [vmem:[#allocation3 + $0x38] sm:$0xff] %vm896, %v2278
      %2319 = vst.msk [vmem:[#allocation3 + $0x40] sm:$0xff] %vm896, %v2280
      %2320 = vst.msk [vmem:[#allocation3 + $0x48] sm:$0xff] %vm896, %v2282
      %2321 = vst.msk [vmem:[#allocation3 + $0x50] sm:$0xff] %vm896, %v2284
      %2322 = vst.msk [vmem:[#allocation3 + $0x58] sm:$0xff] %vm896, %v2286
      %2323 = vst.msk [vmem:[#allocation3 + $0x60] sm:$0xff] %vm896, %v2288
      %2324 = vst.msk [vmem:[#allocation3 + $0x68] sm:$0xff] %vm896, %v2290
      %2325 = vst.msk [vmem:[#allocation3 + $0x70] sm:$0xff] %vm896, %v2292
      %2326 = vst.msk [vmem:[#allocation3 + $0x78] sm:$0xff] %vm896, %v2294
      %v2327 = vld [vmem:[%s235 + $0x2] sm:$0xff]
      %v2328 = vld [vmem:[%s235 + $0xa] sm:$0xff]
      %v2329 = vld [vmem:[%s235 + $0x1a] sm:$0xff]
      %v2330 = vld [vmem:[%s235 + $0x22] sm:$0xff]
      %v2331 = vld [vmem:[%s235 + $0x32] sm:$0xff]
      %v2332 = vld [vmem:[%s235 + $0x3a] sm:$0xff]
      %v2333 = vld [vmem:[%s235 + $0x4a] sm:$0xff]
      %v2334 = vld [vmem:[%s235 + $0x52] sm:$0xff]
      %v2335 = vld [vmem:[%s235 + $0x62] sm:$0xff]
      %v2336 = vld [vmem:[%s235 + $0x6a] sm:$0xff]
      %v2337 = vld [vmem:[%s235 + $0x7a] sm:$0xff]
      %v2338 = vld [vmem:[%s235 + $0x82] sm:$0xff]
      %v2339 = vld [vmem:[%s235 + $0x92] sm:$0xff]
      %v2340 = vld [vmem:[%s235 + $0x9a] sm:$0xff]
      %v2341 = vld [vmem:[%s235 + $0xaa] sm:$0xff]
      %v2342 = vld [vmem:[%s235 + $0xb2] sm:$0xff]
      %v2343 = vld [vmem:[%s235 + $0xc2] sm:$0xff]
      %v2344 = vld [vmem:[%s235 + $0xca] sm:$0xff]
      %v2345 = vld [vmem:[%s235 + $0xda] sm:$0xff]
      %v2346 = vld [vmem:[%s235 + $0xe2] sm:$0xff]
      %v2347 = vld [vmem:[%s235 + $0xf2] sm:$0xff]
      %v2348 = vld [vmem:[%s235 + $0xfa] sm:$0xff]
      %v2349 = vld [vmem:[%s235 + $0x10a] sm:$0xff]
      %v2350 = vld [vmem:[%s235 + $0x112] sm:$0xff]
      %v2351 = vld [vmem:[%s235 + $0x122] sm:$0xff]
      %v2352 = vld [vmem:[%s235 + $0x12a] sm:$0xff]
      %v2353 = vld [vmem:[%s235 + $0x13a] sm:$0xff]
      %v2354 = vld [vmem:[%s235 + $0x142] sm:$0xff]
      %v2355 = vld [vmem:[%s235 + $0x152] sm:$0xff]
      %v2356 = vld [vmem:[%s235 + $0x15a] sm:$0xff]
      %v2357 = vld [vmem:[%s235 + $0x16a] sm:$0xff]
      %v2358 = vld [vmem:[%s235 + $0x172] sm:$0xff]
      %v2359 = vpack.c.bf16 %v2328, %v2327
      %v2360 = vpack.c.bf16 %v2330, %v2329
      %v2361 = vpack.c.bf16 %v2332, %v2331
      %v2362 = vpack.c.bf16 %v2334, %v2333
      %v2363 = vpack.c.bf16 %v2336, %v2335
      %v2364 = vpack.c.bf16 %v2338, %v2337
      %v2365 = vpack.c.bf16 %v2340, %v2339
      %v2366 = vpack.c.bf16 %v2342, %v2341
      %v2367 = vpack.c.bf16 %v2344, %v2343
      %v2368 = vpack.c.bf16 %v2346, %v2345
      %v2369 = vpack.c.bf16 %v2348, %v2347
      %v2370 = vpack.c.bf16 %v2350, %v2349
      %v2371 = vpack.c.bf16 %v2352, %v2351
      %v2372 = vpack.c.bf16 %v2354, %v2353
      %v2373 = vpack.c.bf16 %v2356, %v2355
      %v2374 = vpack.c.bf16 %v2358, %v2357
      %2391 = vrot.lane.b32.xlu0 %v2359, 20
      %v2392 = vpop.permute.xlu0 %2391
      %2393 = vrot.lane.b32.xlu0 %v2360, 20
      %v2394 = vpop.permute.xlu0 %2393
      %2395 = vrot.lane.b32.xlu0 %v2361, 20
      %v2396 = vpop.permute.xlu0 %2395
      %2397 = vrot.lane.b32.xlu0 %v2362, 20
      %v2398 = vpop.permute.xlu0 %2397
      %2399 = vrot.lane.b32.xlu0 %v2363, 20
      %v2400 = vpop.permute.xlu0 %2399
      %2401 = vrot.lane.b32.xlu0 %v2364, 20
      %v2402 = vpop.permute.xlu0 %2401
      %2403 = vrot.lane.b32.xlu0 %v2365, 20
      %v2404 = vpop.permute.xlu0 %2403
      %2405 = vrot.lane.b32.xlu0 %v2366, 20
      %v2406 = vpop.permute.xlu0 %2405
      %2407 = vrot.lane.b32.xlu0 %v2367, 20
      %v2408 = vpop.permute.xlu0 %2407
      %2409 = vrot.lane.b32.xlu0 %v2368, 20
      %v2410 = vpop.permute.xlu0 %2409
      %2411 = vrot.lane.b32.xlu0 %v2369, 20
      %v2412 = vpop.permute.xlu0 %2411
      %2413 = vrot.lane.b32.xlu0 %v2370, 20
      %v2414 = vpop.permute.xlu0 %2413
      %2415 = vrot.lane.b32.xlu0 %v2371, 20
      %v2416 = vpop.permute.xlu0 %2415
      %2417 = vrot.lane.b32.xlu0 %v2372, 20
      %v2418 = vpop.permute.xlu0 %2417
      %2419 = vrot.lane.b32.xlu0 %v2373, 20
      %v2420 = vpop.permute.xlu0 %2419
      %2421 = vrot.lane.b32.xlu0 %v2374, 20
      %v2422 = vpop.permute.xlu0 %2421
      %2439 = vst.msk [vmem:[#allocation3] sm:$0xff] %vm1025, %v2392
      %2440 = vst.msk [vmem:[#allocation3 + $0x8] sm:$0xff] %vm1025, %v2394
      %2441 = vst.msk [vmem:[#allocation3 + $0x10] sm:$0xff] %vm1025, %v2396
      %2442 = vst.msk [vmem:[#allocation3 + $0x18] sm:$0xff] %vm1025, %v2398
      %2443 = vst.msk [vmem:[#allocation3 + $0x20] sm:$0xff] %vm1025, %v2400
      %2444 = vst.msk [vmem:[#allocation3 + $0x28] sm:$0xff] %vm1025, %v2402
      %2445 = vst.msk [vmem:[#allocation3 + $0x30] sm:$0xff] %vm1025, %v2404
      %2446 = vst.msk [vmem:[#allocation3 + $0x38] sm:$0xff] %vm1025, %v2406
      %2447 = vst.msk [vmem:[#allocation3 + $0x40] sm:$0xff] %vm1025, %v2408
      %2448 = vst.msk [vmem:[#allocation3 + $0x48] sm:$0xff] %vm1025, %v2410
      %2449 = vst.msk [vmem:[#allocation3 + $0x50] sm:$0xff] %vm1025, %v2412
      %2450 = vst.msk [vmem:[#allocation3 + $0x58] sm:$0xff] %vm1025, %v2414
      %2451 = vst.msk [vmem:[#allocation3 + $0x60] sm:$0xff] %vm1025, %v2416
      %2452 = vst.msk [vmem:[#allocation3 + $0x68] sm:$0xff] %vm1025, %v2418
      %2453 = vst.msk [vmem:[#allocation3 + $0x70] sm:$0xff] %vm1025, %v2420
      %2454 = vst.msk [vmem:[#allocation3 + $0x78] sm:$0xff] %vm1025, %v2422
      %v2455 = vld [vmem:[%s1042] sm:$0xff]
      %v2456 = vld [vmem:[%s1042 + $0x8] sm:$0xff]
      %v2457 = vld [vmem:[%s1042 + $0x18] sm:$0xff]
      %v2458 = vld [vmem:[%s1042 + $0x20] sm:$0xff]
      %v2459 = vld [vmem:[%s1042 + $0x30] sm:$0xff]
      %v2460 = vld [vmem:[%s1042 + $0x38] sm:$0xff]
      %v2461 = vld [vmem:[%s1042 + $0x48] sm:$0xff]
      %v2462 = vld [vmem:[%s1042 + $0x50] sm:$0xff]
      %v2463 = vld [vmem:[%s1042 + $0x60] sm:$0xff]
      %v2464 = vld [vmem:[%s1042 + $0x68] sm:$0xff]
      %v2465 = vld [vmem:[%s1042 + $0x78] sm:$0xff]
      %v2466 = vld [vmem:[%s1042 + $0x80] sm:$0xff]
      %v2467 = vld [vmem:[%s1042 + $0x90] sm:$0xff]
      %v2468 = vld [vmem:[%s1042 + $0x98] sm:$0xff]
      %v2469 = vld [vmem:[%s1042 + $0xa8] sm:$0xff]
      %v2470 = vld [vmem:[%s1042 + $0xb0] sm:$0xff]
      %v2471 = vld [vmem:[%s1042 + $0xc0] sm:$0xff]
      %v2472 = vld [vmem:[%s1042 + $0xc8] sm:$0xff]
      %v2473 = vld [vmem:[%s1042 + $0xd8] sm:$0xff]
      %v2474 = vld [vmem:[%s1042 + $0xe0] sm:$0xff]
      %v2475 = vld [vmem:[%s1042 + $0xf0] sm:$0xff]
      %v2476 = vld [vmem:[%s1042 + $0xf8] sm:$0xff]
      %v2477 = vld [vmem:[%s1042 + $0x108] sm:$0xff]
      %v2478 = vld [vmem:[%s1042 + $0x110] sm:$0xff]
      %v2479 = vld [vmem:[%s1042 + $0x120] sm:$0xff]
      %v2480 = vld [vmem:[%s1042 + $0x128] sm:$0xff]
      %v2481 = vld [vmem:[%s1042 + $0x138] sm:$0xff]
      %v2482 = vld [vmem:[%s1042 + $0x140] sm:$0xff]
      %v2483 = vld [vmem:[%s1042 + $0x150] sm:$0xff]
      %v2484 = vld [vmem:[%s1042 + $0x158] sm:$0xff]
      %v2485 = vld [vmem:[%s1042 + $0x168] sm:$0xff]
      %v2486 = vld [vmem:[%s1042 + $0x170] sm:$0xff]
      %v2487 = vpack.c.bf16 %v2456, %v2455
      %v2488 = vpack.c.bf16 %v2458, %v2457
      %v2489 = vpack.c.bf16 %v2460, %v2459
      %v2490 = vpack.c.bf16 %v2462, %v2461
      %v2491 = vpack.c.bf16 %v2464, %v2463
      %v2492 = vpack.c.bf16 %v2466, %v2465
      %v2493 = vpack.c.bf16 %v2468, %v2467
      %v2494 = vpack.c.bf16 %v2470, %v2469
      %v2495 = vpack.c.bf16 %v2472, %v2471
      %v2496 = vpack.c.bf16 %v2474, %v2473
      %v2497 = vpack.c.bf16 %v2476, %v2475
      %v2498 = vpack.c.bf16 %v2478, %v2477
      %v2499 = vpack.c.bf16 %v2480, %v2479
      %v2500 = vpack.c.bf16 %v2482, %v2481
      %v2501 = vpack.c.bf16 %v2484, %v2483
      %v2502 = vpack.c.bf16 %v2486, %v2485
      %2519 = vrot.lane.b32.xlu0 %v2487, 24
      %v2520 = vpop.permute.xlu0 %2519
      %2521 = vrot.lane.b32.xlu0 %v2488, 24
      %v2522 = vpop.permute.xlu0 %2521
      %2523 = vrot.lane.b32.xlu0 %v2489, 24
      %v2524 = vpop.permute.xlu0 %2523
      %2525 = vrot.lane.b32.xlu0 %v2490, 24
      %v2526 = vpop.permute.xlu0 %2525
      %2527 = vrot.lane.b32.xlu0 %v2491, 24
      %v2528 = vpop.permute.xlu0 %2527
      %2529 = vrot.lane.b32.xlu0 %v2492, 24
      %v2530 = vpop.permute.xlu0 %2529
      %2531 = vrot.lane.b32.xlu0 %v2493, 24
      %v2532 = vpop.permute.xlu0 %2531
      %2533 = vrot.lane.b32.xlu0 %v2494, 24
      %v2534 = vpop.permute.xlu0 %2533
      %2535 = vrot.lane.b32.xlu0 %v2495, 24
      %v2536 = vpop.permute.xlu0 %2535
      %2537 = vrot.lane.b32.xlu0 %v2496, 24
      %v2538 = vpop.permute.xlu0 %2537
      %2539 = vrot.lane.b32.xlu0 %v2497, 24
      %v2540 = vpop.permute.xlu0 %2539
      %2541 = vrot.lane.b32.xlu0 %v2498, 24
      %v2542 = vpop.permute.xlu0 %2541
      %2543 = vrot.lane.b32.xlu0 %v2499, 24
      %v2544 = vpop.permute.xlu0 %2543
      %2545 = vrot.lane.b32.xlu0 %v2500, 24
      %v2546 = vpop.permute.xlu0 %2545
      %2547 = vrot.lane.b32.xlu0 %v2501, 24
      %v2548 = vpop.permute.xlu0 %2547
      %2549 = vrot.lane.b32.xlu0 %v2502, 24
      %v2550 = vpop.permute.xlu0 %2549
      %2567 = vst.msk [vmem:[#allocation3] sm:$0xff] %vm1155, %v2520
      %2568 = vst.msk [vmem:[#allocation3 + $0x8] sm:$0xff] %vm1155, %v2522
      %2569 = vst.msk [vmem:[#allocation3 + $0x10] sm:$0xff] %vm1155, %v2524
      %2570 = vst.msk [vmem:[#allocation3 + $0x18] sm:$0xff] %vm1155, %v2526
      %2571 = vst.msk [vmem:[#allocation3 + $0x20] sm:$0xff] %vm1155, %v2528
      %2572 = vst.msk [vmem:[#allocation3 + $0x28] sm:$0xff] %vm1155, %v2530
      %2573 = vst.msk [vmem:[#allocation3 + $0x30] sm:$0xff] %vm1155, %v2532
      %2574 = vst.msk [vmem:[#allocation3 + $0x38] sm:$0xff] %vm1155, %v2534
      %2575 = vst.msk [vmem:[#allocation3 + $0x40] sm:$0xff] %vm1155, %v2536
      %2576 = vst.msk [vmem:[#allocation3 + $0x48] sm:$0xff] %vm1155, %v2538
      %2577 = vst.msk [vmem:[#allocation3 + $0x50] sm:$0xff] %vm1155, %v2540
      %2578 = vst.msk [vmem:[#allocation3 + $0x58] sm:$0xff] %vm1155, %v2542
      %2579 = vst.msk [vmem:[#allocation3 + $0x60] sm:$0xff] %vm1155, %v2544
      %2580 = vst.msk [vmem:[#allocation3 + $0x68] sm:$0xff] %vm1155, %v2546
      %2581 = vst.msk [vmem:[#allocation3 + $0x70] sm:$0xff] %vm1155, %v2548
      %2582 = vst.msk [vmem:[#allocation3 + $0x78] sm:$0xff] %vm1155, %v2550
      %v2583 = vld [vmem:[%s1042 + $0x1] sm:$0xff]
      %v2584 = vld [vmem:[%s1042 + $0x9] sm:$0xff]
      %v2585 = vld [vmem:[%s1042 + $0x19] sm:$0xff]
      %v2586 = vld [vmem:[%s1042 + $0x21] sm:$0xff]
      %v2587 = vld [vmem:[%s1042 + $0x31] sm:$0xff]
      %v2588 = vld [vmem:[%s1042 + $0x39] sm:$0xff]
      %v2589 = vld [vmem:[%s1042 + $0x49] sm:$0xff]
      %v2590 = vld [vmem:[%s1042 + $0x51] sm:$0xff]
      %v2591 = vld [vmem:[%s1042 + $0x61] sm:$0xff]
      %v2592 = vld [vmem:[%s1042 + $0x69] sm:$0xff]
      %v2593 = vld [vmem:[%s1042 + $0x79] sm:$0xff]
      %v2594 = vld [vmem:[%s1042 + $0x81] sm:$0xff]
      %v2595 = vld [vmem:[%s1042 + $0x91] sm:$0xff]
      %v2596 = vld [vmem:[%s1042 + $0x99] sm:$0xff]
      %v2597 = vld [vmem:[%s1042 + $0xa9] sm:$0xff]
      %v2598 = vld [vmem:[%s1042 + $0xb1] sm:$0xff]
      %v2599 = vld [vmem:[%s1042 + $0xc1] sm:$0xff]
      %v2600 = vld [vmem:[%s1042 + $0xc9] sm:$0xff]
      %v2601 = vld [vmem:[%s1042 + $0xd9] sm:$0xff]
      %v2602 = vld [vmem:[%s1042 + $0xe1] sm:$0xff]
      %v2603 = vld [vmem:[%s1042 + $0xf1] sm:$0xff]
      %v2604 = vld [vmem:[%s1042 + $0xf9] sm:$0xff]
      %v2605 = vld [vmem:[%s1042 + $0x109] sm:$0xff]
      %v2606 = vld [vmem:[%s1042 + $0x111] sm:$0xff]
      %v2607 = vld [vmem:[%s1042 + $0x121] sm:$0xff]
      %v2608 = vld [vmem:[%s1042 + $0x129] sm:$0xff]
      %v2609 = vld [vmem:[%s1042 + $0x139] sm:$0xff]
      %v2610 = vld [vmem:[%s1042 + $0x141] sm:$0xff]
      %v2611 = vld [vmem:[%s1042 + $0x151] sm:$0xff]
      %v2612 = vld [vmem:[%s1042 + $0x159] sm:$0xff]
      %v2613 = vld [vmem:[%s1042 + $0x169] sm:$0xff]
      %v2614 = vld [vmem:[%s1042 + $0x171] sm:$0xff]
      %v2615 = vpack.c.bf16 %v2584, %v2583
      %v2616 = vpack.c.bf16 %v2586, %v2585
      %v2617 = vpack.c.bf16 %v2588, %v2587
      %v2618 = vpack.c.bf16 %v2590, %v2589
      %v2619 = vpack.c.bf16 %v2592, %v2591
      %v2620 = vpack.c.bf16 %v2594, %v2593
      %v2621 = vpack.c.bf16 %v2596, %v2595
      %v2622 = vpack.c.bf16 %v2598, %v2597
      %v2623 = vpack.c.bf16 %v2600, %v2599
      %v2624 = vpack.c.bf16 %v2602, %v2601
      %v2625 = vpack.c.bf16 %v2604, %v2603
      %v2626 = vpack.c.bf16 %v2606, %v2605
      %v2627 = vpack.c.bf16 %v2608, %v2607
      %v2628 = vpack.c.bf16 %v2610, %v2609
      %v2629 = vpack.c.bf16 %v2612, %v2611
      %v2630 = vpack.c.bf16 %v2614, %v2613
      %2647 = vrot.lane.b32.xlu0 %v2615, 28
      %v2648 = vpop.permute.xlu0 %2647
      %2649 = vrot.lane.b32.xlu0 %v2616, 28
      %v2650 = vpop.permute.xlu0 %2649
      %2651 = vrot.lane.b32.xlu0 %v2617, 28
      %v2652 = vpop.permute.xlu0 %2651
      %2653 = vrot.lane.b32.xlu0 %v2618, 28
      %v2654 = vpop.permute.xlu0 %2653
      %2655 = vrot.lane.b32.xlu0 %v2619, 28
      %v2656 = vpop.permute.xlu0 %2655
      %2657 = vrot.lane.b32.xlu0 %v2620, 28
      %v2658 = vpop.permute.xlu0 %2657
      %2659 = vrot.lane.b32.xlu0 %v2621, 28
      %v2660 = vpop.permute.xlu0 %2659
      %2661 = vrot.lane.b32.xlu0 %v2622, 28
      %v2662 = vpop.permute.xlu0 %2661
      %2663 = vrot.lane.b32.xlu0 %v2623, 28
      %v2664 = vpop.permute.xlu0 %2663
      %2665 = vrot.lane.b32.xlu0 %v2624, 28
      %v2666 = vpop.permute.xlu0 %2665
      %2667 = vrot.lane.b32.xlu0 %v2625, 28
      %v2668 = vpop.permute.xlu0 %2667
      %2669 = vrot.lane.b32.xlu0 %v2626, 28
      %v2670 = vpop.permute.xlu0 %2669
      %2671 = vrot.lane.b32.xlu0 %v2627, 28
      %v2672 = vpop.permute.xlu0 %2671
      %2673 = vrot.lane.b32.xlu0 %v2628, 28
      %v2674 = vpop.permute.xlu0 %2673
      %2675 = vrot.lane.b32.xlu0 %v2629, 28
      %v2676 = vpop.permute.xlu0 %2675
      %2677 = vrot.lane.b32.xlu0 %v2630, 28
      %v2678 = vpop.permute.xlu0 %2677
      %2695 = vst.msk [vmem:[#allocation3] sm:$0xff] %vm1284, %v2648
      %2696 = vst.msk [vmem:[#allocation3 + $0x8] sm:$0xff] %vm1284, %v2650
      %2697 = vst.msk [vmem:[#allocation3 + $0x10] sm:$0xff] %vm1284, %v2652
      %2698 = vst.msk [vmem:[#allocation3 + $0x18] sm:$0xff] %vm1284, %v2654
      %2699 = vst.msk [vmem:[#allocation3 + $0x20] sm:$0xff] %vm1284, %v2656
      %2700 = vst.msk [vmem:[#allocation3 + $0x28] sm:$0xff] %vm1284, %v2658
      %2701 = vst.msk [vmem:[#allocation3 + $0x30] sm:$0xff] %vm1284, %v2660
      %2702 = vst.msk [vmem:[#allocation3 + $0x38] sm:$0xff] %vm1284, %v2662
      %2703 = vst.msk [vmem:[#allocation3 + $0x40] sm:$0xff] %vm1284, %v2664
      %2704 = vst.msk [vmem:[#allocation3 + $0x48] sm:$0xff] %vm1284, %v2666
      %2705 = vst.msk [vmem:[#allocation3 + $0x50] sm:$0xff] %vm1284, %v2668
      %2706 = vst.msk [vmem:[#allocation3 + $0x58] sm:$0xff] %vm1284, %v2670
      %2707 = vst.msk [vmem:[#allocation3 + $0x60] sm:$0xff] %vm1284, %v2672
      %2708 = vst.msk [vmem:[#allocation3 + $0x68] sm:$0xff] %vm1284, %v2674
      %2709 = vst.msk [vmem:[#allocation3 + $0x70] sm:$0xff] %vm1284, %v2676
      %2710 = vst.msk [vmem:[#allocation3 + $0x78] sm:$0xff] %vm1284, %v2678
      %v2711 = vld [vmem:[%s1042 + $0x2] sm:$0xff]
      %v2712 = vld [vmem:[%s1042 + $0xa] sm:$0xff]
      %v2713 = vld [vmem:[%s1042 + $0x1a] sm:$0xff]
      %v2714 = vld [vmem:[%s1042 + $0x22] sm:$0xff]
      %v2715 = vld [vmem:[%s1042 + $0x32] sm:$0xff]
      %v2716 = vld [vmem:[%s1042 + $0x3a] sm:$0xff]
      %v2717 = vld [vmem:[%s1042 + $0x4a] sm:$0xff]
      %v2718 = vld [vmem:[%s1042 + $0x52] sm:$0xff]
      %v2719 = vld [vmem:[%s1042 + $0x62] sm:$0xff]
      %v2720 = vld [vmem:[%s1042 + $0x6a] sm:$0xff]
      %v2721 = vld [vmem:[%s1042 + $0x7a] sm:$0xff]
      %v2722 = vld [vmem:[%s1042 + $0x82] sm:$0xff]
      %v2723 = vld [vmem:[%s1042 + $0x92] sm:$0xff]
      %v2724 = vld [vmem:[%s1042 + $0x9a] sm:$0xff]
      %v2725 = vld [vmem:[%s1042 + $0xaa] sm:$0xff]
      %v2726 = vld [vmem:[%s1042 + $0xb2] sm:$0xff]
      %v2727 = vld [vmem:[%s1042 + $0xc2] sm:$0xff]
      %v2728 = vld [vmem:[%s1042 + $0xca] sm:$0xff]
      %v2729 = vld [vmem:[%s1042 + $0xda] sm:$0xff]
      %v2730 = vld [vmem:[%s1042 + $0xe2] sm:$0xff]
      %v2731 = vld [vmem:[%s1042 + $0xf2] sm:$0xff]
      %v2732 = vld [vmem:[%s1042 + $0xfa] sm:$0xff]
      %v2733 = vld [vmem:[%s1042 + $0x10a] sm:$0xff]
      %v2734 = vld [vmem:[%s1042 + $0x112] sm:$0xff]
      %v2735 = vld [vmem:[%s1042 + $0x122] sm:$0xff]
      %v2736 = vld [vmem:[%s1042 + $0x12a] sm:$0xff]
      %v2737 = vld [vmem:[%s1042 + $0x13a] sm:$0xff]
      %v2738 = vld [vmem:[%s1042 + $0x142] sm:$0xff]
      %v2739 = vld [vmem:[%s1042 + $0x152] sm:$0xff]
      %v2740 = vld [vmem:[%s1042 + $0x15a] sm:$0xff]
      %v2741 = vld [vmem:[%s1042 + $0x16a] sm:$0xff]
      %v2742 = vld [vmem:[%s1042 + $0x172] sm:$0xff]
      %v2743 = vpack.c.bf16 %v2712, %v2711
      %v2744 = vpack.c.bf16 %v2714, %v2713
      %v2745 = vpack.c.bf16 %v2716, %v2715
      %v2746 = vpack.c.bf16 %v2718, %v2717
      %v2747 = vpack.c.bf16 %v2720, %v2719
      %v2748 = vpack.c.bf16 %v2722, %v2721
      %v2749 = vpack.c.bf16 %v2724, %v2723
      %v2750 = vpack.c.bf16 %v2726, %v2725
      %v2751 = vpack.c.bf16 %v2728, %v2727
      %v2752 = vpack.c.bf16 %v2730, %v2729
      %v2753 = vpack.c.bf16 %v2732, %v2731
      %v2754 = vpack.c.bf16 %v2734, %v2733
      %v2755 = vpack.c.bf16 %v2736, %v2735
      %v2756 = vpack.c.bf16 %v2738, %v2737
      %v2757 = vpack.c.bf16 %v2740, %v2739
      %v2758 = vpack.c.bf16 %v2742, %v2741
      %2775 = vrot.lane.b32.xlu0 %v2743, 32
      %v2776 = vpop.permute.xlu0 %2775
      %2777 = vrot.lane.b32.xlu0 %v2744, 32
      %v2778 = vpop.permute.xlu0 %2777
      %2779 = vrot.lane.b32.xlu0 %v2745, 32
      %v2780 = vpop.permute.xlu0 %2779
      %2781 = vrot.lane.b32.xlu0 %v2746, 32
      %v2782 = vpop.permute.xlu0 %2781
      %2783 = vrot.lane.b32.xlu0 %v2747, 32
      %v2784 = vpop.permute.xlu0 %2783
      %2785 = vrot.lane.b32.xlu0 %v2748, 32
      %v2786 = vpop.permute.xlu0 %2785
      %2787 = vrot.lane.b32.xlu0 %v2749, 32
      %v2788 = vpop.permute.xlu0 %2787
      %2789 = vrot.lane.b32.xlu0 %v2750, 32
      %v2790 = vpop.permute.xlu0 %2789
      %2791 = vrot.lane.b32.xlu0 %v2751, 32
      %v2792 = vpop.permute.xlu0 %2791
      %2793 = vrot.lane.b32.xlu0 %v2752, 32
      %v2794 = vpop.permute.xlu0 %2793
      %2795 = vrot.lane.b32.xlu0 %v2753, 32
      %v2796 = vpop.permute.xlu0 %2795
      %2797 = vrot.lane.b32.xlu0 %v2754, 32
      %v2798 = vpop.permute.xlu0 %2797
      %2799 = vrot.lane.b32.xlu0 %v2755, 32
      %v2800 = vpop.permute.xlu0 %2799
      %2801 = vrot.lane.b32.xlu0 %v2756, 32
      %v2802 = vpop.permute.xlu0 %2801
      %2803 = vrot.lane.b32.xlu0 %v2757, 32
      %v2804 = vpop.permute.xlu0 %2803
      %2805 = vrot.lane.b32.xlu0 %v2758, 32
      %v2806 = vpop.permute.xlu0 %2805
      %2823 = vst.msk [vmem:[#allocation3] sm:$0xff] %vm1413, %v2776
      %2824 = vst.msk [vmem:[#allocation3 + $0x8] sm:$0xff] %vm1413, %v2778
      %2825 = vst.msk [vmem:[#allocation3 + $0x10] sm:$0xff] %vm1413, %v2780
      %2826 = vst.msk [vmem:[#allocation3 + $0x18] sm:$0xff] %vm1413, %v2782
      %2827 = vst.msk [vmem:[#allocation3 + $0x20] sm:$0xff] %vm1413, %v2784
      %2828 = vst.msk [vmem:[#allocation3 + $0x28] sm:$0xff] %vm1413, %v2786
      %2829 = vst.msk [vmem:[#allocation3 + $0x30] sm:$0xff] %vm1413, %v2788
      %2830 = vst.msk [vmem:[#allocation3 + $0x38] sm:$0xff] %vm1413, %v2790
      %2831 = vst.msk [vmem:[#allocation3 + $0x40] sm:$0xff] %vm1413, %v2792
      %2832 = vst.msk [vmem:[#allocation3 + $0x48] sm:$0xff] %vm1413, %v2794
      %2833 = vst.msk [vmem:[#allocation3 + $0x50] sm:$0xff] %vm1413, %v2796
      %2834 = vst.msk [vmem:[#allocation3 + $0x58] sm:$0xff] %vm1413, %v2798
      %2835 = vst.msk [vmem:[#allocation3 + $0x60] sm:$0xff] %vm1413, %v2800
      %2836 = vst.msk [vmem:[#allocation3 + $0x68] sm:$0xff] %vm1413, %v2802
      %2837 = vst.msk [vmem:[#allocation3 + $0x70] sm:$0xff] %vm1413, %v2804
      %2838 = vst.msk [vmem:[#allocation3 + $0x78] sm:$0xff] %vm1413, %v2806
      %v2839 = vld [vmem:[#allocation3] sm:$0xff]
      %v2840 = vld [vmem:[#allocation3 + $0x8] sm:$0xff]
      %v2841 = vld [vmem:[#allocation3 + $0x10] sm:$0xff]
      %v2842 = vld [vmem:[#allocation3 + $0x18] sm:$0xff]
      %v2843 = vld [vmem:[#allocation3 + $0x20] sm:$0xff]
      %v2844 = vld [vmem:[#allocation3 + $0x28] sm:$0xff]
      %v2845 = vld [vmem:[#allocation3 + $0x30] sm:$0xff]
      %v2846 = vld [vmem:[#allocation3 + $0x38] sm:$0xff]
      %v2847 = vld [vmem:[#allocation3 + $0x40] sm:$0xff]
      %v2848 = vld [vmem:[#allocation3 + $0x48] sm:$0xff]
      %v2849 = vld [vmem:[#allocation3 + $0x50] sm:$0xff]
      %v2850 = vld [vmem:[#allocation3 + $0x58] sm:$0xff]
      %v2851 = vld [vmem:[#allocation3 + $0x60] sm:$0xff]
      %v2852 = vld [vmem:[#allocation3 + $0x68] sm:$0xff]
      %v2853 = vld [vmem:[#allocation3 + $0x70] sm:$0xff]
      %v2854 = vld [vmem:[#allocation3 + $0x78] sm:$0xff]
      %v2855 = vld [vmem:[%s3] sm:$0xf]
      %v2856 = vld [vmem:[%s3 + $0x4] sm:$0xf]
      %v2857 = vld [vmem:[%s3 + $0x8] sm:$0xf]
      %v2858 = vld [vmem:[%s3 + $0xc] sm:$0xf]
      %v2859 = vld [vmem:[%s3 + $0x10] sm:$0x3]
      %v2865 = vunpack.c.l.b16 %v2855
      %v2866 = vunpack.c.l.b16 %v2856
      %v2867 = vunpack.c.l.b16 %v2857
      %v2868 = vunpack.c.l.b16 %v2858
      %v2869 = vunpack.c.l.b16 %v2859
      %v2870 = vpack.c.b16 %v2866, %v2865
      %v2871 = vpack.c.b16 %v2868, %v2867
      %v2872 = vpack.c.b16 %v2869, %v2869
      %v2876 = vsel %vm1473, %v2839, 0
      %v2879 = vsel %vm1473, %v2840, 0
      %v2882 = vsel %vm1473, %v2841, 0
      %v2885 = vsel %vm1473, %v2842, 0
      %v2888 = vsel %vm1473, %v2843, 0
      %v2891 = vsel %vm1473, %v2844, 0
      %v2894 = vsel %vm1473, %v2845, 0
      %v2897 = vsel %vm1473, %v2846, 0
      %v2900 = vsel %vm1473, %v2847, 0
      %v2903 = vsel %vm1473, %v2848, 0
      %v2906 = vsel %vm1473, %v2849, 0
      %v2909 = vsel %vm1473, %v2850, 0
      %v2912 = vsel %vm1473, %v2851, 0
      %v2915 = vsel %vm1473, %v2852, 0
      %v2918 = vsel %vm1473, %v2853, 0
      %v2921 = vsel %vm1473, %v2854, 0
      %v2924 = vsel %vm1522, %v2872, 0
      %2926 = vmatprep.subr.bf16.mxu0 0
      %2927 = vmatpush1.bf16.msra.mxu0 %v2870
      %2928 = vmatprep.subr.bf16.mxu0 0
      %2929 = vmatpush1.bf16.msra.mxu0 %v2871
      %2930 = vmatprep.subr.bf16.mxu0 0
      %2931 = vmatpush1.bf16.msra.mxu0 %v2924
      %2932 = vmatprep.subr.bf16.mxu0 0
      %2933 = vmatpush1.bf16.msra.mxu0 0
      %2934 = vmatprep.subr.bf16.mxu0 0
      %2935 = vmatpush1.bf16.msra.mxu0 0
      %2936 = vmatprep.subr.bf16.mxu0 0
      %2937 = vmatpush1.bf16.msra.mxu0 0
      %2938 = vmatprep.subr.bf16.mxu0 0
      %2939 = vmatpush1.bf16.msra.mxu0 0
      %2940 = vmatprep.subr.bf16.mxu0 0
      %2941 = vmatpush1.bf16.msra.mxu0 0
      %2942 = vmatprep.subr.bf16.mxu0 0
      %2943 = vmatpush1.bf16.msra.mxu0 0
      %2944 = vmatprep.subr.bf16.mxu0 0
      %2945 = vmatpush1.bf16.msra.mxu0 0
      %2946 = vmatprep.subr.bf16.mxu0 0
      %2947 = vmatpush1.bf16.msra.mxu0 0
      %2948 = vmatprep.subr.bf16.mxu0 0
      %2949 = vmatpush1.bf16.msra.mxu0 0
      %2950 = vmatprep.subr.bf16.mxu0 0
      %2951 = vmatpush1.bf16.msra.mxu0 0
      %2952 = vmatprep.subr.bf16.mxu0 0
      %2953 = vmatpush1.bf16.msra.mxu0 0
      %2954 = vmatprep.subr.bf16.mxu0 0
      %2955 = vmatpush1.bf16.msra.mxu0 0
      %2956 = vmatprep.subr.bf16.mxu0 0
      %2957 = vmatpush1.bf16.msra.mxu0 0
      %2958 = vmatprep.mubr.bf16.mxu0 0
      %2959 = vmatmul.mubr.bf16.gmra.mrb[0].mxu0 %v2876
      %v2960 = vpop.f32.mrb[0].mxu0
      %v2961 = vadd.f32 0.0, %v2960
      %v2962 = vpop.f32.mrb[0].mxu0
      %v2963 = vpop.f32.mrb[0].mxu0
      %v2964 = vadd.f32 0.0, %v2963
      %v2965 = vpop.f32.mrb[0].mxu0
      %2966 = vmatprep.mubr.bf16.mxu0 0
      %2967 = vmatmul.mubr.bf16.gmra.mrb[0].mxu0 %v2879
      %v2968 = vpop.f32.mrb[0].mxu0
      %v2969 = vadd.f32 0.0, %v2968
      %v2970 = vpop.f32.mrb[0].mxu0
      %v2971 = vpop.f32.mrb[0].mxu0
      %v2972 = vadd.f32 0.0, %v2971
      %v2973 = vpop.f32.mrb[0].mxu0
      %2974 = vmatprep.mubr.bf16.mxu0 0
      %2975 = vmatmul.mubr.bf16.gmra.mrb[0].mxu0 %v2882
      %v2976 = vpop.f32.mrb[0].mxu0
      %v2977 = vadd.f32 0.0, %v2976
      %v2978 = vpop.f32.mrb[0].mxu0
      %v2979 = vpop.f32.mrb[0].mxu0
      %v2980 = vadd.f32 0.0, %v2979
      %v2981 = vpop.f32.mrb[0].mxu0
      %2982 = vmatprep.mubr.bf16.mxu0 0
      %2983 = vmatmul.mubr.bf16.gmra.mrb[0].mxu0 %v2885
      %v2984 = vpop.f32.mrb[0].mxu0
      %v2985 = vadd.f32 0.0, %v2984
      %v2986 = vpop.f32.mrb[0].mxu0
      %v2987 = vpop.f32.mrb[0].mxu0
      %v2988 = vadd.f32 0.0, %v2987
      %v2989 = vpop.f32.mrb[0].mxu0
      %2990 = vmatprep.mubr.bf16.mxu0 0
      %2991 = vmatmul.mubr.bf16.gmra.mrb[0].mxu0 %v2888
      %v2992 = vpop.f32.mrb[0].mxu0
      %v2993 = vadd.f32 0.0, %v2992
      %v2994 = vpop.f32.mrb[0].mxu0
      %v2995 = vpop.f32.mrb[0].mxu0
      %v2996 = vadd.f32 0.0, %v2995
      %v2997 = vpop.f32.mrb[0].mxu0
      %2998 = vmatprep.mubr.bf16.mxu0 0
      %2999 = vmatmul.mubr.bf16.gmra.mrb[0].mxu0 %v2891
      %v3000 = vpop.f32.mrb[0].mxu0
      %v3001 = vadd.f32 0.0, %v3000
      %v3002 = vpop.f32.mrb[0].mxu0
      %v3003 = vpop.f32.mrb[0].mxu0
      %v3004 = vadd.f32 0.0, %v3003
      %v3005 = vpop.f32.mrb[0].mxu0
      %3006 = vmatprep.mubr.bf16.mxu0 0
      %3007 = vmatmul.mubr.bf16.gmra.mrb[0].mxu0 %v2894
      %v3008 = vpop.f32.mrb[0].mxu0
      %v3009 = vadd.f32 0.0, %v3008
      %v3010 = vpop.f32.mrb[0].mxu0
      %v3011 = vpop.f32.mrb[0].mxu0
      %v3012 = vadd.f32 0.0, %v3011
      %v3013 = vpop.f32.mrb[0].mxu0
      %3014 = vmatprep.mubr.bf16.mxu0 0
      %3015 = vmatmul.mubr.bf16.gmra.mrb[0].mxu0 %v2897
      %v3016 = vpop.f32.mrb[0].mxu0
      %v3017 = vadd.f32 0.0, %v3016
      %v3018 = vpop.f32.mrb[0].mxu0
      %v3019 = vpop.f32.mrb[0].mxu0
      %v3020 = vadd.f32 0.0, %v3019
      %v3021 = vpop.f32.mrb[0].mxu0
      %3022 = vmatprep.mubr.bf16.mxu0 0
      %3023 = vmatmul.mubr.bf16.gmra.mrb[0].mxu0 %v2900
      %v3024 = vpop.f32.mrb[0].mxu0
      %v3025 = vadd.f32 0.0, %v3024
      %v3026 = vpop.f32.mrb[0].mxu0
      %v3027 = vpop.f32.mrb[0].mxu0
      %v3028 = vadd.f32 0.0, %v3027
      %v3029 = vpop.f32.mrb[0].mxu0
      %3030 = vmatprep.mubr.bf16.mxu0 0
      %3031 = vmatmul.mubr.bf16.gmra.mrb[0].mxu0 %v2903
      %v3032 = vpop.f32.mrb[0].mxu0
      %v3033 = vadd.f32 0.0, %v3032
      %v3034 = vpop.f32.mrb[0].mxu0
      %v3035 = vpop.f32.mrb[0].mxu0
      %v3036 = vadd.f32 0.0, %v3035
      %v3037 = vpop.f32.mrb[0].mxu0
      %3038 = vmatprep.mubr.bf16.mxu0 0
      %3039 = vmatmul.mubr.bf16.gmra.mrb[0].mxu0 %v2906
      %v3040 = vpop.f32.mrb[0].mxu0
      %v3041 = vadd.f32 0.0, %v3040
      %v3042 = vpop.f32.mrb[0].mxu0
      %v3043 = vpop.f32.mrb[0].mxu0
      %v3044 = vadd.f32 0.0, %v3043
      %v3045 = vpop.f32.mrb[0].mxu0
      %3046 = vmatprep.mubr.bf16.mxu0 0
      %3047 = vmatmul.mubr.bf16.gmra.mrb[0].mxu0 %v2909
      %v3048 = vpop.f32.mrb[0].mxu0
      %v3049 = vadd.f32 0.0, %v3048
      %v3050 = vpop.f32.mrb[0].mxu0
      %v3051 = vpop.f32.mrb[0].mxu0
      %v3052 = vadd.f32 0.0, %v3051
      %v3053 = vpop.f32.mrb[0].mxu0
      %3054 = vmatprep.mubr.bf16.mxu0 0
      %3055 = vmatmul.mubr.bf16.gmra.mrb[0].mxu0 %v2912
      %v3056 = vpop.f32.mrb[0].mxu0
      %v3057 = vadd.f32 0.0, %v3056
      %v3058 = vpop.f32.mrb[0].mxu0
      %v3059 = vpop.f32.mrb[0].mxu0
      %v3060 = vadd.f32 0.0, %v3059
      %v3061 = vpop.f32.mrb[0].mxu0
      %3062 = vmatprep.mubr.bf16.mxu0 0
      %3063 = vmatmul.mubr.bf16.gmra.mrb[0].mxu0 %v2915
      %v3064 = vpop.f32.mrb[0].mxu0
      %v3065 = vadd.f32 0.0, %v3064
      %v3066 = vpop.f32.mrb[0].mxu0
      %v3067 = vpop.f32.mrb[0].mxu0
      %v3068 = vadd.f32 0.0, %v3067
      %v3069 = vpop.f32.mrb[0].mxu0
      %3070 = vmatprep.mubr.bf16.mxu0 0
      %3071 = vmatmul.mubr.bf16.gmra.mrb[0].mxu0 %v2918
      %v3072 = vpop.f32.mrb[0].mxu0
      %v3073 = vadd.f32 0.0, %v3072
      %v3074 = vpop.f32.mrb[0].mxu0
      %v3075 = vpop.f32.mrb[0].mxu0
      %v3076 = vadd.f32 0.0, %v3075
      %v3077 = vpop.f32.mrb[0].mxu0
      %3078 = vmatprep.mubr.bf16.mxu0 0
      %3079 = vmatmul.mubr.bf16.gmra.mrb[0].mxu0 %v2921
      %v3080 = vpop.f32.mrb[0].mxu0
      %v3081 = vadd.f32 0.0, %v3080
      %v3082 = vpop.f32.mrb[0].mxu0
      %v3083 = vpop.f32.mrb[0].mxu0
      %v3084 = vadd.f32 0.0, %v3083
      %v3085 = vpop.f32.mrb[0].mxu0
      %3086 = vdwg.mxu0
      %v3087 = vld [vmem:[%s4] sm:$0x1]
      %v3089 = vlaneseq
      %v3090 = vshrl.u32 %v3089, 7
      %v3091 = vsub.s32 0, %v3090
      %v3092 = vrot.slane %v3087, %v3091
      %v3094 = vadd.f32 %v2961, %v3092
      %v3095 = vadd.f32 %v2964, %v3092
      %v3096 = vadd.f32 %v2969, %v3092
      %v3097 = vadd.f32 %v2972, %v3092
      %v3098 = vadd.f32 %v2977, %v3092
      %v3099 = vadd.f32 %v2980, %v3092
      %v3100 = vadd.f32 %v2985, %v3092
      %v3101 = vadd.f32 %v2988, %v3092
      %v3102 = vadd.f32 %v2993, %v3092
      %v3103 = vadd.f32 %v2996, %v3092
      %v3104 = vadd.f32 %v3001, %v3092
      %v3105 = vadd.f32 %v3004, %v3092
      %v3106 = vadd.f32 %v3009, %v3092
      %v3107 = vadd.f32 %v3012, %v3092
      %v3108 = vadd.f32 %v3017, %v3092
      %v3109 = vadd.f32 %v3020, %v3092
      %v3110 = vadd.f32 %v3025, %v3092
      %v3111 = vadd.f32 %v3028, %v3092
      %v3112 = vadd.f32 %v3033, %v3092
      %v3113 = vadd.f32 %v3036, %v3092
      %v3114 = vadd.f32 %v3041, %v3092
      %v3115 = vadd.f32 %v3044, %v3092
      %v3116 = vadd.f32 %v3049, %v3092
      %v3117 = vadd.f32 %v3052, %v3092
      %v3118 = vadd.f32 %v3057, %v3092
      %v3119 = vadd.f32 %v3060, %v3092
      %v3120 = vadd.f32 %v3065, %v3092
      %v3121 = vadd.f32 %v3068, %v3092
      %v3122 = vadd.f32 %v3073, %v3092
      %v3123 = vadd.f32 %v3076, %v3092
      %v3124 = vadd.f32 %v3081, %v3092
      %v3125 = vadd.f32 %v3084, %v3092
      %v3126 = vadd.f32 %v3094, %v269
      %v3127 = vadd.f32 %v3095, %v270
      %v3128 = vadd.f32 %v3096, %v271
      %v3129 = vadd.f32 %v3097, %v272
      %v3130 = vadd.f32 %v3098, %v273
      %v3131 = vadd.f32 %v3099, %v274
      %v3132 = vadd.f32 %v3100, %v275
      %v3133 = vadd.f32 %v3101, %v276
      %v3134 = vadd.f32 %v3102, %v277
      %v3135 = vadd.f32 %v3103, %v278
      %v3136 = vadd.f32 %v3104, %v279
      %v3137 = vadd.f32 %v3105, %v280
      %v3138 = vadd.f32 %v3106, %v281
      %v3139 = vadd.f32 %v3107, %v282
      %v3140 = vadd.f32 %v3108, %v283
      %v3141 = vadd.f32 %v3109, %v284
      %v3142 = vadd.f32 %v3110, %v285
      %v3143 = vadd.f32 %v3111, %v286
      %v3144 = vadd.f32 %v3112, %v287
      %v3145 = vadd.f32 %v3113, %v288
      %v3146 = vadd.f32 %v3114, %v289
      %v3147 = vadd.f32 %v3115, %v290
      %v3148 = vadd.f32 %v3116, %v291
      %v3149 = vadd.f32 %v3117, %v292
      %v3150 = vadd.f32 %v3118, %v293
      %v3151 = vadd.f32 %v3119, %v294
      %v3152 = vadd.f32 %v3120, %v295
      %v3153 = vadd.f32 %v3121, %v296
      %v3154 = vadd.f32 %v3122, %v297
      %v3155 = vadd.f32 %v3123, %v298
      %v3156 = vadd.f32 %v3124, %v299
      %v3157 = vadd.f32 %v3125, %v300
      %v3158 = vmax.f32 %v3126, 0.0
      %v3159 = vmax.f32 %v3127, 0.0
      %v3160 = vmax.f32 %v3128, 0.0
      %v3161 = vmax.f32 %v3129, 0.0
      %v3162 = vmax.f32 %v3130, 0.0
      %v3163 = vmax.f32 %v3131, 0.0
      %v3164 = vmax.f32 %v3132, 0.0
      %v3165 = vmax.f32 %v3133, 0.0
      %v3166 = vmax.f32 %v3134, 0.0
      %v3167 = vmax.f32 %v3135, 0.0
      %v3168 = vmax.f32 %v3136, 0.0
      %v3169 = vmax.f32 %v3137, 0.0
      %v3170 = vmax.f32 %v3138, 0.0
      %v3171 = vmax.f32 %v3139, 0.0
      %v3172 = vmax.f32 %v3140, 0.0
      %v3173 = vmax.f32 %v3141, 0.0
      %v3174 = vmax.f32 %v3142, 0.0
      %v3175 = vmax.f32 %v3143, 0.0
      %v3176 = vmax.f32 %v3144, 0.0
      %v3177 = vmax.f32 %v3145, 0.0
      %v3178 = vmax.f32 %v3146, 0.0
      %v3179 = vmax.f32 %v3147, 0.0
      %v3180 = vmax.f32 %v3148, 0.0
      %v3181 = vmax.f32 %v3149, 0.0
      %v3182 = vmax.f32 %v3150, 0.0
      %v3183 = vmax.f32 %v3151, 0.0
      %v3184 = vmax.f32 %v3152, 0.0
      %v3185 = vmax.f32 %v3153, 0.0
      %v3186 = vmax.f32 %v3154, 0.0
      %v3187 = vmax.f32 %v3155, 0.0
      %v3188 = vmax.f32 %v3156, 0.0
      %v3189 = vmax.f32 %v3157, 0.0
      %3190 = vst.msk [vmem:[%s224] sm:$0xff] %vm226, %v3158
      %3191 = vst.msk [vmem:[%s224 + $0x8] sm:$0xff] %vm226, %v3159
      %3192 = vst.msk [vmem:[%s224 + $0x10] sm:$0xff] %vm226, %v3160
      %3193 = vst.msk [vmem:[%s224 + $0x18] sm:$0xff] %vm226, %v3161
      %3194 = vst.msk [vmem:[%s224 + $0x20] sm:$0xff] %vm226, %v3162
      %3195 = vst.msk [vmem:[%s224 + $0x28] sm:$0xff] %vm226, %v3163
      %3196 = vst.msk [vmem:[%s224 + $0x30] sm:$0xff] %vm226, %v3164
      %3197 = vst.msk [vmem:[%s224 + $0x38] sm:$0xff] %vm226, %v3165
      %3198 = vst.msk [vmem:[%s224 + $0x40] sm:$0xff] %vm226, %v3166
      %3199 = vst.msk [vmem:[%s224 + $0x48] sm:$0xff] %vm226, %v3167
      %3200 = vst.msk [vmem:[%s224 + $0x50] sm:$0xff] %vm226, %v3168
      %3201 = vst.msk [vmem:[%s224 + $0x58] sm:$0xff] %vm226, %v3169
      %3202 = vst.msk [vmem:[%s224 + $0x60] sm:$0xff] %vm226, %v3170
      %3203 = vst.msk [vmem:[%s224 + $0x68] sm:$0xff] %vm226, %v3171
      %3204 = vst.msk [vmem:[%s224 + $0x70] sm:$0xff] %vm226, %v3172
      %3205 = vst.msk [vmem:[%s224 + $0x78] sm:$0xff] %vm226, %v3173
      %3206 = vst.msk [vmem:[%s224 + $0x80] sm:$0xff] %vm226, %v3174
      %3207 = vst.msk [vmem:[%s224 + $0x88] sm:$0xff] %vm226, %v3175
      %3208 = vst.msk [vmem:[%s224 + $0x90] sm:$0xff] %vm226, %v3176
      %3209 = vst.msk [vmem:[%s224 + $0x98] sm:$0xff] %vm226, %v3177
      %3210 = vst.msk [vmem:[%s224 + $0xa0] sm:$0xff] %vm226, %v3178
      %3211 = vst.msk [vmem:[%s224 + $0xa8] sm:$0xff] %vm226, %v3179
      %3212 = vst.msk [vmem:[%s224 + $0xb0] sm:$0xff] %vm226, %v3180
      %3213 = vst.msk [vmem:[%s224 + $0xb8] sm:$0xff] %vm226, %v3181
      %3214 = vst.msk [vmem:[%s224 + $0xc0] sm:$0xff] %vm226, %v3182
      %3215 = vst.msk [vmem:[%s224 + $0xc8] sm:$0xff] %vm226, %v3183
      %3216 = vst.msk [vmem:[%s224 + $0xd0] sm:$0xff] %vm226, %v3184
      %3217 = vst.msk [vmem:[%s224 + $0xd8] sm:$0xff] %vm226, %v3185
      %3218 = vst.msk [vmem:[%s224 + $0xe0] sm:$0xff] %vm226, %v3186
      %3219 = vst.msk [vmem:[%s224 + $0xe8] sm:$0xff] %vm226, %v3187
      %3220 = vst.msk [vmem:[%s224 + $0xf0] sm:$0xff] %vm226, %v3188
      %3221 = vst.msk [vmem:[%s224 + $0xf8] sm:$0xff] %vm226, %v3189
      %p3222 = scmp.lt.s32.totalorder %s16, 1
      %s3223 = scalar_select %p3222, %s16, 1
      %s3224 = smul.addr %s3223, 32
      %s3225 = smul.addr %s3224, 8
      %s3226 = scalar_lea.vmem %s5, %s3225
      // Predicated region
      $region41: #{tpu_custom_call.1} parent=39 // pred_check
        %p3227 = pneg %p144
      $region42: #{tpu_custom_call.1} parent=39 // pred_check_branch
        %3229 = sbr.rel (%p3227) target = $region44
      $region43: #{tpu_custom_call.1} parent=39 // pred_region
        _
      $region44: #{tpu_custom_call.1} parent=39 // pred_fallthru
        _
    $region40: #{tpu_custom_call.1} parent=5 // pred_fallthru
      _
    %p3230 = scmp.le.s32.totalorder 2, %s11
    // Predicated region
    $region45: #{tpu_custom_call.1} parent=5 // pred_check
      %p3231 = pneg %p3230
    $region46: #{tpu_custom_call.1} parent=5 // pred_check_branch
      %3233 = sbr.rel (%p3231) target = $region48
    $region47: #{tpu_custom_call.1} parent=5 // pred_region
      %s3234 = ssub.s32 %s11, 2
      // Predicated region
      $region49: #{tpu_custom_call.1} parent=47 // pred_check
        %p3235 = pneg %p150
      $region50: #{tpu_custom_call.1} parent=47 // pred_check_branch
        %3237 = sbr.rel (%p3235) target = $region52
      $region51: #{tpu_custom_call.1} parent=47 // pred_region
        %p3238 = scmp.lt.s32.totalorder %s17, 1
        %s3239 = scalar_select %p3238, %s17, 1
        %s3240 = smul.addr %s3239, 32
        %s3241 = smul.addr %s3240, 8
        %s3242 = scalar_lea.vmem %s5, %s3241
      $region52: #{tpu_custom_call.1} parent=47 // pred_fallthru
        _
    $region48: #{tpu_custom_call.1} parent=5 // pred_fallthru
      _
  $region6: #{tpu_custom_call.1} parent=0 // loop_footer
    %s15 = sadd.s32 1, %s11
  $region7: #{tpu_custom_call.1} parent=0 // loop_footer_branch
    %10 = sbr.rel target = $region3
  $region8: #{tpu_custom_call.1} parent=0 // loop_exit
    _

</llo_original>
